<compile_context>
chip_gen: v7x
topology: tpu7x:2x2x1
jax: 0.10.0
libtpu: 0.0.40
codegen_flags: <defaults>
</compile_context>

<pallas_src>
import jax
import jax.numpy as jnp
from jax.experimental import pallas as pl
from jax.experimental.pallas import tpu as pltpu


# --------------------------------------------------------------------------- #
#                           Fused Pallas TPU kernel                            #
# --------------------------------------------------------------------------- #

def fused_cnn_kernel(xm_ref, bw1_ref, b1e_ref, bw2_ref, b2e_ref,
                     wf1_ref, bf1_ref, wf2_ref, bf2_ref, o_ref, p1_ref):
    """One batch tile of the whole SimpleCNN forward; activations stay in VMEM.

    xm_ref  : (4, 7T, 128) f32   conv1 lhs per output-row class (y mod 4);
                                 row = t*T + i, lane = dy*28 + xi (84 used).
    bw1_ref : (128, 512)  bf16   conv1 banded weight (K merged over dy);
                                 out lane = wx*256 + px*16 + co.
    b1e_ref : (1, 512)    f32
    bw2_ref : (3, 256, 512) bf16 conv2 banded weights per dy tap;
                                 in lane = px*16 + c1, out lane = wx*256+q*32+c2.
    b2e_ref : (1, 512)    f32
    wf1_ref : (7, 256, 128) bf16 fc1 weight blocks per pooled row p.
    bf1_ref : (1, 128)    f32
    wf2_ref : (128, 128)  bf16   fc2 weight (only column 0 non-zero).
    bf2_ref : (1, 128)    f32
    o_ref   : (T, 128)    f32    lane-padded output (column 0 = logit).
    p1_ref  : (2, 9T, 256) f32   scratch: pooled conv1 rows split by (py mod 2)
                                 with one zero boundary row block per side.
    """
    t = o_ref.shape[0]                         # batch-tile size, multiple of 8
    bf16, f32 = jnp.bfloat16, jnp.float32

    # ---- zero only the conv2 y-padding boundary blocks of the pool1 scratch ----
    zblk = jnp.zeros((t, 256), f32)
    for u in range(2):
        p1_ref[u, 0:t, :] = zblk
        p1_ref[u, 8 * t:9 * t, :] = zblk

    # ---- conv1 (one K=128 banded matmul per row class) + bias + ReLU + pool1 ----
    def conv1_class(j):
        lhs = xm_ref[j].astype(bf16)                              # (7T, 128)
        o = jnp.dot(lhs, bw1_ref[...], preferred_element_type=f32)
        o = jnp.maximum(o + b1e_ref[...], 0.0)                    # (7T, 512)
        return jnp.maximum(o[:, 0:256], o[:, 256:512])            # pool over wx

    for u in range(2):                                            # py mod 2
        a = conv1_class(2 * u)
        b = conv1_class(2 * u + 1)
        p1_ref[u, t:8 * t, :] = jnp.maximum(a, b)                 # pool over wy

    # ---- conv2 (3 y-taps, K=256 each) + bias + ReLU + pool2 ----
    def conv2_class(w):
        acc = None
        for dy in range(3):
            m = w + dy - 1                    # pooled input row = 2*(v+s) + u
            u, s = m % 2, m // 2
            lhs = p1_ref[u, (s + 1) * t:(s + 8) * t, :].astype(bf16)   # (7T,256)
            r = jnp.dot(lhs, bw2_ref[dy], preferred_element_type=f32)
            acc = r if acc is None else acc + r
        o = jnp.maximum(acc + b2e_ref[...], 0.0)                  # (7T, 512)
        return jnp.maximum(o[:, 0:256], o[:, 256:512])            # pool over wx

    p2 = jnp.maximum(conv2_class(0), conv2_class(1))              # (7T, 256)

    # ---- fc1: 7 accumulated (T,256)@(256,128) dots (no wasted blocks) ----
    acc = None
    for p in range(7):
        lhs = p2[p * t:(p + 1) * t, :].astype(bf16)               # (T, 256)
        r = jnp.dot(lhs, wf1_ref[p], preferred_element_type=f32)
        acc = r if acc is None else acc + r
    h = jnp.maximum(acc + bf1_ref[...], 0.0)                      # (T, 128)

    # ---- fc2 (lane-padded, lane-dense store; column 0 is the real logit) ----
    y = jnp.dot(h.astype(bf16), wf2_ref[...], preferred_element_type=f32)
    o_ref[...] = (y + bf2_ref[...]).astype(o_ref.dtype)


# --------------------------------------------------------------------------- #
#              One-time repacking of torch-layout params (at init)             #
# --------------------------------------------------------------------------- #

def prepare_params(p):
    f32, bf16 = jnp.float32, jnp.bfloat16
    w1 = p["conv1_w"].astype(f32)[:, 0]        # (16, 3, 3)  (co, dy, dx)
    b1 = p["conv1_b"].astype(f32)
    w2 = p["conv2_w"].astype(f32)              # (32, 16, 3, 3)
    b2 = p["conv2_b"].astype(f32)
    wf1 = p["fc1_w"].astype(f32)               # (128, 1568)
    bf1 = p["fc1_b"].astype(f32)
    wf2 = p["fc2_w"].astype(f32)               # (1, 128)
    bf2 = p["fc2_b"].astype(f32)

    # conv1 banded weight, K merged over dy: (3*28 -> 128, 512);
    # row = dy*28 + xi, out lane = wx*256 + px*16 + co.
    dy = jnp.arange(3).reshape(3, 1, 1, 1, 1)
    xi = jnp.arange(28).reshape(1, 28, 1, 1, 1)
    wx = jnp.arange(2).reshape(1, 1, 2, 1, 1)
    px = jnp.arange(16).reshape(1, 1, 1, 16, 1)
    co = jnp.arange(16).reshape(1, 1, 1, 1, 16)
    dx = xi - (2 * px + wx) + 1
    ok = (dx >= 0) & (dx <= 2) & (px <= 13)
    bw1 = jnp.where(ok, w1[co, dy, jnp.clip(dx, 0, 2)], 0.0).reshape(84, 512)
    bw1 = jnp.pad(bw1, ((0, 128 - 84), (0, 0)))                   # K: 84 -> 128
    b1e = b1.reshape(1, 1, 16) * (jnp.arange(16).reshape(1, 16, 1) <= 13)
    b1e = jnp.broadcast_to(b1e, (2, 16, 16)).reshape(1, 512)

    # conv2 banded weights (3, 256, 512); in lane = px*16 + c1,
    # out lane = wx*256 + q*32 + c2.
    dy = jnp.arange(3).reshape(3, 1, 1, 1, 1, 1)
    px1 = jnp.arange(16).reshape(1, 16, 1, 1, 1, 1)
    c1 = jnp.arange(16).reshape(1, 1, 16, 1, 1, 1)
    wx = jnp.arange(2).reshape(1, 1, 1, 2, 1, 1)
    q = jnp.arange(8).reshape(1, 1, 1, 1, 8, 1)
    c2 = jnp.arange(32).reshape(1, 1, 1, 1, 1, 32)
    dx = px1 - (2 * q + wx) + 1
    ok = (dx >= 0) & (dx <= 2) & (q <= 6)
    bw2 = jnp.where(ok, w2[c2, c1, dy, jnp.clip(dx, 0, 2)], 0.0).reshape(3, 256, 512)
    b2e = b2.reshape(1, 1, 32) * (jnp.arange(8).reshape(1, 8, 1) <= 6)
    b2e = jnp.broadcast_to(b2e, (2, 8, 32)).reshape(1, 512)

    # fc1: torch NCHW .view flatten -> per-pooled-row blocks (7, 256, 128);
    # block row = q*32 + c2 (q padded 7 -> 8), block col = output unit.
    wf1r = wf1.reshape(128, 32, 7, 7)          # (o, c2, p, q)
    wf1r = jnp.transpose(wf1r, (2, 3, 1, 0))   # (p, q, c2, o)
    wf1r = jnp.pad(wf1r, ((0, 0), (0, 1), (0, 0), (0, 0)))        # q: 7 -> 8
    wf1b = wf1r.reshape(7, 256, 128)

    # fc2: lane-pad the single logit column to 128.
    wf2p = jnp.pad(wf2.T, ((0, 0), (0, 127)))                     # (128, 128)
    bf2p = jnp.pad(bf2.reshape(1, 1), ((0, 0), (0, 127)))         # (1, 128)

    return {
        "bw1": bw1.astype(bf16), "b1e": b1e.astype(f32),
        "bw2": bw2.astype(bf16), "b2e": b2e.astype(f32),
        "wf1": wf1b.astype(bf16), "bf1": bf1.reshape(1, 128).astype(f32),
        "wf2": wf2p.astype(bf16), "bf2": bf2p.astype(f32),
    }


# --------------------------------------------------------------------------- #
#                                  Forward                                     #
# --------------------------------------------------------------------------- #

def simple_cnn_forward(x_nchw, kp):
    """x_nchw: (N, 1, 28, 28) float32 (same convention as the PyTorch module)."""
    n = x_nchw.shape[0]
    t = max(8, min(64, ((n + 7) // 8) * 8))        # batch tile, multiple of 8
    g = -(-n // t)                                  # number of batch tiles
    ntot = g * t

    # Build conv1's merged-K lhs on the tiny raw input: for each output-row
    # class j (y mod 4), lanes are 3 blocks of 28 (one per dy tap), rows are
    # (conv-row t major, batch minor) per tile, zero-padded rows for batch pad
    # and y boundary.
    x2 = x_nchw[:, 0, :, :].astype(jnp.float32)                    # (N, 28, 28)
    xpad = jnp.pad(x2, ((0, ntot - n), (1, 1), (0, 0)))            # (Ntot,30,28)
    planes = []
    for j in range(4):
        taps = [xpad[:, (j + dy):(j + dy) + 25:4, :] for dy in range(3)]
        cat = jnp.concatenate(taps, axis=-1)                       # (Ntot,7,84)
        planes.append(jnp.pad(cat, ((0, 0), (0, 0), (0, 44))))     # -> 128 lanes
    xm = jnp.stack(planes, axis=1)                                 # (Ntot,4,7,128)
    xm = (xm.reshape(g, t, 4, 7, 128)
            .transpose(0, 2, 3, 1, 4)
            .reshape(g, 4, 7 * t, 128))                            # (G,4,7T,128)

    out = pl.pallas_call(
        fused_cnn_kernel,
        out_shape=jax.ShapeDtypeStruct((ntot, 128), jnp.float32),
        grid=(g,),
        in_specs=[
            pl.BlockSpec((None, 4, 7 * t, 128), lambda i: (i, 0, 0, 0)),
            pl.BlockSpec((128, 512), lambda i: (0, 0)),
            pl.BlockSpec((1, 512), lambda i: (0, 0)),
            pl.BlockSpec((3, 256, 512), lambda i: (0, 0, 0)),
            pl.BlockSpec((1, 512), lambda i: (0, 0)),
            pl.BlockSpec((7, 256, 128), lambda i: (0, 0, 0)),
            pl.BlockSpec((1, 128), lambda i: (0, 0)),
            pl.BlockSpec((128, 128), lambda i: (0, 0)),
            pl.BlockSpec((1, 128), lambda i: (0, 0)),
        ],
        out_specs=pl.BlockSpec((t, 128), lambda i: (i, 0)),
        scratch_shapes=[pltpu.VMEM((2, 9 * t, 256), jnp.float32)],
        compiler_params=pltpu.CompilerParams(
            dimension_semantics=("parallel",),
            vmem_limit_bytes=32 * 1024 * 1024),
    )(xm, kp["bw1"], kp["b1e"], kp["bw2"], kp["b2e"],
      kp["wf1"], kp["bf1"], kp["wf2"], kp["bf2"])

    return out[:n, :1]                                             # (N, 1)


# --------------------------------------------------------------------------- #
#                         Params and pure-JAX reference                        #
# --------------------------------------------------------------------------- #

def init_params(key):
    ks = jax.random.split(key, 8)

    def u(k, shape, fan_in):
        b = 1.0 / jnp.sqrt(jnp.float32(fan_in))
        return jax.random.uniform(k, shape, jnp.float32, -b, b)

    return {                                   # torch-style layouts
        "conv1_w": u(ks[0], (16, 1, 3, 3), 9),
        "conv1_b": u(ks[1], (16,), 9),
        "conv2_w": u(ks[2], (32, 16, 3, 3), 9 * 16),
        "conv2_b": u(ks[3], (32,), 9 * 16),
        "fc1_w":   u(ks[4], (128, 32 * 7 * 7), 32 * 7 * 7),
        "fc1_b":   u(ks[5], (128,), 32 * 7 * 7),
        "fc2_w":   u(ks[6], (1, 128), 128),
        "fc2_b":   u(ks[7], (1,), 128),
    }


def reference_forward(x_nchw, p):
    """Pure-JAX f32 reference with the exact PyTorch module semantics."""
    dn = ("NCHW", "OIHW", "NCHW")

    def conv_relu_pool(x, w, b):
        y = jax.lax.conv_general_dilated(x, w, (1, 1), ((1, 1), (1, 1)),
                                         dimension_numbers=dn)
        y = jnp.maximum(y + b.reshape(1, -1, 1, 1), 0.0)
        return jax.lax.reduce_window(y, -jnp.inf, jax.lax.max,
                                     (1, 1, 2, 2), (1, 1, 2, 2), "VALID")

    y = conv_relu_pool(x_nchw, p["conv1_w"], p["conv1_b"])
    y = conv_relu_pool(y, p["conv2_w"], p["conv2_b"])
    f = y.reshape(x_nchw.shape[0], 32 * 7 * 7)      # NCHW flatten == torch .view
    h = jnp.maximum(f @ p["fc1_w"].T + p["fc1_b"], 0.0)
    return h @ p["fc2_w"].T + p["fc2_b"]


# --------------------------------------------------------------------------- #
#                                    main                                      #
# --------------------------------------------------------------------------- #

if __name__ == "__main__":
    key = jax.random.PRNGKey(0)
    k_x, k_p = jax.random.split(key)
    # batch=2, channels=1, spatial=28 (required by fc1 = Linear(32*7*7, 128))
    x = jax.random.normal(k_x, (2, 1, 28, 28), dtype=jnp.float32)
    params = init_params(k_p)

    kparams = prepare_params(params)            # one-time weight repack (bf16)
    fwd = jax.jit(simple_cnn_forward)
    out = jax.block_until_ready(fwd(x, kparams))

    ref = reference_forward(x, params)
    assert out.shape == (2, 1), out.shape
    # bf16 MXU feeds (f32 accumulation) -> loosened tolerance vs. f32 reference.
    assert jnp.allclose(out, ref, atol=2e-2, rtol=2e-2), (out, ref)

    print("KERNEL_OK")
</pallas_src>

<mosaic_0001>
module attributes {stable_mosaic.version = 11 : i64} {
  func.func @fused_cnn_kernel(%arg0: i32, %arg1: memref<1x4x56x128xf32, #tpu.memory_space<vmem>>, %arg2: memref<128x512xbf16, #tpu.memory_space<vmem>>, %arg3: memref<1x512xf32, #tpu.memory_space<vmem>>, %arg4: memref<3x256x512xbf16, #tpu.memory_space<vmem>>, %arg5: memref<1x512xf32, #tpu.memory_space<vmem>>, %arg6: memref<7x256x128xbf16, #tpu.memory_space<vmem>>, %arg7: memref<1x128xf32, #tpu.memory_space<vmem>>, %arg8: memref<128x128xbf16, #tpu.memory_space<vmem>>, %arg9: memref<1x128xf32, #tpu.memory_space<vmem>>, %arg10: memref<8x128xf32, #tpu.memory_space<vmem>>, %arg11: memref<2x72x256xf32, #tpu.memory_space<vmem>>) attributes {dimension_semantics = [#tpu.dimension_semantics<parallel>], iteration_bounds = array<i64: 1>, scalar_prefetch = 0 : i64, scratch_operands = 1 : i64, tpu.core_type = #tpu.core_type<tc>, window_params = [{transform_indices = @transform_0, window_bounds = array<i64: 1, 4, 56, 128>}, {pipeline_mode = #tpu.pipeline_mode<synchronous>, transform_indices = @transform_1, window_bounds = array<i64: 128, 512>}, {pipeline_mode = #tpu.pipeline_mode<synchronous>, transform_indices = @transform_2, window_bounds = array<i64: 1, 512>}, {pipeline_mode = #tpu.pipeline_mode<synchronous>, transform_indices = @transform_3, window_bounds = array<i64: 3, 256, 512>}, {pipeline_mode = #tpu.pipeline_mode<synchronous>, transform_indices = @transform_4, window_bounds = array<i64: 1, 512>}, {pipeline_mode = #tpu.pipeline_mode<synchronous>, transform_indices = @transform_5, window_bounds = array<i64: 7, 256, 128>}, {pipeline_mode = #tpu.pipeline_mode<synchronous>, transform_indices = @transform_6, window_bounds = array<i64: 1, 128>}, {pipeline_mode = #tpu.pipeline_mode<synchronous>, transform_indices = @transform_7, window_bounds = array<i64: 128, 128>}, {pipeline_mode = #tpu.pipeline_mode<synchronous>, transform_indices = @transform_8, window_bounds = array<i64: 1, 128>}, {transform_indices = @transform_9, window_bounds = array<i64: 8, 128>}]} {
    %cst = arith.constant 0.000000e+00 : f32
    %0 = vector.broadcast %cst : f32 to vector<8x256xf32>
    %c0 = arith.constant 0 : index
    %c0_0 = arith.constant 0 : index
    %c0_1 = arith.constant 0 : index
    %1 = vector.load %arg11[%c0, %c0_0, %c0_1] : memref<2x72x256xf32, #tpu.memory_space<vmem>>, vector<1x8x256xf32>
    %2 = vector.shape_cast %1 : vector<1x8x256xf32> to vector<8x256xf32>
    %3 = vector.shape_cast %0 : vector<8x256xf32> to vector<1x8x256xf32>
    tpu.vector_store %arg11[%c0, %c0_0, %c0_1], %3 {strides = array<i32>} : memref<2x72x256xf32, #tpu.memory_space<vmem>>, vector<1x8x256xf32>,
    %c0_2 = arith.constant 0 : index
    %c64 = arith.constant 64 : index
    %c0_3 = arith.constant 0 : index
    %4 = vector.load %arg11[%c0_2, %c64, %c0_3] : memref<2x72x256xf32, #tpu.memory_space<vmem>>, vector<1x8x256xf32>
    %5 = vector.shape_cast %4 : vector<1x8x256xf32> to vector<8x256xf32>
    %6 = vector.shape_cast %0 : vector<8x256xf32> to vector<1x8x256xf32>
    tpu.vector_store %arg11[%c0_2, %c64, %c0_3], %6 {strides = array<i32>} : memref<2x72x256xf32, #tpu.memory_space<vmem>>, vector<1x8x256xf32>,
    %c1 = arith.constant 1 : index
    %c0_4 = arith.constant 0 : index
    %c0_5 = arith.constant 0 : index
    %7 = vector.load %arg11[%c1, %c0_4, %c0_5] : memref<2x72x256xf32, #tpu.memory_space<vmem>>, vector<1x8x256xf32>
    %8 = vector.shape_cast %7 : vector<1x8x256xf32> to vector<8x256xf32>
    %9 = vector.shape_cast %0 : vector<8x256xf32> to vector<1x8x256xf32>
    tpu.vector_store %arg11[%c1, %c0_4, %c0_5], %9 {strides = array<i32>} : memref<2x72x256xf32, #tpu.memory_space<vmem>>, vector<1x8x256xf32>,
    %c1_6 = arith.constant 1 : index
    %c64_7 = arith.constant 64 : index
    %c0_8 = arith.constant 0 : index
    %10 = vector.load %arg11[%c1_6, %c64_7, %c0_8] : memref<2x72x256xf32, #tpu.memory_space<vmem>>, vector<1x8x256xf32>
    %11 = vector.shape_cast %10 : vector<1x8x256xf32> to vector<8x256xf32>
    %12 = vector.shape_cast %0 : vector<8x256xf32> to vector<1x8x256xf32>
    tpu.vector_store %arg11[%c1_6, %c64_7, %c0_8], %12 {strides = array<i32>} : memref<2x72x256xf32, #tpu.memory_space<vmem>>, vector<1x8x256xf32>,
    %c0_9 = arith.constant 0 : index
    %c0_10 = arith.constant 0 : index
    %c0_11 = arith.constant 0 : index
    %c0_12 = arith.constant 0 : index
    %13 = vector.load %arg1[%c0_9, %c0_10, %c0_11, %c0_12] : memref<1x4x56x128xf32, #tpu.memory_space<vmem>>, vector<1x1x56x128xf32>
    %14 = vector.shape_cast %13 : vector<1x1x56x128xf32> to vector<56x128xf32>
    %15 = arith.truncf %14 : vector<56x128xf32> to vector<56x128xbf16>
    %c0_13 = arith.constant 0 : index
    %c0_14 = arith.constant 0 : index
    %16 = vector.load %arg2[%c0_13, %c0_14] : memref<128x512xbf16, #tpu.memory_space<vmem>>, vector<128x512xbf16>
    %cst_15 = arith.constant dense<0.000000e+00> : vector<56x512xf32>
    %17 = tpu.matmul %15, %16, %cst_15 {dimension_numbers = #tpu.dot_dimension_numbers<[1], [0], [0], [1], [0, 0, 1, 1], [], []>} : vector<56x128xbf16>, vector<128x512xbf16>, vector<56x512xf32> -> vector<56x512xf32>
    %c0_16 = arith.constant 0 : index
    %c0_17 = arith.constant 0 : index
    %18 = vector.load %arg3[%c0_16, %c0_17] : memref<1x512xf32, #tpu.memory_space<vmem>>, vector<1x512xf32>
    %19 = vector.broadcast %18 : vector<1x512xf32> to vector<56x512xf32>
    %20 = arith.addf %17, %19 : vector<56x512xf32>
    %cst_18 = arith.constant 0.000000e+00 : f32
    %21 = vector.broadcast %cst_18 : f32 to vector<56x512xf32>
    %22 = arith.maximumf %20, %21 : vector<56x512xf32>
    %23 = vector.extract_strided_slice %22 {offsets = [0, 0], sizes = [56, 256], strides = [1, 1]} : vector<56x512xf32> to vector<56x256xf32>
    %24 = vector.extract_strided_slice %22 {offsets = [0, 256], sizes = [56, 256], strides = [1, 1]} : vector<56x512xf32> to vector<56x256xf32>
    %25 = arith.maximumf %23, %24 : vector<56x256xf32>
    %c0_19 = arith.constant 0 : index
    %c1_20 = arith.constant 1 : index
    %c0_21 = arith.constant 0 : index
    %c0_22 = arith.constant 0 : index
    %26 = vector.load %arg1[%c0_19, %c1_20, %c0_21, %c0_22] : memref<1x4x56x128xf32, #tpu.memory_space<vmem>>, vector<1x1x56x128xf32>
    %27 = vector.shape_cast %26 : vector<1x1x56x128xf32> to vector<56x128xf32>
    %28 = arith.truncf %27 : vector<56x128xf32> to vector<56x128xbf16>
    %c0_23 = arith.constant 0 : index
    %c0_24 = arith.constant 0 : index
    %29 = vector.load %arg2[%c0_23, %c0_24] : memref<128x512xbf16, #tpu.memory_space<vmem>>, vector<128x512xbf16>
    %cst_25 = arith.constant dense<0.000000e+00> : vector<56x512xf32>
    %30 = tpu.matmul %28, %29, %cst_25 {dimension_numbers = #tpu.dot_dimension_numbers<[1], [0], [0], [1], [0, 0, 1, 1], [], []>} : vector<56x128xbf16>, vector<128x512xbf16>, vector<56x512xf32> -> vector<56x512xf32>
    %c0_26 = arith.constant 0 : index
    %c0_27 = arith.constant 0 : index
    %31 = vector.load %arg3[%c0_26, %c0_27] : memref<1x512xf32, #tpu.memory_space<vmem>>, vector<1x512xf32>
    %32 = vector.broadcast %31 : vector<1x512xf32> to vector<56x512xf32>
    %33 = arith.addf %30, %32 : vector<56x512xf32>
    %cst_28 = arith.constant 0.000000e+00 : f32
    %34 = vector.broadcast %cst_28 : f32 to vector<56x512xf32>
    %35 = arith.maximumf %33, %34 : vector<56x512xf32>
    %36 = vector.extract_strided_slice %35 {offsets = [0, 0], sizes = [56, 256], strides = [1, 1]} : vector<56x512xf32> to vector<56x256xf32>
    %37 = vector.extract_strided_slice %35 {offsets = [0, 256], sizes = [56, 256], strides = [1, 1]} : vector<56x512xf32> to vector<56x256xf32>
    %38 = arith.maximumf %36, %37 : vector<56x256xf32>
    %39 = arith.maximumf %25, %38 : vector<56x256xf32>
    %c0_29 = arith.constant 0 : index
    %c8 = arith.constant 8 : index
    %c0_30 = arith.constant 0 : index
    %40 = vector.load %arg11[%c0_29, %c8, %c0_30] : memref<2x72x256xf32, #tpu.memory_space<vmem>>, vector<1x56x256xf32>
    %41 = vector.shape_cast %40 : vector<1x56x256xf32> to vector<56x256xf32>
    %42 = vector.shape_cast %39 : vector<56x256xf32> to vector<1x56x256xf32>
    tpu.vector_store %arg11[%c0_29, %c8, %c0_30], %42 {strides = array<i32>} : memref<2x72x256xf32, #tpu.memory_space<vmem>>, vector<1x56x256xf32>,
    %c0_31 = arith.constant 0 : index
    %c2 = arith.constant 2 : index
    %c0_32 = arith.constant 0 : index
    %c0_33 = arith.constant 0 : index
    %43 = vector.load %arg1[%c0_31, %c2, %c0_32, %c0_33] : memref<1x4x56x128xf32, #tpu.memory_space<vmem>>, vector<1x1x56x128xf32>
    %44 = vector.shape_cast %43 : vector<1x1x56x128xf32> to vector<56x128xf32>
    %45 = arith.truncf %44 : vector<56x128xf32> to vector<56x128xbf16>
    %c0_34 = arith.constant 0 : index
    %c0_35 = arith.constant 0 : index
    %46 = vector.load %arg2[%c0_34, %c0_35] : memref<128x512xbf16, #tpu.memory_space<vmem>>, vector<128x512xbf16>
    %cst_36 = arith.constant dense<0.000000e+00> : vector<56x512xf32>
    %47 = tpu.matmul %45, %46, %cst_36 {dimension_numbers = #tpu.dot_dimension_numbers<[1], [0], [0], [1], [0, 0, 1, 1], [], []>} : vector<56x128xbf16>, vector<128x512xbf16>, vector<56x512xf32> -> vector<56x512xf32>
    %c0_37 = arith.constant 0 : index
    %c0_38 = arith.constant 0 : index
    %48 = vector.load %arg3[%c0_37, %c0_38] : memref<1x512xf32, #tpu.memory_space<vmem>>, vector<1x512xf32>
    %49 = vector.broadcast %48 : vector<1x512xf32> to vector<56x512xf32>
    %50 = arith.addf %47, %49 : vector<56x512xf32>
    %cst_39 = arith.constant 0.000000e+00 : f32
    %51 = vector.broadcast %cst_39 : f32 to vector<56x512xf32>
    %52 = arith.maximumf %50, %51 : vector<56x512xf32>
    %53 = vector.extract_strided_slice %52 {offsets = [0, 0], sizes = [56, 256], strides = [1, 1]} : vector<56x512xf32> to vector<56x256xf32>
    %54 = vector.extract_strided_slice %52 {offsets = [0, 256], sizes = [56, 256], strides = [1, 1]} : vector<56x512xf32> to vector<56x256xf32>
    %55 = arith.maximumf %53, %54 : vector<56x256xf32>
    %c0_40 = arith.constant 0 : index
    %c3 = arith.constant 3 : index
    %c0_41 = arith.constant 0 : index
    %c0_42 = arith.constant 0 : index
    %56 = vector.load %arg1[%c0_40, %c3, %c0_41, %c0_42] : memref<1x4x56x128xf32, #tpu.memory_space<vmem>>, vector<1x1x56x128xf32>
    %57 = vector.shape_cast %56 : vector<1x1x56x128xf32> to vector<56x128xf32>
    %58 = arith.truncf %57 : vector<56x128xf32> to vector<56x128xbf16>
    %c0_43 = arith.constant 0 : index
    %c0_44 = arith.constant 0 : index
    %59 = vector.load %arg2[%c0_43, %c0_44] : memref<128x512xbf16, #tpu.memory_space<vmem>>, vector<128x512xbf16>
    %cst_45 = arith.constant dense<0.000000e+00> : vector<56x512xf32>
    %60 = tpu.matmul %58, %59, %cst_45 {dimension_numbers = #tpu.dot_dimension_numbers<[1], [0], [0], [1], [0, 0, 1, 1], [], []>} : vector<56x128xbf16>, vector<128x512xbf16>, vector<56x512xf32> -> vector<56x512xf32>
    %c0_46 = arith.constant 0 : index
    %c0_47 = arith.constant 0 : index
    %61 = vector.load %arg3[%c0_46, %c0_47] : memref<1x512xf32, #tpu.memory_space<vmem>>, vector<1x512xf32>
    %62 = vector.broadcast %61 : vector<1x512xf32> to vector<56x512xf32>
    %63 = arith.addf %60, %62 : vector<56x512xf32>
    %cst_48 = arith.constant 0.000000e+00 : f32
    %64 = vector.broadcast %cst_48 : f32 to vector<56x512xf32>
    %65 = arith.maximumf %63, %64 : vector<56x512xf32>
    %66 = vector.extract_strided_slice %65 {offsets = [0, 0], sizes = [56, 256], strides = [1, 1]} : vector<56x512xf32> to vector<56x256xf32>
    %67 = vector.extract_strided_slice %65 {offsets = [0, 256], sizes = [56, 256], strides = [1, 1]} : vector<56x512xf32> to vector<56x256xf32>
    %68 = arith.maximumf %66, %67 : vector<56x256xf32>
    %69 = arith.maximumf %55, %68 : vector<56x256xf32>
    %c1_49 = arith.constant 1 : index
    %c8_50 = arith.constant 8 : index
    %c0_51 = arith.constant 0 : index
    %70 = vector.load %arg11[%c1_49, %c8_50, %c0_51] : memref<2x72x256xf32, #tpu.memory_space<vmem>>, vector<1x56x256xf32>
    %71 = vector.shape_cast %70 : vector<1x56x256xf32> to vector<56x256xf32>
    %72 = vector.shape_cast %69 : vector<56x256xf32> to vector<1x56x256xf32>
    tpu.vector_store %arg11[%c1_49, %c8_50, %c0_51], %72 {strides = array<i32>} : memref<2x72x256xf32, #tpu.memory_space<vmem>>, vector<1x56x256xf32>,
    %c1_52 = arith.constant 1 : index
    %c0_53 = arith.constant 0 : index
    %c0_54 = arith.constant 0 : index
    %73 = vector.load %arg11[%c1_52, %c0_53, %c0_54] : memref<2x72x256xf32, #tpu.memory_space<vmem>>, vector<1x56x256xf32>
    %74 = vector.shape_cast %73 : vector<1x56x256xf32> to vector<56x256xf32>
    %75 = arith.truncf %74 : vector<56x256xf32> to vector<56x256xbf16>
    %c0_55 = arith.constant 0 : index
    %c0_56 = arith.constant 0 : index
    %c0_57 = arith.constant 0 : index
    %76 = vector.load %arg4[%c0_55, %c0_56, %c0_57] : memref<3x256x512xbf16, #tpu.memory_space<vmem>>, vector<1x256x512xbf16>
    %77 = vector.shape_cast %76 : vector<1x256x512xbf16> to vector<256x512xbf16>
    %cst_58 = arith.constant dense<0.000000e+00> : vector<56x512xf32>
    %78 = tpu.matmul %75, %77, %cst_58 {dimension_numbers = #tpu.dot_dimension_numbers<[1], [0], [0], [1], [0, 0, 1, 1], [], []>} : vector<56x256xbf16>, vector<256x512xbf16>, vector<56x512xf32> -> vector<56x512xf32>
    %c0_59 = arith.constant 0 : index
    %c8_60 = arith.constant 8 : index
    %c0_61 = arith.constant 0 : index
    %79 = vector.load %arg11[%c0_59, %c8_60, %c0_61] : memref<2x72x256xf32, #tpu.memory_space<vmem>>, vector<1x56x256xf32>
    %80 = vector.shape_cast %79 : vector<1x56x256xf32> to vector<56x256xf32>
    %81 = arith.truncf %80 : vector<56x256xf32> to vector<56x256xbf16>
    %c1_62 = arith.constant 1 : index
    %c0_63 = arith.constant 0 : index
    %c0_64 = arith.constant 0 : index
    %82 = vector.load %arg4[%c1_62, %c0_63, %c0_64] : memref<3x256x512xbf16, #tpu.memory_space<vmem>>, vector<1x256x512xbf16>
    %83 = vector.shape_cast %82 : vector<1x256x512xbf16> to vector<256x512xbf16>
    %cst_65 = arith.constant dense<0.000000e+00> : vector<56x512xf32>
    %84 = tpu.matmul %81, %83, %cst_65 {dimension_numbers = #tpu.dot_dimension_numbers<[1], [0], [0], [1], [0, 0, 1, 1], [], []>} : vector<56x256xbf16>, vector<256x512xbf16>, vector<56x512xf32> -> vector<56x512xf32>
    %85 = arith.addf %78, %84 : vector<56x512xf32>
    %c1_66 = arith.constant 1 : index
    %c8_67 = arith.constant 8 : index
    %c0_68 = arith.constant 0 : index
    %86 = vector.load %arg11[%c1_66, %c8_67, %c0_68] : memref<2x72x256xf32, #tpu.memory_space<vmem>>, vector<1x56x256xf32>
    %87 = vector.shape_cast %86 : vector<1x56x256xf32> to vector<56x256xf32>
    %88 = arith.truncf %87 : vector<56x256xf32> to vector<56x256xbf16>
    %c2_69 = arith.constant 2 : index
    %c0_70 = arith.constant 0 : index
    %c0_71 = arith.constant 0 : index
    %89 = vector.load %arg4[%c2_69, %c0_70, %c0_71] : memref<3x256x512xbf16, #tpu.memory_space<vmem>>, vector<1x256x512xbf16>
    %90 = vector.shape_cast %89 : vector<1x256x512xbf16> to vector<256x512xbf16>
    %cst_72 = arith.constant dense<0.000000e+00> : vector<56x512xf32>
    %91 = tpu.matmul %88, %90, %cst_72 {dimension_numbers = #tpu.dot_dimension_numbers<[1], [0], [0], [1], [0, 0, 1, 1], [], []>} : vector<56x256xbf16>, vector<256x512xbf16>, vector<56x512xf32> -> vector<56x512xf32>
    %92 = arith.addf %85, %91 : vector<56x512xf32>
    %c0_73 = arith.constant 0 : index
    %c0_74 = arith.constant 0 : index
    %93 = vector.load %arg5[%c0_73, %c0_74] : memref<1x512xf32, #tpu.memory_space<vmem>>, vector<1x512xf32>
    %94 = vector.broadcast %93 : vector<1x512xf32> to vector<56x512xf32>
    %95 = arith.addf %92, %94 : vector<56x512xf32>
    %cst_75 = arith.constant 0.000000e+00 : f32
    %96 = vector.broadcast %cst_75 : f32 to vector<56x512xf32>
    %97 = arith.maximumf %95, %96 : vector<56x512xf32>
    %98 = vector.extract_strided_slice %97 {offsets = [0, 0], sizes = [56, 256], strides = [1, 1]} : vector<56x512xf32> to vector<56x256xf32>
    %99 = vector.extract_strided_slice %97 {offsets = [0, 256], sizes = [56, 256], strides = [1, 1]} : vector<56x512xf32> to vector<56x256xf32>
    %100 = arith.maximumf %98, %99 : vector<56x256xf32>
    %c0_76 = arith.constant 0 : index
    %c8_77 = arith.constant 8 : index
    %c0_78 = arith.constant 0 : index
    %101 = vector.load %arg11[%c0_76, %c8_77, %c0_78] : memref<2x72x256xf32, #tpu.memory_space<vmem>>, vector<1x56x256xf32>
    %102 = vector.shape_cast %101 : vector<1x56x256xf32> to vector<56x256xf32>
    %103 = arith.truncf %102 : vector<56x256xf32> to vector<56x256xbf16>
    %c0_79 = arith.constant 0 : index
    %c0_80 = arith.constant 0 : index
    %c0_81 = arith.constant 0 : index
    %104 = vector.load %arg4[%c0_79, %c0_80, %c0_81] : memref<3x256x512xbf16, #tpu.memory_space<vmem>>, vector<1x256x512xbf16>
    %105 = vector.shape_cast %104 : vector<1x256x512xbf16> to vector<256x512xbf16>
    %cst_82 = arith.constant dense<0.000000e+00> : vector<56x512xf32>
    %106 = tpu.matmul %103, %105, %cst_82 {dimension_numbers = #tpu.dot_dimension_numbers<[1], [0], [0], [1], [0, 0, 1, 1], [], []>} : vector<56x256xbf16>, vector<256x512xbf16>, vector<56x512xf32> -> vector<56x512xf32>
    %c1_83 = arith.constant 1 : index
    %c8_84 = arith.constant 8 : index
    %c0_85 = arith.constant 0 : index
    %107 = vector.load %arg11[%c1_83, %c8_84, %c0_85] : memref<2x72x256xf32, #tpu.memory_space<vmem>>, vector<1x56x256xf32>
    %108 = vector.shape_cast %107 : vector<1x56x256xf32> to vector<56x256xf32>
    %109 = arith.truncf %108 : vector<56x256xf32> to vector<56x256xbf16>
    %c1_86 = arith.constant 1 : index
    %c0_87 = arith.constant 0 : index
    %c0_88 = arith.constant 0 : index
    %110 = vector.load %arg4[%c1_86, %c0_87, %c0_88] : memref<3x256x512xbf16, #tpu.memory_space<vmem>>, vector<1x256x512xbf16>
    %111 = vector.shape_cast %110 : vector<1x256x512xbf16> to vector<256x512xbf16>
    %cst_89 = arith.constant dense<0.000000e+00> : vector<56x512xf32>
    %112 = tpu.matmul %109, %111, %cst_89 {dimension_numbers = #tpu.dot_dimension_numbers<[1], [0], [0], [1], [0, 0, 1, 1], [], []>} : vector<56x256xbf16>, vector<256x512xbf16>, vector<56x512xf32> -> vector<56x512xf32>
    %113 = arith.addf %106, %112 : vector<56x512xf32>
    %c0_90 = arith.constant 0 : index
    %c16 = arith.constant 16 : index
    %c0_91 = arith.constant 0 : index
    %114 = vector.load %arg11[%c0_90, %c16, %c0_91] : memref<2x72x256xf32, #tpu.memory_space<vmem>>, vector<1x56x256xf32>
    %115 = vector.shape_cast %114 : vector<1x56x256xf32> to vector<56x256xf32>
    %116 = arith.truncf %115 : vector<56x256xf32> to vector<56x256xbf16>
    %c2_92 = arith.constant 2 : index
    %c0_93 = arith.constant 0 : index
    %c0_94 = arith.constant 0 : index
    %117 = vector.load %arg4[%c2_92, %c0_93, %c0_94] : memref<3x256x512xbf16, #tpu.memory_space<vmem>>, vector<1x256x512xbf16>
    %118 = vector.shape_cast %117 : vector<1x256x512xbf16> to vector<256x512xbf16>
    %cst_95 = arith.constant dense<0.000000e+00> : vector<56x512xf32>
    %119 = tpu.matmul %116, %118, %cst_95 {dimension_numbers = #tpu.dot_dimension_numbers<[1], [0], [0], [1], [0, 0, 1, 1], [], []>} : vector<56x256xbf16>, vector<256x512xbf16>, vector<56x512xf32> -> vector<56x512xf32>
    %120 = arith.addf %113, %119 : vector<56x512xf32>
    %c0_96 = arith.constant 0 : index
    %c0_97 = arith.constant 0 : index
    %121 = vector.load %arg5[%c0_96, %c0_97] : memref<1x512xf32, #tpu.memory_space<vmem>>, vector<1x512xf32>
    %122 = vector.broadcast %121 : vector<1x512xf32> to vector<56x512xf32>
    %123 = arith.addf %120, %122 : vector<56x512xf32>
    %cst_98 = arith.constant 0.000000e+00 : f32
    %124 = vector.broadcast %cst_98 : f32 to vector<56x512xf32>
    %125 = arith.maximumf %123, %124 : vector<56x512xf32>
    %126 = vector.extract_strided_slice %125 {offsets = [0, 0], sizes = [56, 256], strides = [1, 1]} : vector<56x512xf32> to vector<56x256xf32>
    %127 = vector.extract_strided_slice %125 {offsets = [0, 256], sizes = [56, 256], strides = [1, 1]} : vector<56x512xf32> to vector<56x256xf32>
    %128 = arith.maximumf %126, %127 : vector<56x256xf32>
    %129 = arith.maximumf %100, %128 : vector<56x256xf32>
    %130 = vector.extract_strided_slice %129 {offsets = [0, 0], sizes = [8, 256], strides = [1, 1]} : vector<56x256xf32> to vector<8x256xf32>
    %131 = arith.truncf %130 : vector<8x256xf32> to vector<8x256xbf16>
    %c0_99 = arith.constant 0 : index
    %c0_100 = arith.constant 0 : index
    %c0_101 = arith.constant 0 : index
    %132 = vector.load %arg6[%c0_99, %c0_100, %c0_101] : memref<7x256x128xbf16, #tpu.memory_space<vmem>>, vector<1x256x128xbf16>
    %133 = vector.shape_cast %132 : vector<1x256x128xbf16> to vector<256x128xbf16>
    %cst_102 = arith.constant dense<0.000000e+00> : vector<8x128xf32>
    %134 = tpu.matmul %131, %133, %cst_102 {dimension_numbers = #tpu.dot_dimension_numbers<[1], [0], [0], [1], [0, 0, 1, 1], [], []>} : vector<8x256xbf16>, vector<256x128xbf16>, vector<8x128xf32> -> vector<8x128xf32>
    %135 = vector.extract_strided_slice %129 {offsets = [8, 0], sizes = [8, 256], strides = [1, 1]} : vector<56x256xf32> to vector<8x256xf32>
    %136 = arith.truncf %135 : vector<8x256xf32> to vector<8x256xbf16>
    %c1_103 = arith.constant 1 : index
    %c0_104 = arith.constant 0 : index
    %c0_105 = arith.constant 0 : index
    %137 = vector.load %arg6[%c1_103, %c0_104, %c0_105] : memref<7x256x128xbf16, #tpu.memory_space<vmem>>, vector<1x256x128xbf16>
    %138 = vector.shape_cast %137 : vector<1x256x128xbf16> to vector<256x128xbf16>
    %cst_106 = arith.constant dense<0.000000e+00> : vector<8x128xf32>
    %139 = tpu.matmul %136, %138, %cst_106 {dimension_numbers = #tpu.dot_dimension_numbers<[1], [0], [0], [1], [0, 0, 1, 1], [], []>} : vector<8x256xbf16>, vector<256x128xbf16>, vector<8x128xf32> -> vector<8x128xf32>
    %140 = arith.addf %134, %139 : vector<8x128xf32>
    %141 = vector.extract_strided_slice %129 {offsets = [16, 0], sizes = [8, 256], strides = [1, 1]} : vector<56x256xf32> to vector<8x256xf32>
    %142 = arith.truncf %141 : vector<8x256xf32> to vector<8x256xbf16>
    %c2_107 = arith.constant 2 : index
    %c0_108 = arith.constant 0 : index
    %c0_109 = arith.constant 0 : index
    %143 = vector.load %arg6[%c2_107, %c0_108, %c0_109] : memref<7x256x128xbf16, #tpu.memory_space<vmem>>, vector<1x256x128xbf16>
    %144 = vector.shape_cast %143 : vector<1x256x128xbf16> to vector<256x128xbf16>
    %cst_110 = arith.constant dense<0.000000e+00> : vector<8x128xf32>
    %145 = tpu.matmul %142, %144, %cst_110 {dimension_numbers = #tpu.dot_dimension_numbers<[1], [0], [0], [1], [0, 0, 1, 1], [], []>} : vector<8x256xbf16>, vector<256x128xbf16>, vector<8x128xf32> -> vector<8x128xf32>
    %146 = arith.addf %140, %145 : vector<8x128xf32>
    %147 = vector.extract_strided_slice %129 {offsets = [24, 0], sizes = [8, 256], strides = [1, 1]} : vector<56x256xf32> to vector<8x256xf32>
    %148 = arith.truncf %147 : vector<8x256xf32> to vector<8x256xbf16>
    %c3_111 = arith.constant 3 : index
    %c0_112 = arith.constant 0 : index
    %c0_113 = arith.constant 0 : index
    %149 = vector.load %arg6[%c3_111, %c0_112, %c0_113] : memref<7x256x128xbf16, #tpu.memory_space<vmem>>, vector<1x256x128xbf16>
    %150 = vector.shape_cast %149 : vector<1x256x128xbf16> to vector<256x128xbf16>
    %cst_114 = arith.constant dense<0.000000e+00> : vector<8x128xf32>
    %151 = tpu.matmul %148, %150, %cst_114 {dimension_numbers = #tpu.dot_dimension_numbers<[1], [0], [0], [1], [0, 0, 1, 1], [], []>} : vector<8x256xbf16>, vector<256x128xbf16>, vector<8x128xf32> -> vector<8x128xf32>
    %152 = arith.addf %146, %151 : vector<8x128xf32>
    %153 = vector.extract_strided_slice %129 {offsets = [32, 0], sizes = [8, 256], strides = [1, 1]} : vector<56x256xf32> to vector<8x256xf32>
    %154 = arith.truncf %153 : vector<8x256xf32> to vector<8x256xbf16>
    %c4 = arith.constant 4 : index
    %c0_115 = arith.constant 0 : index
    %c0_116 = arith.constant 0 : index
    %155 = vector.load %arg6[%c4, %c0_115, %c0_116] : memref<7x256x128xbf16, #tpu.memory_space<vmem>>, vector<1x256x128xbf16>
    %156 = vector.shape_cast %155 : vector<1x256x128xbf16> to vector<256x128xbf16>
    %cst_117 = arith.constant dense<0.000000e+00> : vector<8x128xf32>
    %157 = tpu.matmul %154, %156, %cst_117 {dimension_numbers = #tpu.dot_dimension_numbers<[1], [0], [0], [1], [0, 0, 1, 1], [], []>} : vector<8x256xbf16>, vector<256x128xbf16>, vector<8x128xf32> -> vector<8x128xf32>
    %158 = arith.addf %152, %157 : vector<8x128xf32>
    %159 = vector.extract_strided_slice %129 {offsets = [40, 0], sizes = [8, 256], strides = [1, 1]} : vector<56x256xf32> to vector<8x256xf32>
    %160 = arith.truncf %159 : vector<8x256xf32> to vector<8x256xbf16>
    %c5 = arith.constant 5 : index
    %c0_118 = arith.constant 0 : index
    %c0_119 = arith.constant 0 : index
    %161 = vector.load %arg6[%c5, %c0_118, %c0_119] : memref<7x256x128xbf16, #tpu.memory_space<vmem>>, vector<1x256x128xbf16>
    %162 = vector.shape_cast %161 : vector<1x256x128xbf16> to vector<256x128xbf16>
    %cst_120 = arith.constant dense<0.000000e+00> : vector<8x128xf32>
    %163 = tpu.matmul %160, %162, %cst_120 {dimension_numbers = #tpu.dot_dimension_numbers<[1], [0], [0], [1], [0, 0, 1, 1], [], []>} : vector<8x256xbf16>, vector<256x128xbf16>, vector<8x128xf32> -> vector<8x128xf32>
    %164 = arith.addf %158, %163 : vector<8x128xf32>
    %165 = vector.extract_strided_slice %129 {offsets = [48, 0], sizes = [8, 256], strides = [1, 1]} : vector<56x256xf32> to vector<8x256xf32>
    %166 = arith.truncf %165 : vector<8x256xf32> to vector<8x256xbf16>
    %c6 = arith.constant 6 : index
    %c0_121 = arith.constant 0 : index
    %c0_122 = arith.constant 0 : index
    %167 = vector.load %arg6[%c6, %c0_121, %c0_122] : memref<7x256x128xbf16, #tpu.memory_space<vmem>>, vector<1x256x128xbf16>
    %168 = vector.shape_cast %167 : vector<1x256x128xbf16> to vector<256x128xbf16>
    %cst_123 = arith.constant dense<0.000000e+00> : vector<8x128xf32>
    %169 = tpu.matmul %166, %168, %cst_123 {dimension_numbers = #tpu.dot_dimension_numbers<[1], [0], [0], [1], [0, 0, 1, 1], [], []>} : vector<8x256xbf16>, vector<256x128xbf16>, vector<8x128xf32> -> vector<8x128xf32>
    %170 = arith.addf %164, %169 : vector<8x128xf32>
    %c0_124 = arith.constant 0 : index
    %c0_125 = arith.constant 0 : index
    %171 = vector.load %arg7[%c0_124, %c0_125] : memref<1x128xf32, #tpu.memory_space<vmem>>, vector<1x128xf32>
    %172 = vector.broadcast %171 : vector<1x128xf32> to vector<8x128xf32>
    %173 = arith.addf %170, %172 : vector<8x128xf32>
    %cst_126 = arith.constant 0.000000e+00 : f32
    %174 = vector.broadcast %cst_126 : f32 to vector<8x128xf32>
    %175 = arith.maximumf %173, %174 : vector<8x128xf32>
    %176 = arith.truncf %175 : vector<8x128xf32> to vector<8x128xbf16>
    %c0_127 = arith.constant 0 : index
    %c0_128 = arith.constant 0 : index
    %177 = vector.load %arg8[%c0_127, %c0_128] : memref<128x128xbf16, #tpu.memory_space<vmem>>, vector<128x128xbf16>
    %cst_129 = arith.constant dense<0.000000e+00> : vector<8x128xf32>
    %178 = tpu.matmul %176, %177, %cst_129 {dimension_numbers = #tpu.dot_dimension_numbers<[1], [0], [0], [1], [0, 0, 1, 1], [], []>} : vector<8x128xbf16>, vector<128x128xbf16>, vector<8x128xf32> -> vector<8x128xf32>
    %c0_130 = arith.constant 0 : index
    %c0_131 = arith.constant 0 : index
    %179 = vector.load %arg9[%c0_130, %c0_131] : memref<1x128xf32, #tpu.memory_space<vmem>>, vector<1x128xf32>
    %180 = vector.broadcast %179 : vector<1x128xf32> to vector<8x128xf32>
    %181 = arith.addf %178, %180 : vector<8x128xf32>
    %c0_132 = arith.constant 0 : index
    %c0_133 = arith.constant 0 : index
    %182 = vector.load %arg10[%c0_132, %c0_133] : memref<8x128xf32, #tpu.memory_space<vmem>>, vector<8x128xf32>
    tpu.vector_store %arg10[%c0_132, %c0_133], %181 {strides = array<i32>} : memref<8x128xf32, #tpu.memory_space<vmem>>, vector<8x128xf32>,
    return
  }
  func.func @transform_0(%arg0: i32) -> (i32, i32, i32, i32) {
    %c0_i32 = arith.constant 0 : i32
    %c0_i32_0 = arith.constant 0 : i32
    %c0_i32_1 = arith.constant 0 : i32
    %c0_i32_2 = arith.constant 0 : i32
    return %arg0, %c0_i32, %c0_i32_0, %c0_i32_1 : i32, i32, i32, i32
  }
  func.func @transform_1(%arg0: i32) -> (i32, i32) {
    %c0_i32 = arith.constant 0 : i32
    %c0_i32_0 = arith.constant 0 : i32
    %c0_i32_1 = arith.constant 0 : i32
    return %c0_i32, %c0_i32_0 : i32, i32
  }
  func.func @transform_2(%arg0: i32) -> (i32, i32) {
    %c0_i32 = arith.constant 0 : i32
    %c0_i32_0 = arith.constant 0 : i32
    %c0_i32_1 = arith.constant 0 : i32
    return %c0_i32, %c0_i32_0 : i32, i32
  }
  func.func @transform_3(%arg0: i32) -> (i32, i32, i32) {
    %c0_i32 = arith.constant 0 : i32
    %c0_i32_0 = arith.constant 0 : i32
    %c0_i32_1 = arith.constant 0 : i32
    %c0_i32_2 = arith.constant 0 : i32
    return %c0_i32, %c0_i32_0, %c0_i32_1 : i32, i32, i32
  }
  func.func @transform_4(%arg0: i32) -> (i32, i32) {
    %c0_i32 = arith.constant 0 : i32
    %c0_i32_0 = arith.constant 0 : i32
    %c0_i32_1 = arith.constant 0 : i32
    return %c0_i32, %c0_i32_0 : i32, i32
  }
  func.func @transform_5(%arg0: i32) -> (i32, i32, i32) {
    %c0_i32 = arith.constant 0 : i32
    %c0_i32_0 = arith.constant 0 : i32
    %c0_i32_1 = arith.constant 0 : i32
    %c0_i32_2 = arith.constant 0 : i32
    return %c0_i32, %c0_i32_0, %c0_i32_1 : i32, i32, i32
  }
  func.func @transform_6(%arg0: i32) -> (i32, i32) {
    %c0_i32 = arith.constant 0 : i32
    %c0_i32_0 = arith.constant 0 : i32
    %c0_i32_1 = arith.constant 0 : i32
    return %c0_i32, %c0_i32_0 : i32, i32
  }
  func.func @transform_7(%arg0: i32) -> (i32, i32) {
    %c0_i32 = arith.constant 0 : i32
    %c0_i32_0 = arith.constant 0 : i32
    %c0_i32_1 = arith.constant 0 : i32
    return %c0_i32, %c0_i32_0 : i32, i32
  }
  func.func @transform_8(%arg0: i32) -> (i32, i32) {
    %c0_i32 = arith.constant 0 : i32
    %c0_i32_0 = arith.constant 0 : i32
    %c0_i32_1 = arith.constant 0 : i32
    return %c0_i32, %c0_i32_0 : i32, i32
  }
  func.func @transform_9(%arg0: i32) -> (i32, i32) {
    %c0_i32 = arith.constant 0 : i32
    %c0_i32_0 = arith.constant 0 : i32
    return %arg0, %c0_i32 : i32, i32
  }
}

</mosaic_0001>

<llo_original>
// kernel: simple_cnn_forward.1
$region0: #{simple_cnn_forward.1}
  #allocation0 [shape = 'u32[]', space=smem, size = 0x4, offset = 0x4, fixed_abs, tag = 'smem constant byte address 0x4 - core index']
  #allocation1 [shape = 'u32[144,128]{1,0:T(1,128)}', space=vmem, size = 0x12000, scoped, tag = 'internal scratch']
  #allocation2 [shape = 'f32[2,72,256]{2,1,0:T(8,128)}', space=vmem, size = 0x24000, scoped, tag = 'scratch operand']
  %s0 = inlined_call_operand.vmem [shape: f32[1,4,56,128], index: 0, kind: input, shape index: {}]
  %s1 = inlined_call_operand.hbm [shape: bf16[128,512], index: 1, kind: input, shape index: {}]
  %s2 = inlined_call_operand.vmem [shape: f32[1,512], index: 2, kind: input, shape index: {}]
  %s3 = inlined_call_operand.vmem [shape: bf16[3,256,512], index: 3, kind: input, shape index: {}]
  %s4 = inlined_call_operand.vmem [shape: f32[1,512], index: 4, kind: input, shape index: {}]
  %s5 = inlined_call_operand.hbm [shape: bf16[7,256,128], index: 5, kind: input, shape index: {}]
  %s6 = inlined_call_operand.vmem [shape: f32[1,128], index: 6, kind: input, shape index: {}]
  %s7 = inlined_call_operand.hbm [shape: bf16[128,128], index: 7, kind: input, shape index: {}]
  %s8 = inlined_call_operand.vmem [shape: f32[1,128], index: 8, kind: input, shape index: {}]
  %s9 = inlined_call_operand.vmem [shape: f32[8,128], index: 9, kind: output, shape index: {}]
  %s10 = sld [smem:[#allocation0]]
  $region58: #{simple_cnn_forward.1} parent=0
    _
  %s12 = ssub.s32 1, %s10
  %s13 = scalar_select 0, %s12, %s10
  $region1: #{simple_cnn_forward.1} parent=0
    #allocation3 [shape = 'u8[131072]{0}', space=vmem, size = 0x20000, scoped, tag = 'input window, operand 1, single buffered']
    #allocation4 [shape = 's32[1]{0}', space=sflag, size = 0x4, scoped, tag = 'scoped memory for simple_cnn_forward.1']
    #allocation5 [shape = 'u8[458752]{0}', space=vmem, size = 0x70000, scoped, tag = 'input window, operand 5, single buffered']
    #allocation6 [shape = 's32[1]{0}', space=sflag, size = 0x4, scoped, tag = 'scoped memory for simple_cnn_forward.1']
    #allocation7 [shape = 'u8[32768]{0}', space=vmem, size = 0x8000, scoped, tag = 'input window, operand 7, single buffered']
    %14 = vsyncpa [#allocation4], 0
    %15 = vsyncpa [#allocation6], 0
    // Predicated region
    $region2: #{simple_cnn_forward.1} parent=1 // pred_check
      _
    $region3: #{simple_cnn_forward.1} parent=1 // pred_check_branch
      %17 = sbr.rel (0) target = $region5
    $region4: #{simple_cnn_forward.1} parent=1 // pred_region
      _
    $region5: #{simple_cnn_forward.1} parent=1 // pred_fallthru
      _
    // Predicated region
    $region6: #{simple_cnn_forward.1} parent=1 // pred_check
      _
    $region7: #{simple_cnn_forward.1} parent=1 // pred_check_branch
      %19 = sbr.rel (0) target = $region9
    $region8: #{simple_cnn_forward.1} parent=1 // pred_region
      %s21 = ssub.s32 4096, 4096
      %22 = vsyncadd [#allocation4], %s21
      %s23 = sshll.u32 [#allocation3], 4
      %s24 = int_to_ptr.vmem [resolvable:$true] %s23
      %29 = dma.hbm_to_vmem [thread:$0]  %s1, 4096, %s24, [#allocation4], 256, 256, 16
    $region9: #{simple_cnn_forward.1} parent=1 // pred_fallthru
      _
    // Predicated region
    $region10: #{simple_cnn_forward.1} parent=1 // pred_check
      _
    $region11: #{simple_cnn_forward.1} parent=1 // pred_check_branch
      %31 = sbr.rel (0) target = $region13
    $region12: #{simple_cnn_forward.1} parent=1 // pred_region
      _
    $region13: #{simple_cnn_forward.1} parent=1 // pred_fallthru
      _
    // Predicated region
    $region14: #{simple_cnn_forward.1} parent=1 // pred_check
      _
    $region15: #{simple_cnn_forward.1} parent=1 // pred_check_branch
      %33 = sbr.rel (0) target = $region17
    $region16: #{simple_cnn_forward.1} parent=1 // pred_region
      _
    $region17: #{simple_cnn_forward.1} parent=1 // pred_fallthru
      _
    // Predicated region
    $region18: #{simple_cnn_forward.1} parent=1 // pred_check
      _
    $region19: #{simple_cnn_forward.1} parent=1 // pred_check_branch
      %35 = sbr.rel (0) target = $region21
    $region20: #{simple_cnn_forward.1} parent=1 // pred_region
      _
    $region21: #{simple_cnn_forward.1} parent=1 // pred_fallthru
      _
    // Predicated region
    $region22: #{simple_cnn_forward.1} parent=1 // pred_check
      _
    $region23: #{simple_cnn_forward.1} parent=1 // pred_check_branch
      %37 = sbr.rel (0) target = $region25
    $region24: #{simple_cnn_forward.1} parent=1 // pred_region
      %s39 = ssub.s32 14336, 14336
      %40 = vsyncadd [#allocation6], %s39
      %s41 = sshll.u32 [#allocation5], 4
      %s42 = int_to_ptr.vmem [resolvable:$true] %s41
      %47 = dma.hbm_to_vmem [thread:$0]  %s5, 14336, %s42, [#allocation6], 64, 64, 4
    $region25: #{simple_cnn_forward.1} parent=1 // pred_fallthru
      _
    // Predicated region
    $region26: #{simple_cnn_forward.1} parent=1 // pred_check
      _
    $region27: #{simple_cnn_forward.1} parent=1 // pred_check_branch
      %49 = sbr.rel (0) target = $region29
    $region28: #{simple_cnn_forward.1} parent=1 // pred_region
      _
    $region29: #{simple_cnn_forward.1} parent=1 // pred_fallthru
      _
    // Predicated region
    $region30: #{simple_cnn_forward.1} parent=1 // pred_check
      _
    $region31: #{simple_cnn_forward.1} parent=1 // pred_check_branch
      %51 = sbr.rel (0) target = $region33
    $region32: #{simple_cnn_forward.1} parent=1 // pred_region
      %s53 = ssub.s32 1024, 1024
      %54 = vsyncadd [#allocation6], %s53
      %s55 = sshll.u32 [#allocation7], 4
      %s56 = int_to_ptr.vmem [resolvable:$true] %s55
      %61 = dma.hbm_to_vmem [thread:$0]  %s7, 1024, %s56, [#allocation6], 64, 64, 4
    $region33: #{simple_cnn_forward.1} parent=1 // pred_fallthru
      _
    // Predicated region
    $region34: #{simple_cnn_forward.1} parent=1 // pred_check
      _
    $region35: #{simple_cnn_forward.1} parent=1 // pred_check_branch
      %63 = sbr.rel (0) target = $region37
    $region36: #{simple_cnn_forward.1} parent=1 // pred_region
      _
    $region37: #{simple_cnn_forward.1} parent=1 // pred_fallthru
      _
    // Predicated region
    $region38: #{simple_cnn_forward.1} parent=1 // pred_check
      _
    $region39: #{simple_cnn_forward.1} parent=1 // pred_check_branch
      %65 = sbr.rel (0) target = $region41
    $region40: #{simple_cnn_forward.1} parent=1 // pred_region
      %66 = dma.done [#allocation4], 4096
    $region41: #{simple_cnn_forward.1} parent=1 // pred_fallthru
      _
    // Predicated region
    $region42: #{simple_cnn_forward.1} parent=1 // pred_check
      _
    $region43: #{simple_cnn_forward.1} parent=1 // pred_check_branch
      %68 = sbr.rel (0) target = $region45
    $region44: #{simple_cnn_forward.1} parent=1 // pred_region
      %69 = dma.done [#allocation6], 14336
    $region45: #{simple_cnn_forward.1} parent=1 // pred_fallthru
      _
    // Predicated region
    $region46: #{simple_cnn_forward.1} parent=1 // pred_check
      _
    $region47: #{simple_cnn_forward.1} parent=1 // pred_check_branch
      %71 = sbr.rel (0) target = $region49
    $region48: #{simple_cnn_forward.1} parent=1 // pred_region
      %72 = dma.done [#allocation6], 1024
    $region49: #{simple_cnn_forward.1} parent=1 // pred_fallthru
      _
    %74 = vst [vmem:[#allocation2] sm:$0xff] 0.0
    %75 = vst [vmem:[#allocation2 + $0x8] sm:$0xff] 0.0
    %76 = vst [vmem:[#allocation2 + $0x80] sm:$0xff] 0.0
    %77 = vst [vmem:[#allocation2 + $0x88] sm:$0xff] 0.0
    %s78 = scalar_lea.vmem [#allocation2], 144
    %79 = vst [vmem:[%s78] sm:$0xff] 0.0
    %80 = vst [vmem:[%s78 + $0x8] sm:$0xff] 0.0
    %81 = vst [vmem:[%s78 + $0x80] sm:$0xff] 0.0
    %82 = vst [vmem:[%s78 + $0x88] sm:$0xff] 0.0
    %v83 = vld [vmem:[%s0] sm:$0xff]
    %v84 = vld [vmem:[%s0 + $0x8] sm:$0xff]
    %v85 = vld [vmem:[%s0 + $0x10] sm:$0xff]
    %v86 = vld [vmem:[%s0 + $0x18] sm:$0xff]
    %v87 = vld [vmem:[%s0 + $0x20] sm:$0xff]
    %v88 = vld [vmem:[%s0 + $0x28] sm:$0xff]
    %v89 = vld [vmem:[%s0 + $0x30] sm:$0xff]
    %v90 = vpack.c.bf16 %v84, %v83
    %v91 = vpack.c.bf16 %v86, %v85
    %v92 = vpack.c.bf16 %v88, %v87
    %v93 = vpack.c.bf16 %v89, %v89
    %v94 = vld [vmem:[#allocation3] sm:$0xff]
    %v95 = vld [vmem:[#allocation3 + $0x8] sm:$0xff]
    %v96 = vld [vmem:[#allocation3 + $0x10] sm:$0xff]
    %v97 = vld [vmem:[#allocation3 + $0x18] sm:$0xff]
    %v98 = vld [vmem:[#allocation3 + $0x20] sm:$0xff]
    %v99 = vld [vmem:[#allocation3 + $0x28] sm:$0xff]
    %v100 = vld [vmem:[#allocation3 + $0x30] sm:$0xff]
    %v101 = vld [vmem:[#allocation3 + $0x38] sm:$0xff]
    %v102 = vld [vmem:[#allocation3 + $0x40] sm:$0xff]
    %v103 = vld [vmem:[#allocation3 + $0x48] sm:$0xff]
    %v104 = vld [vmem:[#allocation3 + $0x50] sm:$0xff]
    %v105 = vld [vmem:[#allocation3 + $0x58] sm:$0xff]
    %v106 = vld [vmem:[#allocation3 + $0x60] sm:$0xff]
    %v107 = vld [vmem:[#allocation3 + $0x68] sm:$0xff]
    %v108 = vld [vmem:[#allocation3 + $0x70] sm:$0xff]
    %v109 = vld [vmem:[#allocation3 + $0x78] sm:$0xff]
    %v110 = vld [vmem:[#allocation3 + $0x80] sm:$0xff]
    %v111 = vld [vmem:[#allocation3 + $0x88] sm:$0xff]
    %v112 = vld [vmem:[#allocation3 + $0x90] sm:$0xff]
    %v113 = vld [vmem:[#allocation3 + $0x98] sm:$0xff]
    %v114 = vld [vmem:[#allocation3 + $0xa0] sm:$0xff]
    %v115 = vld [vmem:[#allocation3 + $0xa8] sm:$0xff]
    %v116 = vld [vmem:[#allocation3 + $0xb0] sm:$0xff]
    %v117 = vld [vmem:[#allocation3 + $0xb8] sm:$0xff]
    %v118 = vld [vmem:[#allocation3 + $0xc0] sm:$0xff]
    %v119 = vld [vmem:[#allocation3 + $0xc8] sm:$0xff]
    %v120 = vld [vmem:[#allocation3 + $0xd0] sm:$0xff]
    %v121 = vld [vmem:[#allocation3 + $0xd8] sm:$0xff]
    %v122 = vld [vmem:[#allocation3 + $0xe0] sm:$0xff]
    %v123 = vld [vmem:[#allocation3 + $0xe8] sm:$0xff]
    %v124 = vld [vmem:[#allocation3 + $0xf0] sm:$0xff]
    %v125 = vld [vmem:[#allocation3 + $0xf8] sm:$0xff]
    %v126 = vld [vmem:[%s2] sm:$0xf]
    %v128 = vlaneseq
    %v129 = vshrl.u32 %v128, 7
    %v130 = vsub.s32 0, %v129
    %v131 = vrot.slane %v126, %v130
    %v132 = vlaneseq
    %v133 = vshrl.u32 %v132, 7
    %v134 = vsub.s32 1, %v133
    %v135 = vrot.slane %v126, %v134
    %v136 = vlaneseq
    %v137 = vshrl.u32 %v136, 7
    %v138 = vsub.s32 2, %v137
    %v139 = vrot.slane %v126, %v138
    %v140 = vlaneseq
    %v141 = vshrl.u32 %v140, 7
    %v142 = vsub.s32 3, %v141
    %v143 = vrot.slane %v126, %v142
    %v180 = vunpack.c.l.b16 %v94
    %v181 = vunpack.c.h.b16 %v94
    %v182 = vunpack.c.l.b16 %v95
    %v183 = vunpack.c.h.b16 %v95
    %v184 = vunpack.c.l.b16 %v96
    %v185 = vunpack.c.h.b16 %v96
    %v186 = vunpack.c.l.b16 %v97
    %v187 = vunpack.c.h.b16 %v97
    %v188 = vunpack.c.l.b16 %v98
    %v189 = vunpack.c.h.b16 %v98
    %v190 = vunpack.c.l.b16 %v99
    %v191 = vunpack.c.h.b16 %v99
    %v192 = vunpack.c.l.b16 %v100
    %v193 = vunpack.c.h.b16 %v100
    %v194 = vunpack.c.l.b16 %v101
    %v195 = vunpack.c.h.b16 %v101
    %v196 = vunpack.c.l.b16 %v102
    %v197 = vunpack.c.h.b16 %v102
    %v198 = vunpack.c.l.b16 %v103
    %v199 = vunpack.c.h.b16 %v103
    %v200 = vunpack.c.l.b16 %v104
    %v201 = vunpack.c.h.b16 %v104
    %v202 = vunpack.c.l.b16 %v105
    %v203 = vunpack.c.h.b16 %v105
    %v204 = vunpack.c.l.b16 %v106
    %v205 = vunpack.c.h.b16 %v106
    %v206 = vunpack.c.l.b16 %v107
    %v207 = vunpack.c.h.b16 %v107
    %v208 = vunpack.c.l.b16 %v108
    %v209 = vunpack.c.h.b16 %v108
    %v210 = vunpack.c.l.b16 %v109
    %v211 = vunpack.c.h.b16 %v109
    %v212 = vunpack.c.l.b16 %v110
    %v213 = vunpack.c.h.b16 %v110
    %v214 = vunpack.c.l.b16 %v111
    %v215 = vunpack.c.h.b16 %v111
    %v216 = vunpack.c.l.b16 %v112
    %v217 = vunpack.c.h.b16 %v112
    %v218 = vunpack.c.l.b16 %v113
    %v219 = vunpack.c.h.b16 %v113
    %v220 = vunpack.c.l.b16 %v114
    %v221 = vunpack.c.h.b16 %v114
    %v222 = vunpack.c.l.b16 %v115
    %v223 = vunpack.c.h.b16 %v115
    %v224 = vunpack.c.l.b16 %v116
    %v225 = vunpack.c.h.b16 %v116
    %v226 = vunpack.c.l.b16 %v117
    %v227 = vunpack.c.h.b16 %v117
    %v228 = vunpack.c.l.b16 %v118
    %v229 = vunpack.c.h.b16 %v118
    %v230 = vunpack.c.l.b16 %v119
    %v231 = vunpack.c.h.b16 %v119
    %v232 = vunpack.c.l.b16 %v120
    %v233 = vunpack.c.h.b16 %v120
    %v234 = vunpack.c.l.b16 %v121
    %v235 = vunpack.c.h.b16 %v121
    %v236 = vunpack.c.l.b16 %v122
    %v237 = vunpack.c.h.b16 %v122
    %v238 = vunpack.c.l.b16 %v123
    %v239 = vunpack.c.h.b16 %v123
    %v240 = vunpack.c.l.b16 %v124
    %v241 = vunpack.c.h.b16 %v124
    %v242 = vunpack.c.l.b16 %v125
    %v243 = vunpack.c.h.b16 %v125
    %v244 = vpack.c.b16 %v184, %v180
    %v245 = vpack.c.b16 %v185, %v181
    %v246 = vpack.c.b16 %v186, %v182
    %v247 = vpack.c.b16 %v187, %v183
    %v248 = vpack.c.b16 %v192, %v188
    %v249 = vpack.c.b16 %v193, %v189
    %v250 = vpack.c.b16 %v194, %v190
    %v251 = vpack.c.b16 %v195, %v191
    %v252 = vpack.c.b16 %v200, %v196
    %v253 = vpack.c.b16 %v201, %v197
    %v254 = vpack.c.b16 %v202, %v198
    %v255 = vpack.c.b16 %v203, %v199
    %v256 = vpack.c.b16 %v208, %v204
    %v257 = vpack.c.b16 %v209, %v205
    %v258 = vpack.c.b16 %v210, %v206
    %v259 = vpack.c.b16 %v211, %v207
    %v260 = vpack.c.b16 %v216, %v212
    %v261 = vpack.c.b16 %v217, %v213
    %v262 = vpack.c.b16 %v218, %v214
    %v263 = vpack.c.b16 %v219, %v215
    %v264 = vpack.c.b16 %v224, %v220
    %v265 = vpack.c.b16 %v225, %v221
    %v266 = vpack.c.b16 %v226, %v222
    %v267 = vpack.c.b16 %v227, %v223
    %v268 = vpack.c.b16 %v232, %v228
    %v269 = vpack.c.b16 %v233, %v229
    %v270 = vpack.c.b16 %v234, %v230
    %v271 = vpack.c.b16 %v235, %v231
    %v272 = vpack.c.b16 %v240, %v236
    %v273 = vpack.c.b16 %v241, %v237
    %v274 = vpack.c.b16 %v242, %v238
    %v275 = vpack.c.b16 %v243, %v239
    %308 = vmatprep.subr.bf16.mxu0 %v245
    %309 = vmatpush1.bf16.msra.mxu0 %v244
    %310 = vmatprep.subr.bf16.mxu0 %v249
    %311 = vmatpush1.bf16.msra.mxu0 %v248
    %312 = vmatprep.subr.bf16.mxu0 %v253
    %313 = vmatpush1.bf16.msra.mxu0 %v252
    %314 = vmatprep.subr.bf16.mxu0 %v257
    %315 = vmatpush1.bf16.msra.mxu0 %v256
    %316 = vmatprep.subr.bf16.mxu0 %v261
    %317 = vmatpush1.bf16.msra.mxu0 %v260
    %318 = vmatprep.subr.bf16.mxu0 %v265
    %319 = vmatpush1.bf16.msra.mxu0 %v264
    %320 = vmatprep.subr.bf16.mxu0 %v269
    %321 = vmatpush1.bf16.msra.mxu0 %v268
    %322 = vmatprep.subr.bf16.mxu0 %v273
    %323 = vmatpush1.bf16.msra.mxu0 %v272
    %324 = vmatprep.subr.bf16.mxu0 0
    %325 = vmatpush1.bf16.msra.mxu0 0
    %326 = vmatprep.subr.bf16.mxu0 0
    %327 = vmatpush1.bf16.msra.mxu0 0
    %328 = vmatprep.subr.bf16.mxu0 0
    %329 = vmatpush1.bf16.msra.mxu0 0
    %330 = vmatprep.subr.bf16.mxu0 0
    %331 = vmatpush1.bf16.msra.mxu0 0
    %332 = vmatprep.subr.bf16.mxu0 0
    %333 = vmatpush1.bf16.msra.mxu0 0
    %334 = vmatprep.subr.bf16.mxu0 0
    %335 = vmatpush1.bf16.msra.mxu0 0
    %336 = vmatprep.subr.bf16.mxu0 0
    %337 = vmatpush1.bf16.msra.mxu0 0
    %338 = vmatprep.subr.bf16.mxu0 0
    %339 = vmatpush1.bf16.msra.mxu0 0
    %340 = vmatprep.mubr.bf16.mxu0 0
    %341 = vmatmul.mubr.bf16.gmra.mrb[0].mxu0 %v90
    %v342 = vpop.f32.mrb[0].mxu0
    %v343 = vadd.f32 %v131, %v342
    %v344 = vpop.f32.mrb[0].mxu0
    %v345 = vadd.f32 %v135, %v344
    %v346 = vpop.f32.mrb[0].mxu0
    %v347 = vadd.f32 %v131, %v346
    %v348 = vpop.f32.mrb[0].mxu0
    %v349 = vadd.f32 %v135, %v348
    %350 = vmatprep.mubr.bf16.mxu0 0
    %351 = vmatmul.mubr.bf16.gmra.mrb[0].mxu0 %v91
    %v352 = vpop.f32.mrb[0].mxu0
    %v353 = vadd.f32 %v131, %v352
    %v354 = vpop.f32.mrb[0].mxu0
    %v355 = vadd.f32 %v135, %v354
    %v356 = vpop.f32.mrb[0].mxu0
    %v357 = vadd.f32 %v131, %v356
    %v358 = vpop.f32.mrb[0].mxu0
    %v359 = vadd.f32 %v135, %v358
    %360 = vmatprep.mubr.bf16.mxu0 0
    %361 = vmatmul.mubr.bf16.gmra.mrb[0].mxu0 %v92
    %v362 = vpop.f32.mrb[0].mxu0
    %v363 = vadd.f32 %v131, %v362
    %v364 = vpop.f32.mrb[0].mxu0
    %v365 = vadd.f32 %v135, %v364
    %v366 = vpop.f32.mrb[0].mxu0
    %v367 = vadd.f32 %v131, %v366
    %v368 = vpop.f32.mrb[0].mxu0
    %v369 = vadd.f32 %v135, %v368
    %370 = vmatprep.mubr.bf16.mxu0 0
    %371 = vmatmul.mubr.bf16.gmra.mrb[0].mxu0 %v93
    %v372 = vpop.f32.mrb[0].mxu0
    %v373 = vadd.f32 %v131, %v372
    %v374 = vpop.f32.mrb[0].mxu0
    %v375 = vadd.f32 %v135, %v374
    %v376 = vpop.f32.mrb[0].mxu0
    %v377 = vpop.f32.mrb[0].mxu0
    %378 = vdwg.mxu0
    %379 = vmatprep.subr.bf16.mxu0 %v247
    %380 = vmatpush1.bf16.msra.mxu0 %v246
    %381 = vmatprep.subr.bf16.mxu0 %v251
    %382 = vmatpush1.bf16.msra.mxu0 %v250
    %383 = vmatprep.subr.bf16.mxu0 %v255
    %384 = vmatpush1.bf16.msra.mxu0 %v254
    %385 = vmatprep.subr.bf16.mxu0 %v259
    %386 = vmatpush1.bf16.msra.mxu0 %v258
    %387 = vmatprep.subr.bf16.mxu0 %v263
    %388 = vmatpush1.bf16.msra.mxu0 %v262
    %389 = vmatprep.subr.bf16.mxu0 %v267
    %390 = vmatpush1.bf16.msra.mxu0 %v266
    %391 = vmatprep.subr.bf16.mxu0 %v271
    %392 = vmatpush1.bf16.msra.mxu0 %v270
    %393 = vmatprep.subr.bf16.mxu0 %v275
    %394 = vmatpush1.bf16.msra.mxu0 %v274
    %395 = vmatprep.subr.bf16.mxu0 0
    %396 = vmatpush1.bf16.msra.mxu0 0
    %397 = vmatprep.subr.bf16.mxu0 0
    %398 = vmatpush1.bf16.msra.mxu0 0
    %399 = vmatprep.subr.bf16.mxu0 0
    %400 = vmatpush1.bf16.msra.mxu0 0
    %401 = vmatprep.subr.bf16.mxu0 0
    %402 = vmatpush1.bf16.msra.mxu0 0
    %403 = vmatprep.subr.bf16.mxu0 0
    %404 = vmatpush1.bf16.msra.mxu0 0
    %405 = vmatprep.subr.bf16.mxu0 0
    %406 = vmatpush1.bf16.msra.mxu0 0
    %407 = vmatprep.subr.bf16.mxu0 0
    %408 = vmatpush1.bf16.msra.mxu0 0
    %409 = vmatprep.subr.bf16.mxu0 0
    %410 = vmatpush1.bf16.msra.mxu0 0
    %411 = vmatprep.mubr.bf16.mxu0 0
    %412 = vmatmul.mubr.bf16.gmra.mrb[0].mxu0 %v90
    %v413 = vpop.f32.mrb[0].mxu0
    %v414 = vadd.f32 %v139, %v413
    %v415 = vpop.f32.mrb[0].mxu0
    %v416 = vadd.f32 %v143, %v415
    %v417 = vpop.f32.mrb[0].mxu0
    %v418 = vadd.f32 %v139, %v417
    %v419 = vpop.f32.mrb[0].mxu0
    %v420 = vadd.f32 %v143, %v419
    %421 = vmatprep.mubr.bf16.mxu0 0
    %422 = vmatmul.mubr.bf16.gmra.mrb[0].mxu0 %v91
    %v423 = vpop.f32.mrb[0].mxu0
    %v424 = vadd.f32 %v139, %v423
    %v425 = vpop.f32.mrb[0].mxu0
    %v426 = vadd.f32 %v143, %v425
    %v427 = vpop.f32.mrb[0].mxu0
    %v428 = vadd.f32 %v139, %v427
    %v429 = vpop.f32.mrb[0].mxu0
    %v430 = vadd.f32 %v143, %v429
    %431 = vmatprep.mubr.bf16.mxu0 0
    %432 = vmatmul.mubr.bf16.gmra.mrb[0].mxu0 %v92
    %v433 = vpop.f32.mrb[0].mxu0
    %v434 = vadd.f32 %v139, %v433
    %v435 = vpop.f32.mrb[0].mxu0
    %v436 = vadd.f32 %v143, %v435
    %v437 = vpop.f32.mrb[0].mxu0
    %v438 = vadd.f32 %v139, %v437
    %v439 = vpop.f32.mrb[0].mxu0
    %v440 = vadd.f32 %v143, %v439
    %441 = vmatprep.mubr.bf16.mxu0 0
    %442 = vmatmul.mubr.bf16.gmra.mrb[0].mxu0 %v93
    %v443 = vpop.f32.mrb[0].mxu0
    %v444 = vadd.f32 %v139, %v443
    %v445 = vpop.f32.mrb[0].mxu0
    %v446 = vadd.f32 %v143, %v445
    %v447 = vpop.f32.mrb[0].mxu0
    %v448 = vpop.f32.mrb[0].mxu0
    %449 = vdwg.mxu0
    %v450 = vmax.f32 %v343, 0.0
    %v451 = vmax.f32 %v345, 0.0
    %v452 = vmax.f32 %v414, 0.0
    %v453 = vmax.f32 %v416, 0.0
    %v454 = vmax.f32 %v347, 0.0
    %v455 = vmax.f32 %v349, 0.0
    %v456 = vmax.f32 %v418, 0.0
    %v457 = vmax.f32 %v420, 0.0
    %v458 = vmax.f32 %v353, 0.0
    %v459 = vmax.f32 %v355, 0.0
    %v460 = vmax.f32 %v424, 0.0
    %v461 = vmax.f32 %v426, 0.0
    %v462 = vmax.f32 %v357, 0.0
    %v463 = vmax.f32 %v359, 0.0
    %v464 = vmax.f32 %v428, 0.0
    %v465 = vmax.f32 %v430, 0.0
    %v466 = vmax.f32 %v363, 0.0
    %v467 = vmax.f32 %v365, 0.0
    %v468 = vmax.f32 %v434, 0.0
    %v469 = vmax.f32 %v436, 0.0
    %v470 = vmax.f32 %v367, 0.0
    %v471 = vmax.f32 %v369, 0.0
    %v472 = vmax.f32 %v438, 0.0
    %v473 = vmax.f32 %v440, 0.0
    %v474 = vmax.f32 %v373, 0.0
    %v475 = vmax.f32 %v375, 0.0
    %v476 = vmax.f32 %v444, 0.0
    %v477 = vmax.f32 %v446, 0.0
    %v478 = vmax.f32 %v450, %v452
    %v479 = vmax.f32 %v451, %v453
    %v480 = vmax.f32 %v454, %v456
    %v481 = vmax.f32 %v455, %v457
    %v482 = vmax.f32 %v458, %v460
    %v483 = vmax.f32 %v459, %v461
    %v484 = vmax.f32 %v462, %v464
    %v485 = vmax.f32 %v463, %v465
    %v486 = vmax.f32 %v466, %v468
    %v487 = vmax.f32 %v467, %v469
    %v488 = vmax.f32 %v470, %v472
    %v489 = vmax.f32 %v471, %v473
    %v490 = vmax.f32 %v474, %v476
    %v491 = vmax.f32 %v475, %v477
    %s492 = scalar_lea.vmem %s0, 56
    %v493 = vld [vmem:[%s492] sm:$0xff]
    %v494 = vld [vmem:[%s492 + $0x8] sm:$0xff]
    %v495 = vld [vmem:[%s492 + $0x10] sm:$0xff]
    %v496 = vld [vmem:[%s492 + $0x18] sm:$0xff]
    %v497 = vld [vmem:[%s492 + $0x20] sm:$0xff]
    %v498 = vld [vmem:[%s492 + $0x28] sm:$0xff]
    %v499 = vld [vmem:[%s492 + $0x30] sm:$0xff]
    %v500 = vpack.c.bf16 %v494, %v493
    %v501 = vpack.c.bf16 %v496, %v495
    %v502 = vpack.c.bf16 %v498, %v497
    %v503 = vpack.c.bf16 %v499, %v499
    %504 = vmatprep.subr.bf16.mxu0 %v245
    %505 = vmatpush1.bf16.msra.mxu0 %v244
    %506 = vmatprep.subr.bf16.mxu0 %v249
    %507 = vmatpush1.bf16.msra.mxu0 %v248
    %508 = vmatprep.subr.bf16.mxu0 %v253
    %509 = vmatpush1.bf16.msra.mxu0 %v252
    %510 = vmatprep.subr.bf16.mxu0 %v257
    %511 = vmatpush1.bf16.msra.mxu0 %v256
    %512 = vmatprep.subr.bf16.mxu0 %v261
    %513 = vmatpush1.bf16.msra.mxu0 %v260
    %514 = vmatprep.subr.bf16.mxu0 %v265
    %515 = vmatpush1.bf16.msra.mxu0 %v264
    %516 = vmatprep.subr.bf16.mxu0 %v269
    %517 = vmatpush1.bf16.msra.mxu0 %v268
    %518 = vmatprep.subr.bf16.mxu0 %v273
    %519 = vmatpush1.bf16.msra.mxu0 %v272
    %520 = vmatprep.subr.bf16.mxu0 0
    %521 = vmatpush1.bf16.msra.mxu0 0
    %522 = vmatprep.subr.bf16.mxu0 0
    %523 = vmatpush1.bf16.msra.mxu0 0
    %524 = vmatprep.subr.bf16.mxu0 0
    %525 = vmatpush1.bf16.msra.mxu0 0
    %526 = vmatprep.subr.bf16.mxu0 0
    %527 = vmatpush1.bf16.msra.mxu0 0
    %528 = vmatprep.subr.bf16.mxu0 0
    %529 = vmatpush1.bf16.msra.mxu0 0
    %530 = vmatprep.subr.bf16.mxu0 0
    %531 = vmatpush1.bf16.msra.mxu0 0
    %532 = vmatprep.subr.bf16.mxu0 0
    %533 = vmatpush1.bf16.msra.mxu0 0
    %534 = vmatprep.subr.bf16.mxu0 0
    %535 = vmatpush1.bf16.msra.mxu0 0
    %536 = vmatprep.mubr.bf16.mxu0 0
    %537 = vmatmul.mubr.bf16.gmra.mrb[0].mxu0 %v500
    %v538 = vpop.f32.mrb[0].mxu0
    %v539 = vadd.f32 %v131, %v538
    %v540 = vpop.f32.mrb[0].mxu0
    %v541 = vadd.f32 %v135, %v540
    %v542 = vpop.f32.mrb[0].mxu0
    %v543 = vadd.f32 %v131, %v542
    %v544 = vpop.f32.mrb[0].mxu0
    %v545 = vadd.f32 %v135, %v544
    %546 = vmatprep.mubr.bf16.mxu0 0
    %547 = vmatmul.mubr.bf16.gmra.mrb[0].mxu0 %v501
    %v548 = vpop.f32.mrb[0].mxu0
    %v549 = vadd.f32 %v131, %v548
    %v550 = vpop.f32.mrb[0].mxu0
    %v551 = vadd.f32 %v135, %v550
    %v552 = vpop.f32.mrb[0].mxu0
    %v553 = vadd.f32 %v131, %v552
    %v554 = vpop.f32.mrb[0].mxu0
    %v555 = vadd.f32 %v135, %v554
    %556 = vmatprep.mubr.bf16.mxu0 0
    %557 = vmatmul.mubr.bf16.gmra.mrb[0].mxu0 %v502
    %v558 = vpop.f32.mrb[0].mxu0
    %v559 = vadd.f32 %v131, %v558
    %v560 = vpop.f32.mrb[0].mxu0
    %v561 = vadd.f32 %v135, %v560
    %v562 = vpop.f32.mrb[0].mxu0
    %v563 = vadd.f32 %v131, %v562
    %v564 = vpop.f32.mrb[0].mxu0
    %v565 = vadd.f32 %v135, %v564
    %566 = vmatprep.mubr.bf16.mxu0 0
    %567 = vmatmul.mubr.bf16.gmra.mrb[0].mxu0 %v503
    %v568 = vpop.f32.mrb[0].mxu0
    %v569 = vadd.f32 %v131, %v568
    %v570 = vpop.f32.mrb[0].mxu0
    %v571 = vadd.f32 %v135, %v570
    %v572 = vpop.f32.mrb[0].mxu0
    %v573 = vpop.f32.mrb[0].mxu0
    %574 = vdwg.mxu0
    %575 = vmatprep.subr.bf16.mxu0 %v247
    %576 = vmatpush1.bf16.msra.mxu0 %v246
    %577 = vmatprep.subr.bf16.mxu0 %v251
    %578 = vmatpush1.bf16.msra.mxu0 %v250
    %579 = vmatprep.subr.bf16.mxu0 %v255
    %580 = vmatpush1.bf16.msra.mxu0 %v254
    %581 = vmatprep.subr.bf16.mxu0 %v259
    %582 = vmatpush1.bf16.msra.mxu0 %v258
    %583 = vmatprep.subr.bf16.mxu0 %v263
    %584 = vmatpush1.bf16.msra.mxu0 %v262
    %585 = vmatprep.subr.bf16.mxu0 %v267
    %586 = vmatpush1.bf16.msra.mxu0 %v266
    %587 = vmatprep.subr.bf16.mxu0 %v271
    %588 = vmatpush1.bf16.msra.mxu0 %v270
    %589 = vmatprep.subr.bf16.mxu0 %v275
    %590 = vmatpush1.bf16.msra.mxu0 %v274
    %591 = vmatprep.subr.bf16.mxu0 0
    %592 = vmatpush1.bf16.msra.mxu0 0
    %593 = vmatprep.subr.bf16.mxu0 0
    %594 = vmatpush1.bf16.msra.mxu0 0
    %595 = vmatprep.subr.bf16.mxu0 0
    %596 = vmatpush1.bf16.msra.mxu0 0
    %597 = vmatprep.subr.bf16.mxu0 0
    %598 = vmatpush1.bf16.msra.mxu0 0
    %599 = vmatprep.subr.bf16.mxu0 0
    %600 = vmatpush1.bf16.msra.mxu0 0
    %601 = vmatprep.subr.bf16.mxu0 0
    %602 = vmatpush1.bf16.msra.mxu0 0
    %603 = vmatprep.subr.bf16.mxu0 0
    %604 = vmatpush1.bf16.msra.mxu0 0
    %605 = vmatprep.subr.bf16.mxu0 0
    %606 = vmatpush1.bf16.msra.mxu0 0
    %607 = vmatprep.mubr.bf16.mxu0 0
    %608 = vmatmul.mubr.bf16.gmra.mrb[0].mxu0 %v500
    %v609 = vpop.f32.mrb[0].mxu0
    %v610 = vadd.f32 %v139, %v609
    %v611 = vpop.f32.mrb[0].mxu0
    %v612 = vadd.f32 %v143, %v611
    %v613 = vpop.f32.mrb[0].mxu0
    %v614 = vadd.f32 %v139, %v613
    %v615 = vpop.f32.mrb[0].mxu0
    %v616 = vadd.f32 %v143, %v615
    %617 = vmatprep.mubr.bf16.mxu0 0
    %618 = vmatmul.mubr.bf16.gmra.mrb[0].mxu0 %v501
    %v619 = vpop.f32.mrb[0].mxu0
    %v620 = vadd.f32 %v139, %v619
    %v621 = vpop.f32.mrb[0].mxu0
    %v622 = vadd.f32 %v143, %v621
    %v623 = vpop.f32.mrb[0].mxu0
    %v624 = vadd.f32 %v139, %v623
    %v625 = vpop.f32.mrb[0].mxu0
    %v626 = vadd.f32 %v143, %v625
    %627 = vmatprep.mubr.bf16.mxu0 0
    %628 = vmatmul.mubr.bf16.gmra.mrb[0].mxu0 %v502
    %v629 = vpop.f32.mrb[0].mxu0
    %v630 = vadd.f32 %v139, %v629
    %v631 = vpop.f32.mrb[0].mxu0
    %v632 = vadd.f32 %v143, %v631
    %v633 = vpop.f32.mrb[0].mxu0
    %v634 = vadd.f32 %v139, %v633
    %v635 = vpop.f32.mrb[0].mxu0
    %v636 = vadd.f32 %v143, %v635
    %637 = vmatprep.mubr.bf16.mxu0 0
    %638 = vmatmul.mubr.bf16.gmra.mrb[0].mxu0 %v503
    %v639 = vpop.f32.mrb[0].mxu0
    %v640 = vadd.f32 %v139, %v639
    %v641 = vpop.f32.mrb[0].mxu0
    %v642 = vadd.f32 %v143, %v641
    %v643 = vpop.f32.mrb[0].mxu0
    %v644 = vpop.f32.mrb[0].mxu0
    %645 = vdwg.mxu0
    %v646 = vmax.f32 %v539, 0.0
    %v647 = vmax.f32 %v541, 0.0
    %v648 = vmax.f32 %v610, 0.0
    %v649 = vmax.f32 %v612, 0.0
    %v650 = vmax.f32 %v543, 0.0
    %v651 = vmax.f32 %v545, 0.0
    %v652 = vmax.f32 %v614, 0.0
    %v653 = vmax.f32 %v616, 0.0
    %v654 = vmax.f32 %v549, 0.0
    %v655 = vmax.f32 %v551, 0.0
    %v656 = vmax.f32 %v620, 0.0
    %v657 = vmax.f32 %v622, 0.0
    %v658 = vmax.f32 %v553, 0.0
    %v659 = vmax.f32 %v555, 0.0
    %v660 = vmax.f32 %v624, 0.0
    %v661 = vmax.f32 %v626, 0.0
    %v662 = vmax.f32 %v559, 0.0
    %v663 = vmax.f32 %v561, 0.0
    %v664 = vmax.f32 %v630, 0.0
    %v665 = vmax.f32 %v632, 0.0
    %v666 = vmax.f32 %v563, 0.0
    %v667 = vmax.f32 %v565, 0.0
    %v668 = vmax.f32 %v634, 0.0
    %v669 = vmax.f32 %v636, 0.0
    %v670 = vmax.f32 %v569, 0.0
    %v671 = vmax.f32 %v571, 0.0
    %v672 = vmax.f32 %v640, 0.0
    %v673 = vmax.f32 %v642, 0.0
    %v674 = vmax.f32 %v646, %v648
    %v675 = vmax.f32 %v647, %v649
    %v676 = vmax.f32 %v650, %v652
    %v677 = vmax.f32 %v651, %v653
    %v678 = vmax.f32 %v654, %v656
    %v679 = vmax.f32 %v655, %v657
    %v680 = vmax.f32 %v658, %v660
    %v681 = vmax.f32 %v659, %v661
    %v682 = vmax.f32 %v662, %v664
    %v683 = vmax.f32 %v663, %v665
    %v684 = vmax.f32 %v666, %v668
    %v685 = vmax.f32 %v667, %v669
    %v686 = vmax.f32 %v670, %v672
    %v687 = vmax.f32 %v671, %v673
    %v688 = vmax.f32 %v478, %v674
    %v689 = vmax.f32 %v479, %v675
    %v690 = vmax.f32 %v480, %v676
    %v691 = vmax.f32 %v481, %v677
    %v692 = vmax.f32 %v482, %v678
    %v693 = vmax.f32 %v483, %v679
    %v694 = vmax.f32 %v484, %v680
    %v695 = vmax.f32 %v485, %v681
    %v696 = vmax.f32 %v486, %v682
    %v697 = vmax.f32 %v487, %v683
    %v698 = vmax.f32 %v488, %v684
    %v699 = vmax.f32 %v489, %v685
    %v700 = vmax.f32 %v490, %v686
    %v701 = vmax.f32 %v491, %v687
    %702 = vst [vmem:[#allocation2 + $0x10] sm:$0xff] %v688
    %703 = vst [vmem:[#allocation2 + $0x18] sm:$0xff] %v689
    %704 = vst [vmem:[#allocation2 + $0x20] sm:$0xff] %v690
    %705 = vst [vmem:[#allocation2 + $0x28] sm:$0xff] %v691
    %706 = vst [vmem:[#allocation2 + $0x30] sm:$0xff] %v692
    %707 = vst [vmem:[#allocation2 + $0x38] sm:$0xff] %v693
    %708 = vst [vmem:[#allocation2 + $0x40] sm:$0xff] %v694
    %709 = vst [vmem:[#allocation2 + $0x48] sm:$0xff] %v695
    %710 = vst [vmem:[#allocation2 + $0x50] sm:$0xff] %v696
    %711 = vst [vmem:[#allocation2 + $0x58] sm:$0xff] %v697
    %712 = vst [vmem:[#allocation2 + $0x60] sm:$0xff] %v698
    %713 = vst [vmem:[#allocation2 + $0x68] sm:$0xff] %v699
    %714 = vst [vmem:[#allocation2 + $0x70] sm:$0xff] %v700
    %715 = vst [vmem:[#allocation2 + $0x78] sm:$0xff] %v701
    %s716 = scalar_lea.vmem %s0, 112
    %v717 = vld [vmem:[%s716] sm:$0xff]
    %v718 = vld [vmem:[%s716 + $0x8] sm:$0xff]
    %v719 = vld [vmem:[%s716 + $0x10] sm:$0xff]
    %v720 = vld [vmem:[%s716 + $0x18] sm:$0xff]
    %v721 = vld [vmem:[%s716 + $0x20] sm:$0xff]
    %v722 = vld [vmem:[%s716 + $0x28] sm:$0xff]
    %v723 = vld [vmem:[%s716 + $0x30] sm:$0xff]
    %v724 = vpack.c.bf16 %v718, %v717
    %v725 = vpack.c.bf16 %v720, %v719
    %v726 = vpack.c.bf16 %v722, %v721
    %v727 = vpack.c.bf16 %v723, %v723
    %v728 = vld [vmem:[#allocation3] sm:$0xff]
    %v729 = vld [vmem:[#allocation3 + $0x8] sm:$0xff]
    %v730 = vld [vmem:[#allocation3 + $0x10] sm:$0xff]
    %v731 = vld [vmem:[#allocation3 + $0x18] sm:$0xff]
    %v732 = vld [vmem:[#allocation3 + $0x20] sm:$0xff]
    %v733 = vld [vmem:[#allocation3 + $0x28] sm:$0xff]
    %v734 = vld [vmem:[#allocation3 + $0x30] sm:$0xff]
    %v735 = vld [vmem:[#allocation3 + $0x38] sm:$0xff]
    %v736 = vld [vmem:[#allocation3 + $0x40] sm:$0xff]
    %v737 = vld [vmem:[#allocation3 + $0x48] sm:$0xff]
    %v738 = vld [vmem:[#allocation3 + $0x50] sm:$0xff]
    %v739 = vld [vmem:[#allocation3 + $0x58] sm:$0xff]
    %v740 = vld [vmem:[#allocation3 + $0x60] sm:$0xff]
    %v741 = vld [vmem:[#allocation3 + $0x68] sm:$0xff]
    %v742 = vld [vmem:[#allocation3 + $0x70] sm:$0xff]
    %v743 = vld [vmem:[#allocation3 + $0x78] sm:$0xff]
    %v744 = vld [vmem:[#allocation3 + $0x80] sm:$0xff]
    %v745 = vld [vmem:[#allocation3 + $0x88] sm:$0xff]
    %v746 = vld [vmem:[#allocation3 + $0x90] sm:$0xff]
    %v747 = vld [vmem:[#allocation3 + $0x98] sm:$0xff]
    %v748 = vld [vmem:[#allocation3 + $0xa0] sm:$0xff]
    %v749 = vld [vmem:[#allocation3 + $0xa8] sm:$0xff]
    %v750 = vld [vmem:[#allocation3 + $0xb0] sm:$0xff]
    %v751 = vld [vmem:[#allocation3 + $0xb8] sm:$0xff]
    %v752 = vld [vmem:[#allocation3 + $0xc0] sm:$0xff]
    %v753 = vld [vmem:[#allocation3 + $0xc8] sm:$0xff]
    %v754 = vld [vmem:[#allocation3 + $0xd0] sm:$0xff]
    %v755 = vld [vmem:[#allocation3 + $0xd8] sm:$0xff]
    %v756 = vld [vmem:[#allocation3 + $0xe0] sm:$0xff]
    %v757 = vld [vmem:[#allocation3 + $0xe8] sm:$0xff]
    %v758 = vld [vmem:[#allocation3 + $0xf0] sm:$0xff]
    %v759 = vld [vmem:[#allocation3 + $0xf8] sm:$0xff]
    %v760 = vld [vmem:[%s2] sm:$0xf]
    %v762 = vlaneseq
    %v763 = vshrl.u32 %v762, 7
    %v764 = vsub.s32 0, %v763
    %v765 = vrot.slane %v760, %v764
    %v766 = vlaneseq
    %v767 = vshrl.u32 %v766, 7
    %v768 = vsub.s32 1, %v767
    %v769 = vrot.slane %v760, %v768
    %v770 = vlaneseq
    %v771 = vshrl.u32 %v770, 7
    %v772 = vsub.s32 2, %v771
    %v773 = vrot.slane %v760, %v772
    %v774 = vlaneseq
    %v775 = vshrl.u32 %v774, 7
    %v776 = vsub.s32 3, %v775
    %v777 = vrot.slane %v760, %v776
    %v814 = vunpack.c.l.b16 %v728
    %v815 = vunpack.c.h.b16 %v728
    %v816 = vunpack.c.l.b16 %v729
    %v817 = vunpack.c.h.b16 %v729
    %v818 = vunpack.c.l.b16 %v730
    %v819 = vunpack.c.h.b16 %v730
    %v820 = vunpack.c.l.b16 %v731
    %v821 = vunpack.c.h.b16 %v731
    %v822 = vunpack.c.l.b16 %v732
    %v823 = vunpack.c.h.b16 %v732
    %v824 = vunpack.c.l.b16 %v733
    %v825 = vunpack.c.h.b16 %v733
    %v826 = vunpack.c.l.b16 %v734
    %v827 = vunpack.c.h.b16 %v734
    %v828 = vunpack.c.l.b16 %v735
    %v829 = vunpack.c.h.b16 %v735
    %v830 = vunpack.c.l.b16 %v736
    %v831 = vunpack.c.h.b16 %v736
    %v832 = vunpack.c.l.b16 %v737
    %v833 = vunpack.c.h.b16 %v737
    %v834 = vunpack.c.l.b16 %v738
    %v835 = vunpack.c.h.b16 %v738
    %v836 = vunpack.c.l.b16 %v739
    %v837 = vunpack.c.h.b16 %v739
    %v838 = vunpack.c.l.b16 %v740
    %v839 = vunpack.c.h.b16 %v740
    %v840 = vunpack.c.l.b16 %v741
    %v841 = vunpack.c.h.b16 %v741
    %v842 = vunpack.c.l.b16 %v742
    %v843 = vunpack.c.h.b16 %v742
    %v844 = vunpack.c.l.b16 %v743
    %v845 = vunpack.c.h.b16 %v743
    %v846 = vunpack.c.l.b16 %v744
    %v847 = vunpack.c.h.b16 %v744
    %v848 = vunpack.c.l.b16 %v745
    %v849 = vunpack.c.h.b16 %v745
    %v850 = vunpack.c.l.b16 %v746
    %v851 = vunpack.c.h.b16 %v746
    %v852 = vunpack.c.l.b16 %v747
    %v853 = vunpack.c.h.b16 %v747
    %v854 = vunpack.c.l.b16 %v748
    %v855 = vunpack.c.h.b16 %v748
    %v856 = vunpack.c.l.b16 %v749
    %v857 = vunpack.c.h.b16 %v749
    %v858 = vunpack.c.l.b16 %v750
    %v859 = vunpack.c.h.b16 %v750
    %v860 = vunpack.c.l.b16 %v751
    %v861 = vunpack.c.h.b16 %v751
    %v862 = vunpack.c.l.b16 %v752
    %v863 = vunpack.c.h.b16 %v752
    %v864 = vunpack.c.l.b16 %v753
    %v865 = vunpack.c.h.b16 %v753
    %v866 = vunpack.c.l.b16 %v754
    %v867 = vunpack.c.h.b16 %v754
    %v868 = vunpack.c.l.b16 %v755
    %v869 = vunpack.c.h.b16 %v755
    %v870 = vunpack.c.l.b16 %v756
    %v871 = vunpack.c.h.b16 %v756
    %v872 = vunpack.c.l.b16 %v757
    %v873 = vunpack.c.h.b16 %v757
    %v874 = vunpack.c.l.b16 %v758
    %v875 = vunpack.c.h.b16 %v758
    %v876 = vunpack.c.l.b16 %v759
    %v877 = vunpack.c.h.b16 %v759
    %v878 = vpack.c.b16 %v818, %v814
    %v879 = vpack.c.b16 %v819, %v815
    %v880 = vpack.c.b16 %v820, %v816
    %v881 = vpack.c.b16 %v821, %v817
    %v882 = vpack.c.b16 %v826, %v822
    %v883 = vpack.c.b16 %v827, %v823
    %v884 = vpack.c.b16 %v828, %v824
    %v885 = vpack.c.b16 %v829, %v825
    %v886 = vpack.c.b16 %v834, %v830
    %v887 = vpack.c.b16 %v835, %v831
    %v888 = vpack.c.b16 %v836, %v832
    %v889 = vpack.c.b16 %v837, %v833
    %v890 = vpack.c.b16 %v842, %v838
    %v891 = vpack.c.b16 %v843, %v839
    %v892 = vpack.c.b16 %v844, %v840
    %v893 = vpack.c.b16 %v845, %v841
    %v894 = vpack.c.b16 %v850, %v846
    %v895 = vpack.c.b16 %v851, %v847
    %v896 = vpack.c.b16 %v852, %v848
    %v897 = vpack.c.b16 %v853, %v849
    %v898 = vpack.c.b16 %v858, %v854
    %v899 = vpack.c.b16 %v859, %v855
    %v900 = vpack.c.b16 %v860, %v856
    %v901 = vpack.c.b16 %v861, %v857
    %v902 = vpack.c.b16 %v866, %v862
    %v903 = vpack.c.b16 %v867, %v863
    %v904 = vpack.c.b16 %v868, %v864
    %v905 = vpack.c.b16 %v869, %v865
    %v906 = vpack.c.b16 %v874, %v870
    %v907 = vpack.c.b16 %v875, %v871
    %v908 = vpack.c.b16 %v876, %v872
    %v909 = vpack.c.b16 %v877, %v873
    %942 = vmatprep.subr.bf16.mxu0 %v879
    %943 = vmatpush1.bf16.msra.mxu0 %v878
    %944 = vmatprep.subr.bf16.mxu0 %v883
    %945 = vmatpush1.bf16.msra.mxu0 %v882
    %946 = vmatprep.subr.bf16.mxu0 %v887
    %947 = vmatpush1.bf16.msra.mxu0 %v886
    %948 = vmatprep.subr.bf16.mxu0 %v891
    %949 = vmatpush1.bf16.msra.mxu0 %v890
    %950 = vmatprep.subr.bf16.mxu0 %v895
    %951 = vmatpush1.bf16.msra.mxu0 %v894
    %952 = vmatprep.subr.bf16.mxu0 %v899
    %953 = vmatpush1.bf16.msra.mxu0 %v898
    %954 = vmatprep.subr.bf16.mxu0 %v903
    %955 = vmatpush1.bf16.msra.mxu0 %v902
    %956 = vmatprep.subr.bf16.mxu0 %v907
    %957 = vmatpush1.bf16.msra.mxu0 %v906
    %958 = vmatprep.subr.bf16.mxu0 0
    %959 = vmatpush1.bf16.msra.mxu0 0
    %960 = vmatprep.subr.bf16.mxu0 0
    %961 = vmatpush1.bf16.msra.mxu0 0
    %962 = vmatprep.subr.bf16.mxu0 0
    %963 = vmatpush1.bf16.msra.mxu0 0
    %964 = vmatprep.subr.bf16.mxu0 0
    %965 = vmatpush1.bf16.msra.mxu0 0
    %966 = vmatprep.subr.bf16.mxu0 0
    %967 = vmatpush1.bf16.msra.mxu0 0
    %968 = vmatprep.subr.bf16.mxu0 0
    %969 = vmatpush1.bf16.msra.mxu0 0
    %970 = vmatprep.subr.bf16.mxu0 0
    %971 = vmatpush1.bf16.msra.mxu0 0
    %972 = vmatprep.subr.bf16.mxu0 0
    %973 = vmatpush1.bf16.msra.mxu0 0
    %974 = vmatprep.mubr.bf16.mxu0 0
    %975 = vmatmul.mubr.bf16.gmra.mrb[0].mxu0 %v724
    %v976 = vpop.f32.mrb[0].mxu0
    %v977 = vadd.f32 %v765, %v976
    %v978 = vpop.f32.mrb[0].mxu0
    %v979 = vadd.f32 %v769, %v978
    %v980 = vpop.f32.mrb[0].mxu0
    %v981 = vadd.f32 %v765, %v980
    %v982 = vpop.f32.mrb[0].mxu0
    %v983 = vadd.f32 %v769, %v982
    %984 = vmatprep.mubr.bf16.mxu0 0
    %985 = vmatmul.mubr.bf16.gmra.mrb[0].mxu0 %v725
    %v986 = vpop.f32.mrb[0].mxu0
    %v987 = vadd.f32 %v765, %v986
    %v988 = vpop.f32.mrb[0].mxu0
    %v989 = vadd.f32 %v769, %v988
    %v990 = vpop.f32.mrb[0].mxu0
    %v991 = vadd.f32 %v765, %v990
    %v992 = vpop.f32.mrb[0].mxu0
    %v993 = vadd.f32 %v769, %v992
    %994 = vmatprep.mubr.bf16.mxu0 0
    %995 = vmatmul.mubr.bf16.gmra.mrb[0].mxu0 %v726
    %v996 = vpop.f32.mrb[0].mxu0
    %v997 = vadd.f32 %v765, %v996
    %v998 = vpop.f32.mrb[0].mxu0
    %v999 = vadd.f32 %v769, %v998
    %v1000 = vpop.f32.mrb[0].mxu0
    %v1001 = vadd.f32 %v765, %v1000
    %v1002 = vpop.f32.mrb[0].mxu0
    %v1003 = vadd.f32 %v769, %v1002
    %1004 = vmatprep.mubr.bf16.mxu0 0
    %1005 = vmatmul.mubr.bf16.gmra.mrb[0].mxu0 %v727
    %v1006 = vpop.f32.mrb[0].mxu0
    %v1007 = vadd.f32 %v765, %v1006
    %v1008 = vpop.f32.mrb[0].mxu0
    %v1009 = vadd.f32 %v769, %v1008
    %v1010 = vpop.f32.mrb[0].mxu0
    %v1011 = vpop.f32.mrb[0].mxu0
    %1012 = vdwg.mxu0
    %1013 = vmatprep.subr.bf16.mxu0 %v881
    %1014 = vmatpush1.bf16.msra.mxu0 %v880
    %1015 = vmatprep.subr.bf16.mxu0 %v885
    %1016 = vmatpush1.bf16.msra.mxu0 %v884
    %1017 = vmatprep.subr.bf16.mxu0 %v889
    %1018 = vmatpush1.bf16.msra.mxu0 %v888
    %1019 = vmatprep.subr.bf16.mxu0 %v893
    %1020 = vmatpush1.bf16.msra.mxu0 %v892
    %1021 = vmatprep.subr.bf16.mxu0 %v897
    %1022 = vmatpush1.bf16.msra.mxu0 %v896
    %1023 = vmatprep.subr.bf16.mxu0 %v901
    %1024 = vmatpush1.bf16.msra.mxu0 %v900
    %1025 = vmatprep.subr.bf16.mxu0 %v905
    %1026 = vmatpush1.bf16.msra.mxu0 %v904
    %1027 = vmatprep.subr.bf16.mxu0 %v909
    %1028 = vmatpush1.bf16.msra.mxu0 %v908
    %1029 = vmatprep.subr.bf16.mxu0 0
    %1030 = vmatpush1.bf16.msra.mxu0 0
    %1031 = vmatprep.subr.bf16.mxu0 0
    %1032 = vmatpush1.bf16.msra.mxu0 0
    %1033 = vmatprep.subr.bf16.mxu0 0
    %1034 = vmatpush1.bf16.msra.mxu0 0
    %1035 = vmatprep.subr.bf16.mxu0 0
    %1036 = vmatpush1.bf16.msra.mxu0 0
    %1037 = vmatprep.subr.bf16.mxu0 0
    %1038 = vmatpush1.bf16.msra.mxu0 0
    %1039 = vmatprep.subr.bf16.mxu0 0
    %1040 = vmatpush1.bf16.msra.mxu0 0
    %1041 = vmatprep.subr.bf16.mxu0 0
    %1042 = vmatpush1.bf16.msra.mxu0 0
    %1043 = vmatprep.subr.bf16.mxu0 0
    %1044 = vmatpush1.bf16.msra.mxu0 0
    %1045 = vmatprep.mubr.bf16.mxu0 0
    %1046 = vmatmul.mubr.bf16.gmra.mrb[0].mxu0 %v724
    %v1047 = vpop.f32.mrb[0].mxu0
    %v1048 = vadd.f32 %v773, %v1047
    %v1049 = vpop.f32.mrb[0].mxu0
    %v1050 = vadd.f32 %v777, %v1049
    %v1051 = vpop.f32.mrb[0].mxu0
    %v1052 = vadd.f32 %v773, %v1051
    %v1053 = vpop.f32.mrb[0].mxu0
    %v1054 = vadd.f32 %v777, %v1053
    %1055 = vmatprep.mubr.bf16.mxu0 0
    %1056 = vmatmul.mubr.bf16.gmra.mrb[0].mxu0 %v725
    %v1057 = vpop.f32.mrb[0].mxu0
    %v1058 = vadd.f32 %v773, %v1057
    %v1059 = vpop.f32.mrb[0].mxu0
    %v1060 = vadd.f32 %v777, %v1059
    %v1061 = vpop.f32.mrb[0].mxu0
    %v1062 = vadd.f32 %v773, %v1061
    %v1063 = vpop.f32.mrb[0].mxu0
    %v1064 = vadd.f32 %v777, %v1063
    %1065 = vmatprep.mubr.bf16.mxu0 0
    %1066 = vmatmul.mubr.bf16.gmra.mrb[0].mxu0 %v726
    %v1067 = vpop.f32.mrb[0].mxu0
    %v1068 = vadd.f32 %v773, %v1067
    %v1069 = vpop.f32.mrb[0].mxu0
    %v1070 = vadd.f32 %v777, %v1069
    %v1071 = vpop.f32.mrb[0].mxu0
    %v1072 = vadd.f32 %v773, %v1071
    %v1073 = vpop.f32.mrb[0].mxu0
    %v1074 = vadd.f32 %v777, %v1073
    %1075 = vmatprep.mubr.bf16.mxu0 0
    %1076 = vmatmul.mubr.bf16.gmra.mrb[0].mxu0 %v727
    %v1077 = vpop.f32.mrb[0].mxu0
    %v1078 = vadd.f32 %v773, %v1077
    %v1079 = vpop.f32.mrb[0].mxu0
    %v1080 = vadd.f32 %v777, %v1079
    %v1081 = vpop.f32.mrb[0].mxu0
    %v1082 = vpop.f32.mrb[0].mxu0
    %1083 = vdwg.mxu0
    %v1084 = vmax.f32 %v977, 0.0
    %v1085 = vmax.f32 %v979, 0.0
    %v1086 = vmax.f32 %v1048, 0.0
    %v1087 = vmax.f32 %v1050, 0.0
    %v1088 = vmax.f32 %v981, 0.0
    %v1089 = vmax.f32 %v983, 0.0
    %v1090 = vmax.f32 %v1052, 0.0
    %v1091 = vmax.f32 %v1054, 0.0
    %v1092 = vmax.f32 %v987, 0.0
    %v1093 = vmax.f32 %v989, 0.0
    %v1094 = vmax.f32 %v1058, 0.0
    %v1095 = vmax.f32 %v1060, 0.0
    %v1096 = vmax.f32 %v991, 0.0
    %v1097 = vmax.f32 %v993, 0.0
    %v1098 = vmax.f32 %v1062, 0.0
    %v1099 = vmax.f32 %v1064, 0.0
    %v1100 = vmax.f32 %v997, 0.0
    %v1101 = vmax.f32 %v999, 0.0
    %v1102 = vmax.f32 %v1068, 0.0
    %v1103 = vmax.f32 %v1070, 0.0
    %v1104 = vmax.f32 %v1001, 0.0
    %v1105 = vmax.f32 %v1003, 0.0
    %v1106 = vmax.f32 %v1072, 0.0
    %v1107 = vmax.f32 %v1074, 0.0
    %v1108 = vmax.f32 %v1007, 0.0
    %v1109 = vmax.f32 %v1009, 0.0
    %v1110 = vmax.f32 %v1078, 0.0
    %v1111 = vmax.f32 %v1080, 0.0
    %v1112 = vmax.f32 %v1084, %v1086
    %v1113 = vmax.f32 %v1085, %v1087
    %v1114 = vmax.f32 %v1088, %v1090
    %v1115 = vmax.f32 %v1089, %v1091
    %v1116 = vmax.f32 %v1092, %v1094
    %v1117 = vmax.f32 %v1093, %v1095
    %v1118 = vmax.f32 %v1096, %v1098
    %v1119 = vmax.f32 %v1097, %v1099
    %v1120 = vmax.f32 %v1100, %v1102
    %v1121 = vmax.f32 %v1101, %v1103
    %v1122 = vmax.f32 %v1104, %v1106
    %v1123 = vmax.f32 %v1105, %v1107
    %v1124 = vmax.f32 %v1108, %v1110
    %v1125 = vmax.f32 %v1109, %v1111
    %s1126 = scalar_lea.vmem %s0, 168
    %v1127 = vld [vmem:[%s1126] sm:$0xff]
    %v1128 = vld [vmem:[%s1126 + $0x8] sm:$0xff]
    %v1129 = vld [vmem:[%s1126 + $0x10] sm:$0xff]
    %v1130 = vld [vmem:[%s1126 + $0x18] sm:$0xff]
    %v1131 = vld [vmem:[%s1126 + $0x20] sm:$0xff]
    %v1132 = vld [vmem:[%s1126 + $0x28] sm:$0xff]
    %v1133 = vld [vmem:[%s1126 + $0x30] sm:$0xff]
    %v1134 = vpack.c.bf16 %v1128, %v1127
    %v1135 = vpack.c.bf16 %v1130, %v1129
    %v1136 = vpack.c.bf16 %v1132, %v1131
    %v1137 = vpack.c.bf16 %v1133, %v1133
    %1138 = vmatprep.subr.bf16.mxu0 %v879
    %1139 = vmatpush1.bf16.msra.mxu0 %v878
    %1140 = vmatprep.subr.bf16.mxu0 %v883
    %1141 = vmatpush1.bf16.msra.mxu0 %v882
    %1142 = vmatprep.subr.bf16.mxu0 %v887
    %1143 = vmatpush1.bf16.msra.mxu0 %v886
    %1144 = vmatprep.subr.bf16.mxu0 %v891
    %1145 = vmatpush1.bf16.msra.mxu0 %v890
    %1146 = vmatprep.subr.bf16.mxu0 %v895
    %1147 = vmatpush1.bf16.msra.mxu0 %v894
    %1148 = vmatprep.subr.bf16.mxu0 %v899
    %1149 = vmatpush1.bf16.msra.mxu0 %v898
    %1150 = vmatprep.subr.bf16.mxu0 %v903
    %1151 = vmatpush1.bf16.msra.mxu0 %v902
    %1152 = vmatprep.subr.bf16.mxu0 %v907
    %1153 = vmatpush1.bf16.msra.mxu0 %v906
    %1154 = vmatprep.subr.bf16.mxu0 0
    %1155 = vmatpush1.bf16.msra.mxu0 0
    %1156 = vmatprep.subr.bf16.mxu0 0
    %1157 = vmatpush1.bf16.msra.mxu0 0
    %1158 = vmatprep.subr.bf16.mxu0 0
    %1159 = vmatpush1.bf16.msra.mxu0 0
    %1160 = vmatprep.subr.bf16.mxu0 0
    %1161 = vmatpush1.bf16.msra.mxu0 0
    %1162 = vmatprep.subr.bf16.mxu0 0
    %1163 = vmatpush1.bf16.msra.mxu0 0
    %1164 = vmatprep.subr.bf16.mxu0 0
    %1165 = vmatpush1.bf16.msra.mxu0 0
    %1166 = vmatprep.subr.bf16.mxu0 0
    %1167 = vmatpush1.bf16.msra.mxu0 0
    %1168 = vmatprep.subr.bf16.mxu0 0
    %1169 = vmatpush1.bf16.msra.mxu0 0
    %1170 = vmatprep.mubr.bf16.mxu0 0
    %1171 = vmatmul.mubr.bf16.gmra.mrb[0].mxu0 %v1134
    %v1172 = vpop.f32.mrb[0].mxu0
    %v1173 = vadd.f32 %v765, %v1172
    %v1174 = vpop.f32.mrb[0].mxu0
    %v1175 = vadd.f32 %v769, %v1174
    %v1176 = vpop.f32.mrb[0].mxu0
    %v1177 = vadd.f32 %v765, %v1176
    %v1178 = vpop.f32.mrb[0].mxu0
    %v1179 = vadd.f32 %v769, %v1178
    %1180 = vmatprep.mubr.bf16.mxu0 0
    %1181 = vmatmul.mubr.bf16.gmra.mrb[0].mxu0 %v1135
    %v1182 = vpop.f32.mrb[0].mxu0
    %v1183 = vadd.f32 %v765, %v1182
    %v1184 = vpop.f32.mrb[0].mxu0
    %v1185 = vadd.f32 %v769, %v1184
    %v1186 = vpop.f32.mrb[0].mxu0
    %v1187 = vadd.f32 %v765, %v1186
    %v1188 = vpop.f32.mrb[0].mxu0
    %v1189 = vadd.f32 %v769, %v1188
    %1190 = vmatprep.mubr.bf16.mxu0 0
    %1191 = vmatmul.mubr.bf16.gmra.mrb[0].mxu0 %v1136
    %v1192 = vpop.f32.mrb[0].mxu0
    %v1193 = vadd.f32 %v765, %v1192
    %v1194 = vpop.f32.mrb[0].mxu0
    %v1195 = vadd.f32 %v769, %v1194
    %v1196 = vpop.f32.mrb[0].mxu0
    %v1197 = vadd.f32 %v765, %v1196
    %v1198 = vpop.f32.mrb[0].mxu0
    %v1199 = vadd.f32 %v769, %v1198
    %1200 = vmatprep.mubr.bf16.mxu0 0
    %1201 = vmatmul.mubr.bf16.gmra.mrb[0].mxu0 %v1137
    %v1202 = vpop.f32.mrb[0].mxu0
    %v1203 = vadd.f32 %v765, %v1202
    %v1204 = vpop.f32.mrb[0].mxu0
    %v1205 = vadd.f32 %v769, %v1204
    %v1206 = vpop.f32.mrb[0].mxu0
    %v1207 = vpop.f32.mrb[0].mxu0
    %1208 = vdwg.mxu0
    %1209 = vmatprep.subr.bf16.mxu0 %v881
    %1210 = vmatpush1.bf16.msra.mxu0 %v880
    %1211 = vmatprep.subr.bf16.mxu0 %v885
    %1212 = vmatpush1.bf16.msra.mxu0 %v884
    %1213 = vmatprep.subr.bf16.mxu0 %v889
    %1214 = vmatpush1.bf16.msra.mxu0 %v888
    %1215 = vmatprep.subr.bf16.mxu0 %v893
    %1216 = vmatpush1.bf16.msra.mxu0 %v892
    %1217 = vmatprep.subr.bf16.mxu0 %v897
    %1218 = vmatpush1.bf16.msra.mxu0 %v896
    %1219 = vmatprep.subr.bf16.mxu0 %v901
    %1220 = vmatpush1.bf16.msra.mxu0 %v900
    %1221 = vmatprep.subr.bf16.mxu0 %v905
    %1222 = vmatpush1.bf16.msra.mxu0 %v904
    %1223 = vmatprep.subr.bf16.mxu0 %v909
    %1224 = vmatpush1.bf16.msra.mxu0 %v908
    %1225 = vmatprep.subr.bf16.mxu0 0
    %1226 = vmatpush1.bf16.msra.mxu0 0
    %1227 = vmatprep.subr.bf16.mxu0 0
    %1228 = vmatpush1.bf16.msra.mxu0 0
    %1229 = vmatprep.subr.bf16.mxu0 0
    %1230 = vmatpush1.bf16.msra.mxu0 0
    %1231 = vmatprep.subr.bf16.mxu0 0
    %1232 = vmatpush1.bf16.msra.mxu0 0
    %1233 = vmatprep.subr.bf16.mxu0 0
    %1234 = vmatpush1.bf16.msra.mxu0 0
    %1235 = vmatprep.subr.bf16.mxu0 0
    %1236 = vmatpush1.bf16.msra.mxu0 0
    %1237 = vmatprep.subr.bf16.mxu0 0
    %1238 = vmatpush1.bf16.msra.mxu0 0
    %1239 = vmatprep.subr.bf16.mxu0 0
    %1240 = vmatpush1.bf16.msra.mxu0 0
    %1241 = vmatprep.mubr.bf16.mxu0 0
    %1242 = vmatmul.mubr.bf16.gmra.mrb[0].mxu0 %v1134
    %v1243 = vpop.f32.mrb[0].mxu0
    %v1244 = vadd.f32 %v773, %v1243
    %v1245 = vpop.f32.mrb[0].mxu0
    %v1246 = vadd.f32 %v777, %v1245
    %v1247 = vpop.f32.mrb[0].mxu0
    %v1248 = vadd.f32 %v773, %v1247
    %v1249 = vpop.f32.mrb[0].mxu0
    %v1250 = vadd.f32 %v777, %v1249
    %1251 = vmatprep.mubr.bf16.mxu0 0
    %1252 = vmatmul.mubr.bf16.gmra.mrb[0].mxu0 %v1135
    %v1253 = vpop.f32.mrb[0].mxu0
    %v1254 = vadd.f32 %v773, %v1253
    %v1255 = vpop.f32.mrb[0].mxu0
    %v1256 = vadd.f32 %v777, %v1255
    %v1257 = vpop.f32.mrb[0].mxu0
    %v1258 = vadd.f32 %v773, %v1257
    %v1259 = vpop.f32.mrb[0].mxu0
    %v1260 = vadd.f32 %v777, %v1259
    %1261 = vmatprep.mubr.bf16.mxu0 0
    %1262 = vmatmul.mubr.bf16.gmra.mrb[0].mxu0 %v1136
    %v1263 = vpop.f32.mrb[0].mxu0
    %v1264 = vadd.f32 %v773, %v1263
    %v1265 = vpop.f32.mrb[0].mxu0
    %v1266 = vadd.f32 %v777, %v1265
    %v1267 = vpop.f32.mrb[0].mxu0
    %v1268 = vadd.f32 %v773, %v1267
    %v1269 = vpop.f32.mrb[0].mxu0
    %v1270 = vadd.f32 %v777, %v1269
    %1271 = vmatprep.mubr.bf16.mxu0 0
    %1272 = vmatmul.mubr.bf16.gmra.mrb[0].mxu0 %v1137
    %v1273 = vpop.f32.mrb[0].mxu0
    %v1274 = vadd.f32 %v773, %v1273
    %v1275 = vpop.f32.mrb[0].mxu0
    %v1276 = vadd.f32 %v777, %v1275
    %v1277 = vpop.f32.mrb[0].mxu0
    %v1278 = vpop.f32.mrb[0].mxu0
    %1279 = vdwg.mxu0
    %v1280 = vmax.f32 %v1173, 0.0
    %v1281 = vmax.f32 %v1175, 0.0
    %v1282 = vmax.f32 %v1244, 0.0
    %v1283 = vmax.f32 %v1246, 0.0
    %v1284 = vmax.f32 %v1177, 0.0
    %v1285 = vmax.f32 %v1179, 0.0
    %v1286 = vmax.f32 %v1248, 0.0
    %v1287 = vmax.f32 %v1250, 0.0
    %v1288 = vmax.f32 %v1183, 0.0
    %v1289 = vmax.f32 %v1185, 0.0
    %v1290 = vmax.f32 %v1254, 0.0
    %v1291 = vmax.f32 %v1256, 0.0
    %v1292 = vmax.f32 %v1187, 0.0
    %v1293 = vmax.f32 %v1189, 0.0
    %v1294 = vmax.f32 %v1258, 0.0
    %v1295 = vmax.f32 %v1260, 0.0
    %v1296 = vmax.f32 %v1193, 0.0
    %v1297 = vmax.f32 %v1195, 0.0
    %v1298 = vmax.f32 %v1264, 0.0
    %v1299 = vmax.f32 %v1266, 0.0
    %v1300 = vmax.f32 %v1197, 0.0
    %v1301 = vmax.f32 %v1199, 0.0
    %v1302 = vmax.f32 %v1268, 0.0
    %v1303 = vmax.f32 %v1270, 0.0
    %v1304 = vmax.f32 %v1203, 0.0
    %v1305 = vmax.f32 %v1205, 0.0
    %v1306 = vmax.f32 %v1274, 0.0
    %v1307 = vmax.f32 %v1276, 0.0
    %v1308 = vmax.f32 %v1280, %v1282
    %v1309 = vmax.f32 %v1281, %v1283
    %v1310 = vmax.f32 %v1284, %v1286
    %v1311 = vmax.f32 %v1285, %v1287
    %v1312 = vmax.f32 %v1288, %v1290
    %v1313 = vmax.f32 %v1289, %v1291
    %v1314 = vmax.f32 %v1292, %v1294
    %v1315 = vmax.f32 %v1293, %v1295
    %v1316 = vmax.f32 %v1296, %v1298
    %v1317 = vmax.f32 %v1297, %v1299
    %v1318 = vmax.f32 %v1300, %v1302
    %v1319 = vmax.f32 %v1301, %v1303
    %v1320 = vmax.f32 %v1304, %v1306
    %v1321 = vmax.f32 %v1305, %v1307
    %v1322 = vmax.f32 %v1112, %v1308
    %v1323 = vmax.f32 %v1113, %v1309
    %v1324 = vmax.f32 %v1114, %v1310
    %v1325 = vmax.f32 %v1115, %v1311
    %v1326 = vmax.f32 %v1116, %v1312
    %v1327 = vmax.f32 %v1117, %v1313
    %v1328 = vmax.f32 %v1118, %v1314
    %v1329 = vmax.f32 %v1119, %v1315
    %v1330 = vmax.f32 %v1120, %v1316
    %v1331 = vmax.f32 %v1121, %v1317
    %v1332 = vmax.f32 %v1122, %v1318
    %v1333 = vmax.f32 %v1123, %v1319
    %v1334 = vmax.f32 %v1124, %v1320
    %v1335 = vmax.f32 %v1125, %v1321
    %1336 = vst [vmem:[%s78 + $0x10] sm:$0xff] %v1322
    %1337 = vst [vmem:[%s78 + $0x18] sm:$0xff] %v1323
    %1338 = vst [vmem:[%s78 + $0x20] sm:$0xff] %v1324
    %1339 = vst [vmem:[%s78 + $0x28] sm:$0xff] %v1325
    %1340 = vst [vmem:[%s78 + $0x30] sm:$0xff] %v1326
    %1341 = vst [vmem:[%s78 + $0x38] sm:$0xff] %v1327
    %1342 = vst [vmem:[%s78 + $0x40] sm:$0xff] %v1328
    %1343 = vst [vmem:[%s78 + $0x48] sm:$0xff] %v1329
    %1344 = vst [vmem:[%s78 + $0x50] sm:$0xff] %v1330
    %1345 = vst [vmem:[%s78 + $0x58] sm:$0xff] %v1331
    %1346 = vst [vmem:[%s78 + $0x60] sm:$0xff] %v1332
    %1347 = vst [vmem:[%s78 + $0x68] sm:$0xff] %v1333
    %1348 = vst [vmem:[%s78 + $0x70] sm:$0xff] %v1334
    %1349 = vst [vmem:[%s78 + $0x78] sm:$0xff] %v1335
    %v1350 = vld [vmem:[%s78] sm:$0xff]
    %v1351 = vld [vmem:[%s78 + $0x8] sm:$0xff]
    %v1352 = vld [vmem:[%s78 + $0x10] sm:$0xff]
    %v1353 = vld [vmem:[%s78 + $0x18] sm:$0xff]
    %v1354 = vld [vmem:[%s78 + $0x20] sm:$0xff]
    %v1355 = vld [vmem:[%s78 + $0x28] sm:$0xff]
    %v1356 = vld [vmem:[%s78 + $0x30] sm:$0xff]
    %v1357 = vld [vmem:[%s78 + $0x38] sm:$0xff]
    %v1358 = vld [vmem:[%s78 + $0x40] sm:$0xff]
    %v1359 = vld [vmem:[%s78 + $0x48] sm:$0xff]
    %v1360 = vld [vmem:[%s78 + $0x50] sm:$0xff]
    %v1361 = vld [vmem:[%s78 + $0x58] sm:$0xff]
    %v1362 = vld [vmem:[%s78 + $0x60] sm:$0xff]
    %v1363 = vld [vmem:[%s78 + $0x68] sm:$0xff]
    %v1364 = vpack.c.bf16 %v1352, %v1350
    %v1365 = vpack.c.bf16 %v1353, %v1351
    %v1366 = vpack.c.bf16 %v1356, %v1354
    %v1367 = vpack.c.bf16 %v1357, %v1355
    %v1368 = vpack.c.bf16 %v1360, %v1358
    %v1369 = vpack.c.bf16 %v1361, %v1359
    %v1370 = vpack.c.bf16 %v1362, %v1362
    %v1371 = vpack.c.bf16 %v1363, %v1363
    %v1372 = vld [vmem:[%s3] sm:$0xff]
    %v1373 = vld [vmem:[%s3 + $0x8] sm:$0xff]
    %v1374 = vld [vmem:[%s3 + $0x10] sm:$0xff]
    %v1375 = vld [vmem:[%s3 + $0x18] sm:$0xff]
    %v1376 = vld [vmem:[%s3 + $0x20] sm:$0xff]
    %v1377 = vld [vmem:[%s3 + $0x28] sm:$0xff]
    %v1378 = vld [vmem:[%s3 + $0x30] sm:$0xff]
    %v1379 = vld [vmem:[%s3 + $0x38] sm:$0xff]
    %v1380 = vld [vmem:[%s3 + $0x40] sm:$0xff]
    %v1381 = vld [vmem:[%s3 + $0x48] sm:$0xff]
    %v1382 = vld [vmem:[%s3 + $0x50] sm:$0xff]
    %v1383 = vld [vmem:[%s3 + $0x58] sm:$0xff]
    %v1384 = vld [vmem:[%s3 + $0x60] sm:$0xff]
    %v1385 = vld [vmem:[%s3 + $0x68] sm:$0xff]
    %v1386 = vld [vmem:[%s3 + $0x70] sm:$0xff]
    %v1387 = vld [vmem:[%s3 + $0x78] sm:$0xff]
    %v1388 = vld [vmem:[%s3 + $0x80] sm:$0xff]
    %v1389 = vld [vmem:[%s3 + $0x88] sm:$0xff]
    %v1390 = vld [vmem:[%s3 + $0x90] sm:$0xff]
    %v1391 = vld [vmem:[%s3 + $0x98] sm:$0xff]
    %v1392 = vld [vmem:[%s3 + $0xa0] sm:$0xff]
    %v1393 = vld [vmem:[%s3 + $0xa8] sm:$0xff]
    %v1394 = vld [vmem:[%s3 + $0xb0] sm:$0xff]
    %v1395 = vld [vmem:[%s3 + $0xb8] sm:$0xff]
    %v1396 = vld [vmem:[%s3 + $0xc0] sm:$0xff]
    %v1397 = vld [vmem:[%s3 + $0xc8] sm:$0xff]
    %v1398 = vld [vmem:[%s3 + $0xd0] sm:$0xff]
    %v1399 = vld [vmem:[%s3 + $0xd8] sm:$0xff]
    %v1400 = vld [vmem:[%s3 + $0xe0] sm:$0xff]
    %v1401 = vld [vmem:[%s3 + $0xe8] sm:$0xff]
    %v1402 = vld [vmem:[%s3 + $0xf0] sm:$0xff]
    %v1403 = vld [vmem:[%s3 + $0xf8] sm:$0xff]
    %v1404 = vld [vmem:[%s3 + $0x100] sm:$0xff]
    %v1405 = vld [vmem:[%s3 + $0x108] sm:$0xff]
    %v1406 = vld [vmem:[%s3 + $0x110] sm:$0xff]
    %v1407 = vld [vmem:[%s3 + $0x118] sm:$0xff]
    %v1408 = vld [vmem:[%s3 + $0x120] sm:$0xff]
    %v1409 = vld [vmem:[%s3 + $0x128] sm:$0xff]
    %v1410 = vld [vmem:[%s3 + $0x130] sm:$0xff]
    %v1411 = vld [vmem:[%s3 + $0x138] sm:$0xff]
    %v1412 = vld [vmem:[%s3 + $0x140] sm:$0xff]
    %v1413 = vld [vmem:[%s3 + $0x148] sm:$0xff]
    %v1414 = vld [vmem:[%s3 + $0x150] sm:$0xff]
    %v1415 = vld [vmem:[%s3 + $0x158] sm:$0xff]
    %v1416 = vld [vmem:[%s3 + $0x160] sm:$0xff]
    %v1417 = vld [vmem:[%s3 + $0x168] sm:$0xff]
    %v1418 = vld [vmem:[%s3 + $0x170] sm:$0xff]
    %v1419 = vld [vmem:[%s3 + $0x178] sm:$0xff]
    %v1420 = vld [vmem:[%s3 + $0x180] sm:$0xff]
    %v1421 = vld [vmem:[%s3 + $0x188] sm:$0xff]
    %v1422 = vld [vmem:[%s3 + $0x190] sm:$0xff]
    %v1423 = vld [vmem:[%s3 + $0x198] sm:$0xff]
    %v1424 = vld [vmem:[%s3 + $0x1a0] sm:$0xff]
    %v1425 = vld [vmem:[%s3 + $0x1a8] sm:$0xff]
    %v1426 = vld [vmem:[%s3 + $0x1b0] sm:$0xff]
    %v1427 = vld [vmem:[%s3 + $0x1b8] sm:$0xff]
    %v1428 = vld [vmem:[%s3 + $0x1c0] sm:$0xff]
    %v1429 = vld [vmem:[%s3 + $0x1c8] sm:$0xff]
    %v1430 = vld [vmem:[%s3 + $0x1d0] sm:$0xff]
    %v1431 = vld [vmem:[%s3 + $0x1d8] sm:$0xff]
    %v1432 = vld [vmem:[%s3 + $0x1e0] sm:$0xff]
    %v1433 = vld [vmem:[%s3 + $0x1e8] sm:$0xff]
    %v1434 = vld [vmem:[%s3 + $0x1f0] sm:$0xff]
    %v1435 = vld [vmem:[%s3 + $0x1f8] sm:$0xff]
    %v1436 = vld [vmem:[#allocation2 + $0x10] sm:$0xff]
    %v1437 = vld [vmem:[#allocation2 + $0x18] sm:$0xff]
    %v1438 = vld [vmem:[#allocation2 + $0x20] sm:$0xff]
    %v1439 = vld [vmem:[#allocation2 + $0x28] sm:$0xff]
    %v1440 = vld [vmem:[#allocation2 + $0x30] sm:$0xff]
    %v1441 = vld [vmem:[#allocation2 + $0x38] sm:$0xff]
    %v1442 = vld [vmem:[#allocation2 + $0x40] sm:$0xff]
    %v1443 = vld [vmem:[#allocation2 + $0x48] sm:$0xff]
    %v1444 = vld [vmem:[#allocation2 + $0x50] sm:$0xff]
    %v1445 = vld [vmem:[#allocation2 + $0x58] sm:$0xff]
    %v1446 = vld [vmem:[#allocation2 + $0x60] sm:$0xff]
    %v1447 = vld [vmem:[#allocation2 + $0x68] sm:$0xff]
    %v1448 = vld [vmem:[#allocation2 + $0x70] sm:$0xff]
    %v1449 = vld [vmem:[#allocation2 + $0x78] sm:$0xff]
    %v1450 = vpack.c.bf16 %v1438, %v1436
    %v1451 = vpack.c.bf16 %v1439, %v1437
    %v1452 = vpack.c.bf16 %v1442, %v1440
    %v1453 = vpack.c.bf16 %v1443, %v1441
    %v1454 = vpack.c.bf16 %v1446, %v1444
    %v1455 = vpack.c.bf16 %v1447, %v1445
    %v1456 = vpack.c.bf16 %v1448, %v1448
    %v1457 = vpack.c.bf16 %v1449, %v1449
    %s1458 = scalar_lea.vmem %s3, 512
    %v1459 = vld [vmem:[%s1458] sm:$0xff]
    %v1460 = vld [vmem:[%s1458 + $0x8] sm:$0xff]
    %v1461 = vld [vmem:[%s1458 + $0x10] sm:$0xff]
    %v1462 = vld [vmem:[%s1458 + $0x18] sm:$0xff]
    %v1463 = vld [vmem:[%s1458 + $0x20] sm:$0xff]
    %v1464 = vld [vmem:[%s1458 + $0x28] sm:$0xff]
    %v1465 = vld [vmem:[%s1458 + $0x30] sm:$0xff]
    %v1466 = vld [vmem:[%s1458 + $0x38] sm:$0xff]
    %v1467 = vld [vmem:[%s1458 + $0x40] sm:$0xff]
    %v1468 = vld [vmem:[%s1458 + $0x48] sm:$0xff]
    %v1469 = vld [vmem:[%s1458 + $0x50] sm:$0xff]
    %v1470 = vld [vmem:[%s1458 + $0x58] sm:$0xff]
    %v1471 = vld [vmem:[%s1458 + $0x60] sm:$0xff]
    %v1472 = vld [vmem:[%s1458 + $0x68] sm:$0xff]
    %v1473 = vld [vmem:[%s1458 + $0x70] sm:$0xff]
    %v1474 = vld [vmem:[%s1458 + $0x78] sm:$0xff]
    %v1475 = vld [vmem:[%s1458 + $0x80] sm:$0xff]
    %v1476 = vld [vmem:[%s1458 + $0x88] sm:$0xff]
    %v1477 = vld [vmem:[%s1458 + $0x90] sm:$0xff]
    %v1478 = vld [vmem:[%s1458 + $0x98] sm:$0xff]
    %v1479 = vld [vmem:[%s1458 + $0xa0] sm:$0xff]
    %v1480 = vld [vmem:[%s1458 + $0xa8] sm:$0xff]
    %v1481 = vld [vmem:[%s1458 + $0xb0] sm:$0xff]
    %v1482 = vld [vmem:[%s1458 + $0xb8] sm:$0xff]
    %v1483 = vld [vmem:[%s1458 + $0xc0] sm:$0xff]
    %v1484 = vld [vmem:[%s1458 + $0xc8] sm:$0xff]
    %v1485 = vld [vmem:[%s1458 + $0xd0] sm:$0xff]
    %v1486 = vld [vmem:[%s1458 + $0xd8] sm:$0xff]
    %v1487 = vld [vmem:[%s1458 + $0xe0] sm:$0xff]
    %v1488 = vld [vmem:[%s1458 + $0xe8] sm:$0xff]
    %v1489 = vld [vmem:[%s1458 + $0xf0] sm:$0xff]
    %v1490 = vld [vmem:[%s1458 + $0xf8] sm:$0xff]
    %v1491 = vld [vmem:[%s1458 + $0x100] sm:$0xff]
    %v1492 = vld [vmem:[%s1458 + $0x108] sm:$0xff]
    %v1493 = vld [vmem:[%s1458 + $0x110] sm:$0xff]
    %v1494 = vld [vmem:[%s1458 + $0x118] sm:$0xff]
    %v1495 = vld [vmem:[%s1458 + $0x120] sm:$0xff]
    %v1496 = vld [vmem:[%s1458 + $0x128] sm:$0xff]
    %v1497 = vld [vmem:[%s1458 + $0x130] sm:$0xff]
    %v1498 = vld [vmem:[%s1458 + $0x138] sm:$0xff]
    %v1499 = vld [vmem:[%s1458 + $0x140] sm:$0xff]
    %v1500 = vld [vmem:[%s1458 + $0x148] sm:$0xff]
    %v1501 = vld [vmem:[%s1458 + $0x150] sm:$0xff]
    %v1502 = vld [vmem:[%s1458 + $0x158] sm:$0xff]
    %v1503 = vld [vmem:[%s1458 + $0x160] sm:$0xff]
    %v1504 = vld [vmem:[%s1458 + $0x168] sm:$0xff]
    %v1505 = vld [vmem:[%s1458 + $0x170] sm:$0xff]
    %v1506 = vld [vmem:[%s1458 + $0x178] sm:$0xff]
    %v1507 = vld [vmem:[%s1458 + $0x180] sm:$0xff]
    %v1508 = vld [vmem:[%s1458 + $0x188] sm:$0xff]
    %v1509 = vld [vmem:[%s1458 + $0x190] sm:$0xff]
    %v1510 = vld [vmem:[%s1458 + $0x198] sm:$0xff]
    %v1511 = vld [vmem:[%s1458 + $0x1a0] sm:$0xff]
    %v1512 = vld [vmem:[%s1458 + $0x1a8] sm:$0xff]
    %v1513 = vld [vmem:[%s1458 + $0x1b0] sm:$0xff]
    %v1514 = vld [vmem:[%s1458 + $0x1b8] sm:$0xff]
    %v1515 = vld [vmem:[%s1458 + $0x1c0] sm:$0xff]
    %v1516 = vld [vmem:[%s1458 + $0x1c8] sm:$0xff]
    %v1517 = vld [vmem:[%s1458 + $0x1d0] sm:$0xff]
    %v1518 = vld [vmem:[%s1458 + $0x1d8] sm:$0xff]
    %v1519 = vld [vmem:[%s1458 + $0x1e0] sm:$0xff]
    %v1520 = vld [vmem:[%s1458 + $0x1e8] sm:$0xff]
    %v1521 = vld [vmem:[%s1458 + $0x1f0] sm:$0xff]
    %v1522 = vld [vmem:[%s1458 + $0x1f8] sm:$0xff]
    %v1587 = vunpack.c.l.b16 %v1459
    %v1588 = vunpack.c.h.b16 %v1459
    %v1589 = vunpack.c.l.b16 %v1460
    %v1590 = vunpack.c.h.b16 %v1460
    %v1591 = vunpack.c.l.b16 %v1461
    %v1592 = vunpack.c.h.b16 %v1461
    %v1593 = vunpack.c.l.b16 %v1462
    %v1594 = vunpack.c.h.b16 %v1462
    %v1595 = vunpack.c.l.b16 %v1463
    %v1596 = vunpack.c.h.b16 %v1463
    %v1597 = vunpack.c.l.b16 %v1464
    %v1598 = vunpack.c.h.b16 %v1464
    %v1599 = vunpack.c.l.b16 %v1465
    %v1600 = vunpack.c.h.b16 %v1465
    %v1601 = vunpack.c.l.b16 %v1466
    %v1602 = vunpack.c.h.b16 %v1466
    %v1603 = vunpack.c.l.b16 %v1467
    %v1604 = vunpack.c.h.b16 %v1467
    %v1605 = vunpack.c.l.b16 %v1468
    %v1606 = vunpack.c.h.b16 %v1468
    %v1607 = vunpack.c.l.b16 %v1469
    %v1608 = vunpack.c.h.b16 %v1469
    %v1609 = vunpack.c.l.b16 %v1470
    %v1610 = vunpack.c.h.b16 %v1470
    %v1611 = vunpack.c.l.b16 %v1471
    %v1612 = vunpack.c.h.b16 %v1471
    %v1613 = vunpack.c.l.b16 %v1472
    %v1614 = vunpack.c.h.b16 %v1472
    %v1615 = vunpack.c.l.b16 %v1473
    %v1616 = vunpack.c.h.b16 %v1473
    %v1617 = vunpack.c.l.b16 %v1474
    %v1618 = vunpack.c.h.b16 %v1474
    %v1619 = vunpack.c.l.b16 %v1475
    %v1620 = vunpack.c.h.b16 %v1475
    %v1621 = vunpack.c.l.b16 %v1476
    %v1622 = vunpack.c.h.b16 %v1476
    %v1623 = vunpack.c.l.b16 %v1477
    %v1624 = vunpack.c.h.b16 %v1477
    %v1625 = vunpack.c.l.b16 %v1478
    %v1626 = vunpack.c.h.b16 %v1478
    %v1627 = vunpack.c.l.b16 %v1479
    %v1628 = vunpack.c.h.b16 %v1479
    %v1629 = vunpack.c.l.b16 %v1480
    %v1630 = vunpack.c.h.b16 %v1480
    %v1631 = vunpack.c.l.b16 %v1481
    %v1632 = vunpack.c.h.b16 %v1481
    %v1633 = vunpack.c.l.b16 %v1482
    %v1634 = vunpack.c.h.b16 %v1482
    %v1635 = vunpack.c.l.b16 %v1483
    %v1636 = vunpack.c.h.b16 %v1483
    %v1637 = vunpack.c.l.b16 %v1484
    %v1638 = vunpack.c.h.b16 %v1484
    %v1639 = vunpack.c.l.b16 %v1485
    %v1640 = vunpack.c.h.b16 %v1485
    %v1641 = vunpack.c.l.b16 %v1486
    %v1642 = vunpack.c.h.b16 %v1486
    %v1643 = vunpack.c.l.b16 %v1487
    %v1644 = vunpack.c.h.b16 %v1487
    %v1645 = vunpack.c.l.b16 %v1488
    %v1646 = vunpack.c.h.b16 %v1488
    %v1647 = vunpack.c.l.b16 %v1489
    %v1648 = vunpack.c.h.b16 %v1489
    %v1649 = vunpack.c.l.b16 %v1490
    %v1650 = vunpack.c.h.b16 %v1490
    %v1651 = vunpack.c.l.b16 %v1491
    %v1652 = vunpack.c.h.b16 %v1491
    %v1653 = vunpack.c.l.b16 %v1492
    %v1654 = vunpack.c.h.b16 %v1492
    %v1655 = vunpack.c.l.b16 %v1493
    %v1656 = vunpack.c.h.b16 %v1493
    %v1657 = vunpack.c.l.b16 %v1494
    %v1658 = vunpack.c.h.b16 %v1494
    %v1659 = vunpack.c.l.b16 %v1495
    %v1660 = vunpack.c.h.b16 %v1495
    %v1661 = vunpack.c.l.b16 %v1496
    %v1662 = vunpack.c.h.b16 %v1496
    %v1663 = vunpack.c.l.b16 %v1497
    %v1664 = vunpack.c.h.b16 %v1497
    %v1665 = vunpack.c.l.b16 %v1498
    %v1666 = vunpack.c.h.b16 %v1498
    %v1667 = vunpack.c.l.b16 %v1499
    %v1668 = vunpack.c.h.b16 %v1499
    %v1669 = vunpack.c.l.b16 %v1500
    %v1670 = vunpack.c.h.b16 %v1500
    %v1671 = vunpack.c.l.b16 %v1501
    %v1672 = vunpack.c.h.b16 %v1501
    %v1673 = vunpack.c.l.b16 %v1502
    %v1674 = vunpack.c.h.b16 %v1502
    %v1675 = vunpack.c.l.b16 %v1503
    %v1676 = vunpack.c.h.b16 %v1503
    %v1677 = vunpack.c.l.b16 %v1504
    %v1678 = vunpack.c.h.b16 %v1504
    %v1679 = vunpack.c.l.b16 %v1505
    %v1680 = vunpack.c.h.b16 %v1505
    %v1681 = vunpack.c.l.b16 %v1506
    %v1682 = vunpack.c.h.b16 %v1506
    %v1683 = vunpack.c.l.b16 %v1507
    %v1684 = vunpack.c.h.b16 %v1507
    %v1685 = vunpack.c.l.b16 %v1508
    %v1686 = vunpack.c.h.b16 %v1508
    %v1687 = vunpack.c.l.b16 %v1509
    %v1688 = vunpack.c.h.b16 %v1509
    %v1689 = vunpack.c.l.b16 %v1510
    %v1690 = vunpack.c.h.b16 %v1510
    %v1691 = vunpack.c.l.b16 %v1511
    %v1692 = vunpack.c.h.b16 %v1511
    %v1693 = vunpack.c.l.b16 %v1512
    %v1694 = vunpack.c.h.b16 %v1512
    %v1695 = vunpack.c.l.b16 %v1513
    %v1696 = vunpack.c.h.b16 %v1513
    %v1697 = vunpack.c.l.b16 %v1514
    %v1698 = vunpack.c.h.b16 %v1514
    %v1699 = vunpack.c.l.b16 %v1515
    %v1700 = vunpack.c.h.b16 %v1515
    %v1701 = vunpack.c.l.b16 %v1516
    %v1702 = vunpack.c.h.b16 %v1516
    %v1703 = vunpack.c.l.b16 %v1517
    %v1704 = vunpack.c.h.b16 %v1517
    %v1705 = vunpack.c.l.b16 %v1518
    %v1706 = vunpack.c.h.b16 %v1518
    %v1707 = vunpack.c.l.b16 %v1519
    %v1708 = vunpack.c.h.b16 %v1519
    %v1709 = vunpack.c.l.b16 %v1520
    %v1710 = vunpack.c.h.b16 %v1520
    %v1711 = vunpack.c.l.b16 %v1521
    %v1712 = vunpack.c.h.b16 %v1521
    %v1713 = vunpack.c.l.b16 %v1522
    %v1714 = vunpack.c.h.b16 %v1522
    %v1715 = vpack.c.b16 %v1591, %v1587
    %v1716 = vpack.c.b16 %v1592, %v1588
    %v1717 = vpack.c.b16 %v1593, %v1589
    %v1718 = vpack.c.b16 %v1594, %v1590
    %v1719 = vpack.c.b16 %v1599, %v1595
    %v1720 = vpack.c.b16 %v1600, %v1596
    %v1721 = vpack.c.b16 %v1601, %v1597
    %v1722 = vpack.c.b16 %v1602, %v1598
    %v1723 = vpack.c.b16 %v1607, %v1603
    %v1724 = vpack.c.b16 %v1608, %v1604
    %v1725 = vpack.c.b16 %v1609, %v1605
    %v1726 = vpack.c.b16 %v1610, %v1606
    %v1727 = vpack.c.b16 %v1615, %v1611
    %v1728 = vpack.c.b16 %v1616, %v1612
    %v1729 = vpack.c.b16 %v1617, %v1613
    %v1730 = vpack.c.b16 %v1618, %v1614
    %v1731 = vpack.c.b16 %v1623, %v1619
    %v1732 = vpack.c.b16 %v1624, %v1620
    %v1733 = vpack.c.b16 %v1625, %v1621
    %v1734 = vpack.c.b16 %v1626, %v1622
    %v1735 = vpack.c.b16 %v1631, %v1627
    %v1736 = vpack.c.b16 %v1632, %v1628
    %v1737 = vpack.c.b16 %v1633, %v1629
    %v1738 = vpack.c.b16 %v1634, %v1630
    %v1739 = vpack.c.b16 %v1639, %v1635
    %v1740 = vpack.c.b16 %v1640, %v1636
    %v1741 = vpack.c.b16 %v1641, %v1637
    %v1742 = vpack.c.b16 %v1642, %v1638
    %v1743 = vpack.c.b16 %v1647, %v1643
    %v1744 = vpack.c.b16 %v1648, %v1644
    %v1745 = vpack.c.b16 %v1649, %v1645
    %v1746 = vpack.c.b16 %v1650, %v1646
    %v1747 = vpack.c.b16 %v1655, %v1651
    %v1748 = vpack.c.b16 %v1656, %v1652
    %v1749 = vpack.c.b16 %v1657, %v1653
    %v1750 = vpack.c.b16 %v1658, %v1654
    %v1751 = vpack.c.b16 %v1663, %v1659
    %v1752 = vpack.c.b16 %v1664, %v1660
    %v1753 = vpack.c.b16 %v1665, %v1661
    %v1754 = vpack.c.b16 %v1666, %v1662
    %v1755 = vpack.c.b16 %v1671, %v1667
    %v1756 = vpack.c.b16 %v1672, %v1668
    %v1757 = vpack.c.b16 %v1673, %v1669
    %v1758 = vpack.c.b16 %v1674, %v1670
    %v1759 = vpack.c.b16 %v1679, %v1675
    %v1760 = vpack.c.b16 %v1680, %v1676
    %v1761 = vpack.c.b16 %v1681, %v1677
    %v1762 = vpack.c.b16 %v1682, %v1678
    %v1763 = vpack.c.b16 %v1687, %v1683
    %v1764 = vpack.c.b16 %v1688, %v1684
    %v1765 = vpack.c.b16 %v1689, %v1685
    %v1766 = vpack.c.b16 %v1690, %v1686
    %v1767 = vpack.c.b16 %v1695, %v1691
    %v1768 = vpack.c.b16 %v1696, %v1692
    %v1769 = vpack.c.b16 %v1697, %v1693
    %v1770 = vpack.c.b16 %v1698, %v1694
    %v1771 = vpack.c.b16 %v1703, %v1699
    %v1772 = vpack.c.b16 %v1704, %v1700
    %v1773 = vpack.c.b16 %v1705, %v1701
    %v1774 = vpack.c.b16 %v1706, %v1702
    %v1775 = vpack.c.b16 %v1711, %v1707
    %v1776 = vpack.c.b16 %v1712, %v1708
    %v1777 = vpack.c.b16 %v1713, %v1709
    %v1778 = vpack.c.b16 %v1714, %v1710
    %1843 = vmatprep.subr.bf16.mxu0 %v1716
    %1844 = vmatpush1.bf16.msra.mxu0 %v1715
    %1845 = vmatprep.subr.bf16.mxu0 %v1720
    %1846 = vmatpush1.bf16.msra.mxu0 %v1719
    %1847 = vmatprep.subr.bf16.mxu0 %v1724
    %1848 = vmatpush1.bf16.msra.mxu0 %v1723
    %1849 = vmatprep.subr.bf16.mxu0 %v1728
    %1850 = vmatpush1.bf16.msra.mxu0 %v1727
    %1851 = vmatprep.subr.bf16.mxu0 %v1732
    %1852 = vmatpush1.bf16.msra.mxu0 %v1731
    %1853 = vmatprep.subr.bf16.mxu0 %v1736
    %1854 = vmatpush1.bf16.msra.mxu0 %v1735
    %1855 = vmatprep.subr.bf16.mxu0 %v1740
    %1856 = vmatpush1.bf16.msra.mxu0 %v1739
    %1857 = vmatprep.subr.bf16.mxu0 %v1744
    %1858 = vmatpush1.bf16.msra.mxu0 %v1743
    %1859 = vmatprep.subr.bf16.mxu0 %v1748
    %1860 = vmatpush1.bf16.msra.mxu0 %v1747
    %1861 = vmatprep.subr.bf16.mxu0 %v1752
    %1862 = vmatpush1.bf16.msra.mxu0 %v1751
    %1863 = vmatprep.subr.bf16.mxu0 %v1756
    %1864 = vmatpush1.bf16.msra.mxu0 %v1755
    %1865 = vmatprep.subr.bf16.mxu0 %v1760
    %1866 = vmatpush1.bf16.msra.mxu0 %v1759
    %1867 = vmatprep.subr.bf16.mxu0 %v1764
    %1868 = vmatpush1.bf16.msra.mxu0 %v1763
    %1869 = vmatprep.subr.bf16.mxu0 %v1768
    %1870 = vmatpush1.bf16.msra.mxu0 %v1767
    %1871 = vmatprep.subr.bf16.mxu0 %v1772
    %1872 = vmatpush1.bf16.msra.mxu0 %v1771
    %1873 = vmatprep.subr.bf16.mxu0 %v1776
    %1874 = vmatpush1.bf16.msra.mxu0 %v1775
    %1875 = vmatprep.mubr.bf16.mxu0 %v1451
    %1876 = vmatmul.mubr.bf16.gmra.mrb[0].mxu0 %v1450
    %v1877 = vpop.f32.mrb[0].mxu0
    %v1878 = vadd.f32 0.0, %v1877
    %v1879 = vpop.f32.mrb[0].mxu0
    %v1880 = vadd.f32 0.0, %v1879
    %v1881 = vpop.f32.mrb[0].mxu0
    %v1882 = vadd.f32 0.0, %v1881
    %v1883 = vpop.f32.mrb[0].mxu0
    %v1884 = vadd.f32 0.0, %v1883
    %1885 = vmatprep.mubr.bf16.mxu0 %v1453
    %1886 = vmatmul.mubr.bf16.gmra.mrb[0].mxu0 %v1452
    %v1887 = vpop.f32.mrb[0].mxu0
    %v1888 = vadd.f32 0.0, %v1887
    %v1889 = vpop.f32.mrb[0].mxu0
    %v1890 = vadd.f32 0.0, %v1889
    %v1891 = vpop.f32.mrb[0].mxu0
    %v1892 = vadd.f32 0.0, %v1891
    %v1893 = vpop.f32.mrb[0].mxu0
    %v1894 = vadd.f32 0.0, %v1893
    %1895 = vmatprep.mubr.bf16.mxu0 %v1455
    %1896 = vmatmul.mubr.bf16.gmra.mrb[0].mxu0 %v1454
    %v1897 = vpop.f32.mrb[0].mxu0
    %v1898 = vadd.f32 0.0, %v1897
    %v1899 = vpop.f32.mrb[0].mxu0
    %v1900 = vadd.f32 0.0, %v1899
    %v1901 = vpop.f32.mrb[0].mxu0
    %v1902 = vadd.f32 0.0, %v1901
    %v1903 = vpop.f32.mrb[0].mxu0
    %v1904 = vadd.f32 0.0, %v1903
    %1905 = vmatprep.mubr.bf16.mxu0 %v1457
    %1906 = vmatmul.mubr.bf16.gmra.mrb[0].mxu0 %v1456
    %v1907 = vpop.f32.mrb[0].mxu0
    %v1908 = vadd.f32 0.0, %v1907
    %v1909 = vpop.f32.mrb[0].mxu0
    %v1910 = vadd.f32 0.0, %v1909
    %v1911 = vpop.f32.mrb[0].mxu0
    %v1912 = vpop.f32.mrb[0].mxu0
    %1913 = vdwg.mxu0
    %1914 = vmatprep.subr.bf16.mxu0 %v1718
    %1915 = vmatpush1.bf16.msra.mxu0 %v1717
    %1916 = vmatprep.subr.bf16.mxu0 %v1722
    %1917 = vmatpush1.bf16.msra.mxu0 %v1721
    %1918 = vmatprep.subr.bf16.mxu0 %v1726
    %1919 = vmatpush1.bf16.msra.mxu0 %v1725
    %1920 = vmatprep.subr.bf16.mxu0 %v1730
    %1921 = vmatpush1.bf16.msra.mxu0 %v1729
    %1922 = vmatprep.subr.bf16.mxu0 %v1734
    %1923 = vmatpush1.bf16.msra.mxu0 %v1733
    %1924 = vmatprep.subr.bf16.mxu0 %v1738
    %1925 = vmatpush1.bf16.msra.mxu0 %v1737
    %1926 = vmatprep.subr.bf16.mxu0 %v1742
    %1927 = vmatpush1.bf16.msra.mxu0 %v1741
    %1928 = vmatprep.subr.bf16.mxu0 %v1746
    %1929 = vmatpush1.bf16.msra.mxu0 %v1745
    %1930 = vmatprep.subr.bf16.mxu0 %v1750
    %1931 = vmatpush1.bf16.msra.mxu0 %v1749
    %1932 = vmatprep.subr.bf16.mxu0 %v1754
    %1933 = vmatpush1.bf16.msra.mxu0 %v1753
    %1934 = vmatprep.subr.bf16.mxu0 %v1758
    %1935 = vmatpush1.bf16.msra.mxu0 %v1757
    %1936 = vmatprep.subr.bf16.mxu0 %v1762
    %1937 = vmatpush1.bf16.msra.mxu0 %v1761
    %1938 = vmatprep.subr.bf16.mxu0 %v1766
    %1939 = vmatpush1.bf16.msra.mxu0 %v1765
    %1940 = vmatprep.subr.bf16.mxu0 %v1770
    %1941 = vmatpush1.bf16.msra.mxu0 %v1769
    %1942 = vmatprep.subr.bf16.mxu0 %v1774
    %1943 = vmatpush1.bf16.msra.mxu0 %v1773
    %1944 = vmatprep.subr.bf16.mxu0 %v1778
    %1945 = vmatpush1.bf16.msra.mxu0 %v1777
    %1946 = vmatprep.mubr.bf16.mxu0 %v1451
    %1947 = vmatmul.mubr.bf16.gmra.mrb[0].mxu0 %v1450
    %v1948 = vpop.f32.mrb[0].mxu0
    %v1949 = vadd.f32 0.0, %v1948
    %v1950 = vpop.f32.mrb[0].mxu0
    %v1951 = vadd.f32 0.0, %v1950
    %v1952 = vpop.f32.mrb[0].mxu0
    %v1953 = vadd.f32 0.0, %v1952
    %v1954 = vpop.f32.mrb[0].mxu0
    %v1955 = vadd.f32 0.0, %v1954
    %1956 = vmatprep.mubr.bf16.mxu0 %v1453
    %1957 = vmatmul.mubr.bf16.gmra.mrb[0].mxu0 %v1452
    %v1958 = vpop.f32.mrb[0].mxu0
    %v1959 = vadd.f32 0.0, %v1958
    %v1960 = vpop.f32.mrb[0].mxu0
    %v1961 = vadd.f32 0.0, %v1960
    %v1962 = vpop.f32.mrb[0].mxu0
    %v1963 = vadd.f32 0.0, %v1962
    %v1964 = vpop.f32.mrb[0].mxu0
    %v1965 = vadd.f32 0.0, %v1964
    %1966 = vmatprep.mubr.bf16.mxu0 %v1455
    %1967 = vmatmul.mubr.bf16.gmra.mrb[0].mxu0 %v1454
    %v1968 = vpop.f32.mrb[0].mxu0
    %v1969 = vadd.f32 0.0, %v1968
    %v1970 = vpop.f32.mrb[0].mxu0
    %v1971 = vadd.f32 0.0, %v1970
    %v1972 = vpop.f32.mrb[0].mxu0
    %v1973 = vadd.f32 0.0, %v1972
    %v1974 = vpop.f32.mrb[0].mxu0
    %v1975 = vadd.f32 0.0, %v1974
    %1976 = vmatprep.mubr.bf16.mxu0 %v1457
    %1977 = vmatmul.mubr.bf16.gmra.mrb[0].mxu0 %v1456
    %v1978 = vpop.f32.mrb[0].mxu0
    %v1979 = vadd.f32 0.0, %v1978
    %v1980 = vpop.f32.mrb[0].mxu0
    %v1981 = vadd.f32 0.0, %v1980
    %v1982 = vpop.f32.mrb[0].mxu0
    %v1983 = vpop.f32.mrb[0].mxu0
    %1984 = vdwg.mxu0
    %v2049 = vunpack.c.l.b16 %v1372
    %v2050 = vunpack.c.h.b16 %v1372
    %v2051 = vunpack.c.l.b16 %v1373
    %v2052 = vunpack.c.h.b16 %v1373
    %v2053 = vunpack.c.l.b16 %v1374
    %v2054 = vunpack.c.h.b16 %v1374
    %v2055 = vunpack.c.l.b16 %v1375
    %v2056 = vunpack.c.h.b16 %v1375
    %v2057 = vunpack.c.l.b16 %v1376
    %v2058 = vunpack.c.h.b16 %v1376
    %v2059 = vunpack.c.l.b16 %v1377
    %v2060 = vunpack.c.h.b16 %v1377
    %v2061 = vunpack.c.l.b16 %v1378
    %v2062 = vunpack.c.h.b16 %v1378
    %v2063 = vunpack.c.l.b16 %v1379
    %v2064 = vunpack.c.h.b16 %v1379
    %v2065 = vunpack.c.l.b16 %v1380
    %v2066 = vunpack.c.h.b16 %v1380
    %v2067 = vunpack.c.l.b16 %v1381
    %v2068 = vunpack.c.h.b16 %v1381
    %v2069 = vunpack.c.l.b16 %v1382
    %v2070 = vunpack.c.h.b16 %v1382
    %v2071 = vunpack.c.l.b16 %v1383
    %v2072 = vunpack.c.h.b16 %v1383
    %v2073 = vunpack.c.l.b16 %v1384
    %v2074 = vunpack.c.h.b16 %v1384
    %v2075 = vunpack.c.l.b16 %v1385
    %v2076 = vunpack.c.h.b16 %v1385
    %v2077 = vunpack.c.l.b16 %v1386
    %v2078 = vunpack.c.h.b16 %v1386
    %v2079 = vunpack.c.l.b16 %v1387
    %v2080 = vunpack.c.h.b16 %v1387
    %v2081 = vunpack.c.l.b16 %v1388
    %v2082 = vunpack.c.h.b16 %v1388
    %v2083 = vunpack.c.l.b16 %v1389
    %v2084 = vunpack.c.h.b16 %v1389
    %v2085 = vunpack.c.l.b16 %v1390
    %v2086 = vunpack.c.h.b16 %v1390
    %v2087 = vunpack.c.l.b16 %v1391
    %v2088 = vunpack.c.h.b16 %v1391
    %v2089 = vunpack.c.l.b16 %v1392
    %v2090 = vunpack.c.h.b16 %v1392
    %v2091 = vunpack.c.l.b16 %v1393
    %v2092 = vunpack.c.h.b16 %v1393
    %v2093 = vunpack.c.l.b16 %v1394
    %v2094 = vunpack.c.h.b16 %v1394
    %v2095 = vunpack.c.l.b16 %v1395
    %v2096 = vunpack.c.h.b16 %v1395
    %v2097 = vunpack.c.l.b16 %v1396
    %v2098 = vunpack.c.h.b16 %v1396
    %v2099 = vunpack.c.l.b16 %v1397
    %v2100 = vunpack.c.h.b16 %v1397
    %v2101 = vunpack.c.l.b16 %v1398
    %v2102 = vunpack.c.h.b16 %v1398
    %v2103 = vunpack.c.l.b16 %v1399
    %v2104 = vunpack.c.h.b16 %v1399
    %v2105 = vunpack.c.l.b16 %v1400
    %v2106 = vunpack.c.h.b16 %v1400
    %v2107 = vunpack.c.l.b16 %v1401
    %v2108 = vunpack.c.h.b16 %v1401
    %v2109 = vunpack.c.l.b16 %v1402
    %v2110 = vunpack.c.h.b16 %v1402
    %v2111 = vunpack.c.l.b16 %v1403
    %v2112 = vunpack.c.h.b16 %v1403
    %v2113 = vunpack.c.l.b16 %v1404
    %v2114 = vunpack.c.h.b16 %v1404
    %v2115 = vunpack.c.l.b16 %v1405
    %v2116 = vunpack.c.h.b16 %v1405
    %v2117 = vunpack.c.l.b16 %v1406
    %v2118 = vunpack.c.h.b16 %v1406
    %v2119 = vunpack.c.l.b16 %v1407
    %v2120 = vunpack.c.h.b16 %v1407
    %v2121 = vunpack.c.l.b16 %v1408
    %v2122 = vunpack.c.h.b16 %v1408
    %v2123 = vunpack.c.l.b16 %v1409
    %v2124 = vunpack.c.h.b16 %v1409
    %v2125 = vunpack.c.l.b16 %v1410
    %v2126 = vunpack.c.h.b16 %v1410
    %v2127 = vunpack.c.l.b16 %v1411
    %v2128 = vunpack.c.h.b16 %v1411
    %v2129 = vunpack.c.l.b16 %v1412
    %v2130 = vunpack.c.h.b16 %v1412
    %v2131 = vunpack.c.l.b16 %v1413
    %v2132 = vunpack.c.h.b16 %v1413
    %v2133 = vunpack.c.l.b16 %v1414
    %v2134 = vunpack.c.h.b16 %v1414
    %v2135 = vunpack.c.l.b16 %v1415
    %v2136 = vunpack.c.h.b16 %v1415
    %v2137 = vunpack.c.l.b16 %v1416
    %v2138 = vunpack.c.h.b16 %v1416
    %v2139 = vunpack.c.l.b16 %v1417
    %v2140 = vunpack.c.h.b16 %v1417
    %v2141 = vunpack.c.l.b16 %v1418
    %v2142 = vunpack.c.h.b16 %v1418
    %v2143 = vunpack.c.l.b16 %v1419
    %v2144 = vunpack.c.h.b16 %v1419
    %v2145 = vunpack.c.l.b16 %v1420
    %v2146 = vunpack.c.h.b16 %v1420
    %v2147 = vunpack.c.l.b16 %v1421
    %v2148 = vunpack.c.h.b16 %v1421
    %v2149 = vunpack.c.l.b16 %v1422
    %v2150 = vunpack.c.h.b16 %v1422
    %v2151 = vunpack.c.l.b16 %v1423
    %v2152 = vunpack.c.h.b16 %v1423
    %v2153 = vunpack.c.l.b16 %v1424
    %v2154 = vunpack.c.h.b16 %v1424
    %v2155 = vunpack.c.l.b16 %v1425
    %v2156 = vunpack.c.h.b16 %v1425
    %v2157 = vunpack.c.l.b16 %v1426
    %v2158 = vunpack.c.h.b16 %v1426
    %v2159 = vunpack.c.l.b16 %v1427
    %v2160 = vunpack.c.h.b16 %v1427
    %v2161 = vunpack.c.l.b16 %v1428
    %v2162 = vunpack.c.h.b16 %v1428
    %v2163 = vunpack.c.l.b16 %v1429
    %v2164 = vunpack.c.h.b16 %v1429
    %v2165 = vunpack.c.l.b16 %v1430
    %v2166 = vunpack.c.h.b16 %v1430
    %v2167 = vunpack.c.l.b16 %v1431
    %v2168 = vunpack.c.h.b16 %v1431
    %v2169 = vunpack.c.l.b16 %v1432
    %v2170 = vunpack.c.h.b16 %v1432
    %v2171 = vunpack.c.l.b16 %v1433
    %v2172 = vunpack.c.h.b16 %v1433
    %v2173 = vunpack.c.l.b16 %v1434
    %v2174 = vunpack.c.h.b16 %v1434
    %v2175 = vunpack.c.l.b16 %v1435
    %v2176 = vunpack.c.h.b16 %v1435
    %v2177 = vpack.c.b16 %v2053, %v2049
    %v2178 = vpack.c.b16 %v2054, %v2050
    %v2179 = vpack.c.b16 %v2055, %v2051
    %v2180 = vpack.c.b16 %v2056, %v2052
    %v2181 = vpack.c.b16 %v2061, %v2057
    %v2182 = vpack.c.b16 %v2062, %v2058
    %v2183 = vpack.c.b16 %v2063, %v2059
    %v2184 = vpack.c.b16 %v2064, %v2060
    %v2185 = vpack.c.b16 %v2069, %v2065
    %v2186 = vpack.c.b16 %v2070, %v2066
    %v2187 = vpack.c.b16 %v2071, %v2067
    %v2188 = vpack.c.b16 %v2072, %v2068
    %v2189 = vpack.c.b16 %v2077, %v2073
    %v2190 = vpack.c.b16 %v2078, %v2074
    %v2191 = vpack.c.b16 %v2079, %v2075
    %v2192 = vpack.c.b16 %v2080, %v2076
    %v2193 = vpack.c.b16 %v2085, %v2081
    %v2194 = vpack.c.b16 %v2086, %v2082
    %v2195 = vpack.c.b16 %v2087, %v2083
    %v2196 = vpack.c.b16 %v2088, %v2084
    %v2197 = vpack.c.b16 %v2093, %v2089
    %v2198 = vpack.c.b16 %v2094, %v2090
    %v2199 = vpack.c.b16 %v2095, %v2091
    %v2200 = vpack.c.b16 %v2096, %v2092
    %v2201 = vpack.c.b16 %v2101, %v2097
    %v2202 = vpack.c.b16 %v2102, %v2098
    %v2203 = vpack.c.b16 %v2103, %v2099
    %v2204 = vpack.c.b16 %v2104, %v2100
    %v2205 = vpack.c.b16 %v2109, %v2105
    %v2206 = vpack.c.b16 %v2110, %v2106
    %v2207 = vpack.c.b16 %v2111, %v2107
    %v2208 = vpack.c.b16 %v2112, %v2108
    %v2209 = vpack.c.b16 %v2117, %v2113
    %v2210 = vpack.c.b16 %v2118, %v2114
    %v2211 = vpack.c.b16 %v2119, %v2115
    %v2212 = vpack.c.b16 %v2120, %v2116
    %v2213 = vpack.c.b16 %v2125, %v2121
    %v2214 = vpack.c.b16 %v2126, %v2122
    %v2215 = vpack.c.b16 %v2127, %v2123
    %v2216 = vpack.c.b16 %v2128, %v2124
    %v2217 = vpack.c.b16 %v2133, %v2129
    %v2218 = vpack.c.b16 %v2134, %v2130
    %v2219 = vpack.c.b16 %v2135, %v2131
    %v2220 = vpack.c.b16 %v2136, %v2132
    %v2221 = vpack.c.b16 %v2141, %v2137
    %v2222 = vpack.c.b16 %v2142, %v2138
    %v2223 = vpack.c.b16 %v2143, %v2139
    %v2224 = vpack.c.b16 %v2144, %v2140
    %v2225 = vpack.c.b16 %v2149, %v2145
    %v2226 = vpack.c.b16 %v2150, %v2146
    %v2227 = vpack.c.b16 %v2151, %v2147
    %v2228 = vpack.c.b16 %v2152, %v2148
    %v2229 = vpack.c.b16 %v2157, %v2153
    %v2230 = vpack.c.b16 %v2158, %v2154
    %v2231 = vpack.c.b16 %v2159, %v2155
    %v2232 = vpack.c.b16 %v2160, %v2156
    %v2233 = vpack.c.b16 %v2165, %v2161
    %v2234 = vpack.c.b16 %v2166, %v2162
    %v2235 = vpack.c.b16 %v2167, %v2163
    %v2236 = vpack.c.b16 %v2168, %v2164
    %v2237 = vpack.c.b16 %v2173, %v2169
    %v2238 = vpack.c.b16 %v2174, %v2170
    %v2239 = vpack.c.b16 %v2175, %v2171
    %v2240 = vpack.c.b16 %v2176, %v2172
    %2305 = vmatprep.subr.bf16.mxu0 %v2178
    %2306 = vmatpush1.bf16.msra.mxu0 %v2177
    %2307 = vmatprep.subr.bf16.mxu0 %v2182
    %2308 = vmatpush1.bf16.msra.mxu0 %v2181
    %2309 = vmatprep.subr.bf16.mxu0 %v2186
    %2310 = vmatpush1.bf16.msra.mxu0 %v2185
    %2311 = vmatprep.subr.bf16.mxu0 %v2190
    %2312 = vmatpush1.bf16.msra.mxu0 %v2189
    %2313 = vmatprep.subr.bf16.mxu0 %v2194
    %2314 = vmatpush1.bf16.msra.mxu0 %v2193
    %2315 = vmatprep.subr.bf16.mxu0 %v2198
    %2316 = vmatpush1.bf16.msra.mxu0 %v2197
    %2317 = vmatprep.subr.bf16.mxu0 %v2202
    %2318 = vmatpush1.bf16.msra.mxu0 %v2201
    %2319 = vmatprep.subr.bf16.mxu0 %v2206
    %2320 = vmatpush1.bf16.msra.mxu0 %v2205
    %2321 = vmatprep.subr.bf16.mxu0 %v2210
    %2322 = vmatpush1.bf16.msra.mxu0 %v2209
    %2323 = vmatprep.subr.bf16.mxu0 %v2214
    %2324 = vmatpush1.bf16.msra.mxu0 %v2213
    %2325 = vmatprep.subr.bf16.mxu0 %v2218
    %2326 = vmatpush1.bf16.msra.mxu0 %v2217
    %2327 = vmatprep.subr.bf16.mxu0 %v2222
    %2328 = vmatpush1.bf16.msra.mxu0 %v2221
    %2329 = vmatprep.subr.bf16.mxu0 %v2226
    %2330 = vmatpush1.bf16.msra.mxu0 %v2225
    %2331 = vmatprep.subr.bf16.mxu0 %v2230
    %2332 = vmatpush1.bf16.msra.mxu0 %v2229
    %2333 = vmatprep.subr.bf16.mxu0 %v2234
    %2334 = vmatpush1.bf16.msra.mxu0 %v2233
    %2335 = vmatprep.subr.bf16.mxu0 %v2238
    %2336 = vmatpush1.bf16.msra.mxu0 %v2237
    %2337 = vmatprep.mubr.bf16.mxu0 %v1365
    %2338 = vmatmul.mubr.bf16.gmra.mrb[0].mxu0 %v1364
    %v2339 = vpop.f32.mrb[0].mxu0
    %v2340 = vadd.f32 %v1878, %v2339
    %v2341 = vpop.f32.mrb[0].mxu0
    %v2342 = vadd.f32 %v1880, %v2341
    %v2343 = vpop.f32.mrb[0].mxu0
    %v2344 = vadd.f32 %v1882, %v2343
    %v2345 = vpop.f32.mrb[0].mxu0
    %v2346 = vadd.f32 %v1884, %v2345
    %2347 = vmatprep.mubr.bf16.mxu0 %v1367
    %2348 = vmatmul.mubr.bf16.gmra.mrb[0].mxu0 %v1366
    %v2349 = vpop.f32.mrb[0].mxu0
    %v2350 = vadd.f32 %v1888, %v2349
    %v2351 = vpop.f32.mrb[0].mxu0
    %v2352 = vadd.f32 %v1890, %v2351
    %v2353 = vpop.f32.mrb[0].mxu0
    %v2354 = vadd.f32 %v1892, %v2353
    %v2355 = vpop.f32.mrb[0].mxu0
    %v2356 = vadd.f32 %v1894, %v2355
    %2357 = vmatprep.mubr.bf16.mxu0 %v1369
    %2358 = vmatmul.mubr.bf16.gmra.mrb[0].mxu0 %v1368
    %v2359 = vpop.f32.mrb[0].mxu0
    %v2360 = vadd.f32 %v1898, %v2359
    %v2361 = vpop.f32.mrb[0].mxu0
    %v2362 = vadd.f32 %v1900, %v2361
    %v2363 = vpop.f32.mrb[0].mxu0
    %v2364 = vadd.f32 %v1902, %v2363
    %v2365 = vpop.f32.mrb[0].mxu0
    %v2366 = vadd.f32 %v1904, %v2365
    %2367 = vmatprep.mubr.bf16.mxu0 %v1371
    %2368 = vmatmul.mubr.bf16.gmra.mrb[0].mxu0 %v1370
    %v2369 = vpop.f32.mrb[0].mxu0
    %v2370 = vadd.f32 %v1908, %v2369
    %v2371 = vpop.f32.mrb[0].mxu0
    %v2372 = vadd.f32 %v1910, %v2371
    %v2373 = vpop.f32.mrb[0].mxu0
    %v2374 = vpop.f32.mrb[0].mxu0
    %2375 = vdwg.mxu0
    %2376 = vmatprep.subr.bf16.mxu0 %v2180
    %2377 = vmatpush1.bf16.msra.mxu0 %v2179
    %2378 = vmatprep.subr.bf16.mxu0 %v2184
    %2379 = vmatpush1.bf16.msra.mxu0 %v2183
    %2380 = vmatprep.subr.bf16.mxu0 %v2188
    %2381 = vmatpush1.bf16.msra.mxu0 %v2187
    %2382 = vmatprep.subr.bf16.mxu0 %v2192
    %2383 = vmatpush1.bf16.msra.mxu0 %v2191
    %2384 = vmatprep.subr.bf16.mxu0 %v2196
    %2385 = vmatpush1.bf16.msra.mxu0 %v2195
    %2386 = vmatprep.subr.bf16.mxu0 %v2200
    %2387 = vmatpush1.bf16.msra.mxu0 %v2199
    %2388 = vmatprep.subr.bf16.mxu0 %v2204
    %2389 = vmatpush1.bf16.msra.mxu0 %v2203
    %2390 = vmatprep.subr.bf16.mxu0 %v2208
    %2391 = vmatpush1.bf16.msra.mxu0 %v2207
    %2392 = vmatprep.subr.bf16.mxu0 %v2212
    %2393 = vmatpush1.bf16.msra.mxu0 %v2211
    %2394 = vmatprep.subr.bf16.mxu0 %v2216
    %2395 = vmatpush1.bf16.msra.mxu0 %v2215
    %2396 = vmatprep.subr.bf16.mxu0 %v2220
    %2397 = vmatpush1.bf16.msra.mxu0 %v2219
    %2398 = vmatprep.subr.bf16.mxu0 %v2224
    %2399 = vmatpush1.bf16.msra.mxu0 %v2223
    %2400 = vmatprep.subr.bf16.mxu0 %v2228
    %2401 = vmatpush1.bf16.msra.mxu0 %v2227
    %2402 = vmatprep.subr.bf16.mxu0 %v2232
    %2403 = vmatpush1.bf16.msra.mxu0 %v2231
    %2404 = vmatprep.subr.bf16.mxu0 %v2236
    %2405 = vmatpush1.bf16.msra.mxu0 %v2235
    %2406 = vmatprep.subr.bf16.mxu0 %v2240
    %2407 = vmatpush1.bf16.msra.mxu0 %v2239
    %2408 = vmatprep.mubr.bf16.mxu0 %v1365
    %2409 = vmatmul.mubr.bf16.gmra.mrb[0].mxu0 %v1364
    %v2410 = vpop.f32.mrb[0].mxu0
    %v2411 = vadd.f32 %v1949, %v2410
    %v2412 = vpop.f32.mrb[0].mxu0
    %v2413 = vadd.f32 %v1951, %v2412
    %v2414 = vpop.f32.mrb[0].mxu0
    %v2415 = vadd.f32 %v1953, %v2414
    %v2416 = vpop.f32.mrb[0].mxu0
    %v2417 = vadd.f32 %v1955, %v2416
    %2418 = vmatprep.mubr.bf16.mxu0 %v1367
    %2419 = vmatmul.mubr.bf16.gmra.mrb[0].mxu0 %v1366
    %v2420 = vpop.f32.mrb[0].mxu0
    %v2421 = vadd.f32 %v1959, %v2420
    %v2422 = vpop.f32.mrb[0].mxu0
    %v2423 = vadd.f32 %v1961, %v2422
    %v2424 = vpop.f32.mrb[0].mxu0
    %v2425 = vadd.f32 %v1963, %v2424
    %v2426 = vpop.f32.mrb[0].mxu0
    %v2427 = vadd.f32 %v1965, %v2426
    %2428 = vmatprep.mubr.bf16.mxu0 %v1369
    %2429 = vmatmul.mubr.bf16.gmra.mrb[0].mxu0 %v1368
    %v2430 = vpop.f32.mrb[0].mxu0
    %v2431 = vadd.f32 %v1969, %v2430
    %v2432 = vpop.f32.mrb[0].mxu0
    %v2433 = vadd.f32 %v1971, %v2432
    %v2434 = vpop.f32.mrb[0].mxu0
    %v2435 = vadd.f32 %v1973, %v2434
    %v2436 = vpop.f32.mrb[0].mxu0
    %v2437 = vadd.f32 %v1975, %v2436
    %2438 = vmatprep.mubr.bf16.mxu0 %v1371
    %2439 = vmatmul.mubr.bf16.gmra.mrb[0].mxu0 %v1370
    %v2440 = vpop.f32.mrb[0].mxu0
    %v2441 = vadd.f32 %v1979, %v2440
    %v2442 = vpop.f32.mrb[0].mxu0
    %v2443 = vadd.f32 %v1981, %v2442
    %v2444 = vpop.f32.mrb[0].mxu0
    %v2445 = vpop.f32.mrb[0].mxu0
    %2446 = vdwg.mxu0
    %v2447 = vld [vmem:[%s78 + $0x10] sm:$0xff]
    %v2448 = vld [vmem:[%s78 + $0x18] sm:$0xff]
    %v2449 = vld [vmem:[%s78 + $0x20] sm:$0xff]
    %v2450 = vld [vmem:[%s78 + $0x28] sm:$0xff]
    %v2451 = vld [vmem:[%s78 + $0x30] sm:$0xff]
    %v2452 = vld [vmem:[%s78 + $0x38] sm:$0xff]
    %v2453 = vld [vmem:[%s78 + $0x40] sm:$0xff]
    %v2454 = vld [vmem:[%s78 + $0x48] sm:$0xff]
    %v2455 = vld [vmem:[%s78 + $0x50] sm:$0xff]
    %v2456 = vld [vmem:[%s78 + $0x58] sm:$0xff]
    %v2457 = vld [vmem:[%s78 + $0x60] sm:$0xff]
    %v2458 = vld [vmem:[%s78 + $0x68] sm:$0xff]
    %v2459 = vld [vmem:[%s78 + $0x70] sm:$0xff]
    %v2460 = vld [vmem:[%s78 + $0x78] sm:$0xff]
    %v2461 = vpack.c.bf16 %v2449, %v2447
    %v2462 = vpack.c.bf16 %v2450, %v2448
    %v2463 = vpack.c.bf16 %v2453, %v2451
    %v2464 = vpack.c.bf16 %v2454, %v2452
    %v2465 = vpack.c.bf16 %v2457, %v2455
    %v2466 = vpack.c.bf16 %v2458, %v2456
    %v2467 = vpack.c.bf16 %v2459, %v2459
    %v2468 = vpack.c.bf16 %v2460, %v2460
    %s2469 = scalar_lea.vmem %s3, 1024
    %v2470 = vld [vmem:[%s2469] sm:$0xff]
    %v2471 = vld [vmem:[%s2469 + $0x8] sm:$0xff]
    %v2472 = vld [vmem:[%s2469 + $0x10] sm:$0xff]
    %v2473 = vld [vmem:[%s2469 + $0x18] sm:$0xff]
    %v2474 = vld [vmem:[%s2469 + $0x20] sm:$0xff]
    %v2475 = vld [vmem:[%s2469 + $0x28] sm:$0xff]
    %v2476 = vld [vmem:[%s2469 + $0x30] sm:$0xff]
    %v2477 = vld [vmem:[%s2469 + $0x38] sm:$0xff]
    %v2478 = vld [vmem:[%s2469 + $0x40] sm:$0xff]
    %v2479 = vld [vmem:[%s2469 + $0x48] sm:$0xff]
    %v2480 = vld [vmem:[%s2469 + $0x50] sm:$0xff]
    %v2481 = vld [vmem:[%s2469 + $0x58] sm:$0xff]
    %v2482 = vld [vmem:[%s2469 + $0x60] sm:$0xff]
    %v2483 = vld [vmem:[%s2469 + $0x68] sm:$0xff]
    %v2484 = vld [vmem:[%s2469 + $0x70] sm:$0xff]
    %v2485 = vld [vmem:[%s2469 + $0x78] sm:$0xff]
    %v2486 = vld [vmem:[%s2469 + $0x80] sm:$0xff]
    %v2487 = vld [vmem:[%s2469 + $0x88] sm:$0xff]
    %v2488 = vld [vmem:[%s2469 + $0x90] sm:$0xff]
    %v2489 = vld [vmem:[%s2469 + $0x98] sm:$0xff]
    %v2490 = vld [vmem:[%s2469 + $0xa0] sm:$0xff]
    %v2491 = vld [vmem:[%s2469 + $0xa8] sm:$0xff]
    %v2492 = vld [vmem:[%s2469 + $0xb0] sm:$0xff]
    %v2493 = vld [vmem:[%s2469 + $0xb8] sm:$0xff]
    %v2494 = vld [vmem:[%s2469 + $0xc0] sm:$0xff]
    %v2495 = vld [vmem:[%s2469 + $0xc8] sm:$0xff]
    %v2496 = vld [vmem:[%s2469 + $0xd0] sm:$0xff]
    %v2497 = vld [vmem:[%s2469 + $0xd8] sm:$0xff]
    %v2498 = vld [vmem:[%s2469 + $0xe0] sm:$0xff]
    %v2499 = vld [vmem:[%s2469 + $0xe8] sm:$0xff]
    %v2500 = vld [vmem:[%s2469 + $0xf0] sm:$0xff]
    %v2501 = vld [vmem:[%s2469 + $0xf8] sm:$0xff]
    %v2502 = vld [vmem:[%s2469 + $0x100] sm:$0xff]
    %v2503 = vld [vmem:[%s2469 + $0x108] sm:$0xff]
    %v2504 = vld [vmem:[%s2469 + $0x110] sm:$0xff]
    %v2505 = vld [vmem:[%s2469 + $0x118] sm:$0xff]
    %v2506 = vld [vmem:[%s2469 + $0x120] sm:$0xff]
    %v2507 = vld [vmem:[%s2469 + $0x128] sm:$0xff]
    %v2508 = vld [vmem:[%s2469 + $0x130] sm:$0xff]
    %v2509 = vld [vmem:[%s2469 + $0x138] sm:$0xff]
    %v2510 = vld [vmem:[%s2469 + $0x140] sm:$0xff]
    %v2511 = vld [vmem:[%s2469 + $0x148] sm:$0xff]
    %v2512 = vld [vmem:[%s2469 + $0x150] sm:$0xff]
    %v2513 = vld [vmem:[%s2469 + $0x158] sm:$0xff]
    %v2514 = vld [vmem:[%s2469 + $0x160] sm:$0xff]
    %v2515 = vld [vmem:[%s2469 + $0x168] sm:$0xff]
    %v2516 = vld [vmem:[%s2469 + $0x170] sm:$0xff]
    %v2517 = vld [vmem:[%s2469 + $0x178] sm:$0xff]
    %v2518 = vld [vmem:[%s2469 + $0x180] sm:$0xff]
    %v2519 = vld [vmem:[%s2469 + $0x188] sm:$0xff]
    %v2520 = vld [vmem:[%s2469 + $0x190] sm:$0xff]
    %v2521 = vld [vmem:[%s2469 + $0x198] sm:$0xff]
    %v2522 = vld [vmem:[%s2469 + $0x1a0] sm:$0xff]
    %v2523 = vld [vmem:[%s2469 + $0x1a8] sm:$0xff]
    %v2524 = vld [vmem:[%s2469 + $0x1b0] sm:$0xff]
    %v2525 = vld [vmem:[%s2469 + $0x1b8] sm:$0xff]
    %v2526 = vld [vmem:[%s2469 + $0x1c0] sm:$0xff]
    %v2527 = vld [vmem:[%s2469 + $0x1c8] sm:$0xff]
    %v2528 = vld [vmem:[%s2469 + $0x1d0] sm:$0xff]
    %v2529 = vld [vmem:[%s2469 + $0x1d8] sm:$0xff]
    %v2530 = vld [vmem:[%s2469 + $0x1e0] sm:$0xff]
    %v2531 = vld [vmem:[%s2469 + $0x1e8] sm:$0xff]
    %v2532 = vld [vmem:[%s2469 + $0x1f0] sm:$0xff]
    %v2533 = vld [vmem:[%s2469 + $0x1f8] sm:$0xff]
    %v2598 = vunpack.c.l.b16 %v2470
    %v2599 = vunpack.c.h.b16 %v2470
    %v2600 = vunpack.c.l.b16 %v2471
    %v2601 = vunpack.c.h.b16 %v2471
    %v2602 = vunpack.c.l.b16 %v2472
    %v2603 = vunpack.c.h.b16 %v2472
    %v2604 = vunpack.c.l.b16 %v2473
    %v2605 = vunpack.c.h.b16 %v2473
    %v2606 = vunpack.c.l.b16 %v2474
    %v2607 = vunpack.c.h.b16 %v2474
    %v2608 = vunpack.c.l.b16 %v2475
    %v2609 = vunpack.c.h.b16 %v2475
    %v2610 = vunpack.c.l.b16 %v2476
    %v2611 = vunpack.c.h.b16 %v2476
    %v2612 = vunpack.c.l.b16 %v2477
    %v2613 = vunpack.c.h.b16 %v2477
    %v2614 = vunpack.c.l.b16 %v2478
    %v2615 = vunpack.c.h.b16 %v2478
    %v2616 = vunpack.c.l.b16 %v2479
    %v2617 = vunpack.c.h.b16 %v2479
    %v2618 = vunpack.c.l.b16 %v2480
    %v2619 = vunpack.c.h.b16 %v2480
    %v2620 = vunpack.c.l.b16 %v2481
    %v2621 = vunpack.c.h.b16 %v2481
    %v2622 = vunpack.c.l.b16 %v2482
    %v2623 = vunpack.c.h.b16 %v2482
    %v2624 = vunpack.c.l.b16 %v2483
    %v2625 = vunpack.c.h.b16 %v2483
    %v2626 = vunpack.c.l.b16 %v2484
    %v2627 = vunpack.c.h.b16 %v2484
    %v2628 = vunpack.c.l.b16 %v2485
    %v2629 = vunpack.c.h.b16 %v2485
    %v2630 = vunpack.c.l.b16 %v2486
    %v2631 = vunpack.c.h.b16 %v2486
    %v2632 = vunpack.c.l.b16 %v2487
    %v2633 = vunpack.c.h.b16 %v2487
    %v2634 = vunpack.c.l.b16 %v2488
    %v2635 = vunpack.c.h.b16 %v2488
    %v2636 = vunpack.c.l.b16 %v2489
    %v2637 = vunpack.c.h.b16 %v2489
    %v2638 = vunpack.c.l.b16 %v2490
    %v2639 = vunpack.c.h.b16 %v2490
    %v2640 = vunpack.c.l.b16 %v2491
    %v2641 = vunpack.c.h.b16 %v2491
    %v2642 = vunpack.c.l.b16 %v2492
    %v2643 = vunpack.c.h.b16 %v2492
    %v2644 = vunpack.c.l.b16 %v2493
    %v2645 = vunpack.c.h.b16 %v2493
    %v2646 = vunpack.c.l.b16 %v2494
    %v2647 = vunpack.c.h.b16 %v2494
    %v2648 = vunpack.c.l.b16 %v2495
    %v2649 = vunpack.c.h.b16 %v2495
    %v2650 = vunpack.c.l.b16 %v2496
    %v2651 = vunpack.c.h.b16 %v2496
    %v2652 = vunpack.c.l.b16 %v2497
    %v2653 = vunpack.c.h.b16 %v2497
    %v2654 = vunpack.c.l.b16 %v2498
    %v2655 = vunpack.c.h.b16 %v2498
    %v2656 = vunpack.c.l.b16 %v2499
    %v2657 = vunpack.c.h.b16 %v2499
    %v2658 = vunpack.c.l.b16 %v2500
    %v2659 = vunpack.c.h.b16 %v2500
    %v2660 = vunpack.c.l.b16 %v2501
    %v2661 = vunpack.c.h.b16 %v2501
    %v2662 = vunpack.c.l.b16 %v2502
    %v2663 = vunpack.c.h.b16 %v2502
    %v2664 = vunpack.c.l.b16 %v2503
    %v2665 = vunpack.c.h.b16 %v2503
    %v2666 = vunpack.c.l.b16 %v2504
    %v2667 = vunpack.c.h.b16 %v2504
    %v2668 = vunpack.c.l.b16 %v2505
    %v2669 = vunpack.c.h.b16 %v2505
    %v2670 = vunpack.c.l.b16 %v2506
    %v2671 = vunpack.c.h.b16 %v2506
    %v2672 = vunpack.c.l.b16 %v2507
    %v2673 = vunpack.c.h.b16 %v2507
    %v2674 = vunpack.c.l.b16 %v2508
    %v2675 = vunpack.c.h.b16 %v2508
    %v2676 = vunpack.c.l.b16 %v2509
    %v2677 = vunpack.c.h.b16 %v2509
    %v2678 = vunpack.c.l.b16 %v2510
    %v2679 = vunpack.c.h.b16 %v2510
    %v2680 = vunpack.c.l.b16 %v2511
    %v2681 = vunpack.c.h.b16 %v2511
    %v2682 = vunpack.c.l.b16 %v2512
    %v2683 = vunpack.c.h.b16 %v2512
    %v2684 = vunpack.c.l.b16 %v2513
    %v2685 = vunpack.c.h.b16 %v2513
    %v2686 = vunpack.c.l.b16 %v2514
    %v2687 = vunpack.c.h.b16 %v2514
    %v2688 = vunpack.c.l.b16 %v2515
    %v2689 = vunpack.c.h.b16 %v2515
    %v2690 = vunpack.c.l.b16 %v2516
    %v2691 = vunpack.c.h.b16 %v2516
    %v2692 = vunpack.c.l.b16 %v2517
    %v2693 = vunpack.c.h.b16 %v2517
    %v2694 = vunpack.c.l.b16 %v2518
    %v2695 = vunpack.c.h.b16 %v2518
    %v2696 = vunpack.c.l.b16 %v2519
    %v2697 = vunpack.c.h.b16 %v2519
    %v2698 = vunpack.c.l.b16 %v2520
    %v2699 = vunpack.c.h.b16 %v2520
    %v2700 = vunpack.c.l.b16 %v2521
    %v2701 = vunpack.c.h.b16 %v2521
    %v2702 = vunpack.c.l.b16 %v2522
    %v2703 = vunpack.c.h.b16 %v2522
    %v2704 = vunpack.c.l.b16 %v2523
    %v2705 = vunpack.c.h.b16 %v2523
    %v2706 = vunpack.c.l.b16 %v2524
    %v2707 = vunpack.c.h.b16 %v2524
    %v2708 = vunpack.c.l.b16 %v2525
    %v2709 = vunpack.c.h.b16 %v2525
    %v2710 = vunpack.c.l.b16 %v2526
    %v2711 = vunpack.c.h.b16 %v2526
    %v2712 = vunpack.c.l.b16 %v2527
    %v2713 = vunpack.c.h.b16 %v2527
    %v2714 = vunpack.c.l.b16 %v2528
    %v2715 = vunpack.c.h.b16 %v2528
    %v2716 = vunpack.c.l.b16 %v2529
    %v2717 = vunpack.c.h.b16 %v2529
    %v2718 = vunpack.c.l.b16 %v2530
    %v2719 = vunpack.c.h.b16 %v2530
    %v2720 = vunpack.c.l.b16 %v2531
    %v2721 = vunpack.c.h.b16 %v2531
    %v2722 = vunpack.c.l.b16 %v2532
    %v2723 = vunpack.c.h.b16 %v2532
    %v2724 = vunpack.c.l.b16 %v2533
    %v2725 = vunpack.c.h.b16 %v2533
    %v2726 = vpack.c.b16 %v2602, %v2598
    %v2727 = vpack.c.b16 %v2603, %v2599
    %v2728 = vpack.c.b16 %v2604, %v2600
    %v2729 = vpack.c.b16 %v2605, %v2601
    %v2730 = vpack.c.b16 %v2610, %v2606
    %v2731 = vpack.c.b16 %v2611, %v2607
    %v2732 = vpack.c.b16 %v2612, %v2608
    %v2733 = vpack.c.b16 %v2613, %v2609
    %v2734 = vpack.c.b16 %v2618, %v2614
    %v2735 = vpack.c.b16 %v2619, %v2615
    %v2736 = vpack.c.b16 %v2620, %v2616
    %v2737 = vpack.c.b16 %v2621, %v2617
    %v2738 = vpack.c.b16 %v2626, %v2622
    %v2739 = vpack.c.b16 %v2627, %v2623
    %v2740 = vpack.c.b16 %v2628, %v2624
    %v2741 = vpack.c.b16 %v2629, %v2625
    %v2742 = vpack.c.b16 %v2634, %v2630
    %v2743 = vpack.c.b16 %v2635, %v2631
    %v2744 = vpack.c.b16 %v2636, %v2632
    %v2745 = vpack.c.b16 %v2637, %v2633
    %v2746 = vpack.c.b16 %v2642, %v2638
    %v2747 = vpack.c.b16 %v2643, %v2639
    %v2748 = vpack.c.b16 %v2644, %v2640
    %v2749 = vpack.c.b16 %v2645, %v2641
    %v2750 = vpack.c.b16 %v2650, %v2646
    %v2751 = vpack.c.b16 %v2651, %v2647
    %v2752 = vpack.c.b16 %v2652, %v2648
    %v2753 = vpack.c.b16 %v2653, %v2649
    %v2754 = vpack.c.b16 %v2658, %v2654
    %v2755 = vpack.c.b16 %v2659, %v2655
    %v2756 = vpack.c.b16 %v2660, %v2656
    %v2757 = vpack.c.b16 %v2661, %v2657
    %v2758 = vpack.c.b16 %v2666, %v2662
    %v2759 = vpack.c.b16 %v2667, %v2663
    %v2760 = vpack.c.b16 %v2668, %v2664
    %v2761 = vpack.c.b16 %v2669, %v2665
    %v2762 = vpack.c.b16 %v2674, %v2670
    %v2763 = vpack.c.b16 %v2675, %v2671
    %v2764 = vpack.c.b16 %v2676, %v2672
    %v2765 = vpack.c.b16 %v2677, %v2673
    %v2766 = vpack.c.b16 %v2682, %v2678
    %v2767 = vpack.c.b16 %v2683, %v2679
    %v2768 = vpack.c.b16 %v2684, %v2680
    %v2769 = vpack.c.b16 %v2685, %v2681
    %v2770 = vpack.c.b16 %v2690, %v2686
    %v2771 = vpack.c.b16 %v2691, %v2687
    %v2772 = vpack.c.b16 %v2692, %v2688
    %v2773 = vpack.c.b16 %v2693, %v2689
    %v2774 = vpack.c.b16 %v2698, %v2694
    %v2775 = vpack.c.b16 %v2699, %v2695
    %v2776 = vpack.c.b16 %v2700, %v2696
    %v2777 = vpack.c.b16 %v2701, %v2697
    %v2778 = vpack.c.b16 %v2706, %v2702
    %v2779 = vpack.c.b16 %v2707, %v2703
    %v2780 = vpack.c.b16 %v2708, %v2704
    %v2781 = vpack.c.b16 %v2709, %v2705
    %v2782 = vpack.c.b16 %v2714, %v2710
    %v2783 = vpack.c.b16 %v2715, %v2711
    %v2784 = vpack.c.b16 %v2716, %v2712
    %v2785 = vpack.c.b16 %v2717, %v2713
    %v2786 = vpack.c.b16 %v2722, %v2718
    %v2787 = vpack.c.b16 %v2723, %v2719
    %v2788 = vpack.c.b16 %v2724, %v2720
    %v2789 = vpack.c.b16 %v2725, %v2721
    %2854 = vmatprep.subr.bf16.mxu0 %v2727
    %2855 = vmatpush1.bf16.msra.mxu0 %v2726
    %2856 = vmatprep.subr.bf16.mxu0 %v2731
    %2857 = vmatpush1.bf16.msra.mxu0 %v2730
    %2858 = vmatprep.subr.bf16.mxu0 %v2735
    %2859 = vmatpush1.bf16.msra.mxu0 %v2734
    %2860 = vmatprep.subr.bf16.mxu0 %v2739
    %2861 = vmatpush1.bf16.msra.mxu0 %v2738
    %2862 = vmatprep.subr.bf16.mxu0 %v2743
    %2863 = vmatpush1.bf16.msra.mxu0 %v2742
    %2864 = vmatprep.subr.bf16.mxu0 %v2747
    %2865 = vmatpush1.bf16.msra.mxu0 %v2746
    %2866 = vmatprep.subr.bf16.mxu0 %v2751
    %2867 = vmatpush1.bf16.msra.mxu0 %v2750
    %2868 = vmatprep.subr.bf16.mxu0 %v2755
    %2869 = vmatpush1.bf16.msra.mxu0 %v2754
    %2870 = vmatprep.subr.bf16.mxu0 %v2759
    %2871 = vmatpush1.bf16.msra.mxu0 %v2758
    %2872 = vmatprep.subr.bf16.mxu0 %v2763
    %2873 = vmatpush1.bf16.msra.mxu0 %v2762
    %2874 = vmatprep.subr.bf16.mxu0 %v2767
    %2875 = vmatpush1.bf16.msra.mxu0 %v2766
    %2876 = vmatprep.subr.bf16.mxu0 %v2771
    %2877 = vmatpush1.bf16.msra.mxu0 %v2770
    %2878 = vmatprep.subr.bf16.mxu0 %v2775
    %2879 = vmatpush1.bf16.msra.mxu0 %v2774
    %2880 = vmatprep.subr.bf16.mxu0 %v2779
    %2881 = vmatpush1.bf16.msra.mxu0 %v2778
    %2882 = vmatprep.subr.bf16.mxu0 %v2783
    %2883 = vmatpush1.bf16.msra.mxu0 %v2782
    %2884 = vmatprep.subr.bf16.mxu0 %v2787
    %2885 = vmatpush1.bf16.msra.mxu0 %v2786
    %2886 = vmatprep.mubr.bf16.mxu0 %v2462
    %2887 = vmatmul.mubr.bf16.gmra.mrb[0].mxu0 %v2461
    %v2888 = vpop.f32.mrb[0].mxu0
    %v2889 = vadd.f32 0.0, %v2888
    %v2890 = vpop.f32.mrb[0].mxu0
    %v2891 = vadd.f32 0.0, %v2890
    %v2892 = vpop.f32.mrb[0].mxu0
    %v2893 = vadd.f32 0.0, %v2892
    %v2894 = vpop.f32.mrb[0].mxu0
    %v2895 = vadd.f32 0.0, %v2894
    %2896 = vmatprep.mubr.bf16.mxu0 %v2464
    %2897 = vmatmul.mubr.bf16.gmra.mrb[0].mxu0 %v2463
    %v2898 = vpop.f32.mrb[0].mxu0
    %v2899 = vadd.f32 0.0, %v2898
    %v2900 = vpop.f32.mrb[0].mxu0
    %v2901 = vadd.f32 0.0, %v2900
    %v2902 = vpop.f32.mrb[0].mxu0
    %v2903 = vadd.f32 0.0, %v2902
    %v2904 = vpop.f32.mrb[0].mxu0
    %v2905 = vadd.f32 0.0, %v2904
    %2906 = vmatprep.mubr.bf16.mxu0 %v2466
    %2907 = vmatmul.mubr.bf16.gmra.mrb[0].mxu0 %v2465
    %v2908 = vpop.f32.mrb[0].mxu0
    %v2909 = vadd.f32 0.0, %v2908
    %v2910 = vpop.f32.mrb[0].mxu0
    %v2911 = vadd.f32 0.0, %v2910
    %v2912 = vpop.f32.mrb[0].mxu0
    %v2913 = vadd.f32 0.0, %v2912
    %v2914 = vpop.f32.mrb[0].mxu0
    %v2915 = vadd.f32 0.0, %v2914
    %2916 = vmatprep.mubr.bf16.mxu0 %v2468
    %2917 = vmatmul.mubr.bf16.gmra.mrb[0].mxu0 %v2467
    %v2918 = vpop.f32.mrb[0].mxu0
    %v2919 = vadd.f32 0.0, %v2918
    %v2920 = vpop.f32.mrb[0].mxu0
    %v2921 = vadd.f32 0.0, %v2920
    %v2922 = vpop.f32.mrb[0].mxu0
    %v2923 = vpop.f32.mrb[0].mxu0
    %2924 = vdwg.mxu0
    %2925 = vmatprep.subr.bf16.mxu0 %v2729
    %2926 = vmatpush1.bf16.msra.mxu0 %v2728
    %2927 = vmatprep.subr.bf16.mxu0 %v2733
    %2928 = vmatpush1.bf16.msra.mxu0 %v2732
    %2929 = vmatprep.subr.bf16.mxu0 %v2737
    %2930 = vmatpush1.bf16.msra.mxu0 %v2736
    %2931 = vmatprep.subr.bf16.mxu0 %v2741
    %2932 = vmatpush1.bf16.msra.mxu0 %v2740
    %2933 = vmatprep.subr.bf16.mxu0 %v2745
    %2934 = vmatpush1.bf16.msra.mxu0 %v2744
    %2935 = vmatprep.subr.bf16.mxu0 %v2749
    %2936 = vmatpush1.bf16.msra.mxu0 %v2748
    %2937 = vmatprep.subr.bf16.mxu0 %v2753
    %2938 = vmatpush1.bf16.msra.mxu0 %v2752
    %2939 = vmatprep.subr.bf16.mxu0 %v2757
    %2940 = vmatpush1.bf16.msra.mxu0 %v2756
    %2941 = vmatprep.subr.bf16.mxu0 %v2761
    %2942 = vmatpush1.bf16.msra.mxu0 %v2760
    %2943 = vmatprep.subr.bf16.mxu0 %v2765
    %2944 = vmatpush1.bf16.msra.mxu0 %v2764
    %2945 = vmatprep.subr.bf16.mxu0 %v2769
    %2946 = vmatpush1.bf16.msra.mxu0 %v2768
    %2947 = vmatprep.subr.bf16.mxu0 %v2773
    %2948 = vmatpush1.bf16.msra.mxu0 %v2772
    %2949 = vmatprep.subr.bf16.mxu0 %v2777
    %2950 = vmatpush1.bf16.msra.mxu0 %v2776
    %2951 = vmatprep.subr.bf16.mxu0 %v2781
    %2952 = vmatpush1.bf16.msra.mxu0 %v2780
    %2953 = vmatprep.subr.bf16.mxu0 %v2785
    %2954 = vmatpush1.bf16.msra.mxu0 %v2784
    %2955 = vmatprep.subr.bf16.mxu0 %v2789
    %2956 = vmatpush1.bf16.msra.mxu0 %v2788
    %2957 = vmatprep.mubr.bf16.mxu0 %v2462
    %2958 = vmatmul.mubr.bf16.gmra.mrb[0].mxu0 %v2461
    %v2959 = vpop.f32.mrb[0].mxu0
    %v2960 = vadd.f32 0.0, %v2959
    %v2961 = vpop.f32.mrb[0].mxu0
    %v2962 = vadd.f32 0.0, %v2961
    %v2963 = vpop.f32.mrb[0].mxu0
    %v2964 = vadd.f32 0.0, %v2963
    %v2965 = vpop.f32.mrb[0].mxu0
    %v2966 = vadd.f32 0.0, %v2965
    %2967 = vmatprep.mubr.bf16.mxu0 %v2464
    %2968 = vmatmul.mubr.bf16.gmra.mrb[0].mxu0 %v2463
    %v2969 = vpop.f32.mrb[0].mxu0
    %v2970 = vadd.f32 0.0, %v2969
    %v2971 = vpop.f32.mrb[0].mxu0
    %v2972 = vadd.f32 0.0, %v2971
    %v2973 = vpop.f32.mrb[0].mxu0
    %v2974 = vadd.f32 0.0, %v2973
    %v2975 = vpop.f32.mrb[0].mxu0
    %v2976 = vadd.f32 0.0, %v2975
    %2977 = vmatprep.mubr.bf16.mxu0 %v2466
    %2978 = vmatmul.mubr.bf16.gmra.mrb[0].mxu0 %v2465
    %v2979 = vpop.f32.mrb[0].mxu0
    %v2980 = vadd.f32 0.0, %v2979
    %v2981 = vpop.f32.mrb[0].mxu0
    %v2982 = vadd.f32 0.0, %v2981
    %v2983 = vpop.f32.mrb[0].mxu0
    %v2984 = vadd.f32 0.0, %v2983
    %v2985 = vpop.f32.mrb[0].mxu0
    %v2986 = vadd.f32 0.0, %v2985
    %2987 = vmatprep.mubr.bf16.mxu0 %v2468
    %2988 = vmatmul.mubr.bf16.gmra.mrb[0].mxu0 %v2467
    %v2989 = vpop.f32.mrb[0].mxu0
    %v2990 = vadd.f32 0.0, %v2989
    %v2991 = vpop.f32.mrb[0].mxu0
    %v2992 = vadd.f32 0.0, %v2991
    %v2993 = vpop.f32.mrb[0].mxu0
    %v2994 = vpop.f32.mrb[0].mxu0
    %2995 = vdwg.mxu0
    %v2996 = vadd.f32 %v2340, %v2889
    %v2997 = vadd.f32 %v2342, %v2891
    %v2998 = vadd.f32 %v2411, %v2960
    %v2999 = vadd.f32 %v2413, %v2962
    %v3000 = vadd.f32 %v2344, %v2893
    %v3001 = vadd.f32 %v2346, %v2895
    %v3002 = vadd.f32 %v2415, %v2964
    %v3003 = vadd.f32 %v2417, %v2966
    %v3004 = vadd.f32 %v2350, %v2899
    %v3005 = vadd.f32 %v2352, %v2901
    %v3006 = vadd.f32 %v2421, %v2970
    %v3007 = vadd.f32 %v2423, %v2972
    %v3008 = vadd.f32 %v2354, %v2903
    %v3009 = vadd.f32 %v2356, %v2905
    %v3010 = vadd.f32 %v2425, %v2974
    %v3011 = vadd.f32 %v2427, %v2976
    %v3012 = vadd.f32 %v2360, %v2909
    %v3013 = vadd.f32 %v2362, %v2911
    %v3014 = vadd.f32 %v2431, %v2980
    %v3015 = vadd.f32 %v2433, %v2982
    %v3016 = vadd.f32 %v2364, %v2913
    %v3017 = vadd.f32 %v2366, %v2915
    %v3018 = vadd.f32 %v2435, %v2984
    %v3019 = vadd.f32 %v2437, %v2986
    %v3020 = vadd.f32 %v2370, %v2919
    %v3021 = vadd.f32 %v2372, %v2921
    %v3022 = vadd.f32 %v2441, %v2990
    %v3023 = vadd.f32 %v2443, %v2992
    %v3024 = vld [vmem:[%s4] sm:$0xf]
    %v3026 = vlaneseq
    %v3027 = vshrl.u32 %v3026, 7
    %v3028 = vsub.s32 0, %v3027
    %v3029 = vrot.slane %v3024, %v3028
    %v3030 = vlaneseq
    %v3031 = vshrl.u32 %v3030, 7
    %v3032 = vsub.s32 1, %v3031
    %v3033 = vrot.slane %v3024, %v3032
    %v3034 = vlaneseq
    %v3035 = vshrl.u32 %v3034, 7
    %v3036 = vsub.s32 2, %v3035
    %v3037 = vrot.slane %v3024, %v3036
    %v3038 = vlaneseq
    %v3039 = vshrl.u32 %v3038, 7
    %v3040 = vsub.s32 3, %v3039
    %v3041 = vrot.slane %v3024, %v3040
    %v3046 = vadd.f32 %v2996, %v3029
    %v3047 = vadd.f32 %v2997, %v3033
    %v3048 = vadd.f32 %v2998, %v3037
    %v3049 = vadd.f32 %v2999, %v3041
    %v3050 = vadd.f32 %v3000, %v3029
    %v3051 = vadd.f32 %v3001, %v3033
    %v3052 = vadd.f32 %v3002, %v3037
    %v3053 = vadd.f32 %v3003, %v3041
    %v3054 = vadd.f32 %v3004, %v3029
    %v3055 = vadd.f32 %v3005, %v3033
    %v3056 = vadd.f32 %v3006, %v3037
    %v3057 = vadd.f32 %v3007, %v3041
    %v3058 = vadd.f32 %v3008, %v3029
    %v3059 = vadd.f32 %v3009, %v3033
    %v3060 = vadd.f32 %v3010, %v3037
    %v3061 = vadd.f32 %v3011, %v3041
    %v3062 = vadd.f32 %v3012, %v3029
    %v3063 = vadd.f32 %v3013, %v3033
    %v3064 = vadd.f32 %v3014, %v3037
    %v3065 = vadd.f32 %v3015, %v3041
    %v3066 = vadd.f32 %v3016, %v3029
    %v3067 = vadd.f32 %v3017, %v3033
    %v3068 = vadd.f32 %v3018, %v3037
    %v3069 = vadd.f32 %v3019, %v3041
    %v3070 = vadd.f32 %v3020, %v3029
    %v3071 = vadd.f32 %v3021, %v3033
    %v3072 = vadd.f32 %v3022, %v3037
    %v3073 = vadd.f32 %v3023, %v3041
    %v3074 = vmax.f32 %v3046, 0.0
    %v3075 = vmax.f32 %v3047, 0.0
    %v3076 = vmax.f32 %v3048, 0.0
    %v3077 = vmax.f32 %v3049, 0.0
    %v3078 = vmax.f32 %v3050, 0.0
    %v3079 = vmax.f32 %v3051, 0.0
    %v3080 = vmax.f32 %v3052, 0.0
    %v3081 = vmax.f32 %v3053, 0.0
    %v3082 = vmax.f32 %v3054, 0.0
    %v3083 = vmax.f32 %v3055, 0.0
    %v3084 = vmax.f32 %v3056, 0.0
    %v3085 = vmax.f32 %v3057, 0.0
    %v3086 = vmax.f32 %v3058, 0.0
    %v3087 = vmax.f32 %v3059, 0.0
    %v3088 = vmax.f32 %v3060, 0.0
    %v3089 = vmax.f32 %v3061, 0.0
    %v3090 = vmax.f32 %v3062, 0.0
    %v3091 = vmax.f32 %v3063, 0.0
    %v3092 = vmax.f32 %v3064, 0.0
    %v3093 = vmax.f32 %v3065, 0.0
    %v3094 = vmax.f32 %v3066, 0.0
    %v3095 = vmax.f32 %v3067, 0.0
    %v3096 = vmax.f32 %v3068, 0.0
    %v3097 = vmax.f32 %v3069, 0.0
    %v3098 = vmax.f32 %v3070, 0.0
    %v3099 = vmax.f32 %v3071, 0.0
    %v3100 = vmax.f32 %v3072, 0.0
    %v3101 = vmax.f32 %v3073, 0.0
    %v3102 = vmax.f32 %v3074, %v3076
    %v3103 = vmax.f32 %v3075, %v3077
    %v3104 = vmax.f32 %v3078, %v3080
    %v3105 = vmax.f32 %v3079, %v3081
    %v3106 = vmax.f32 %v3082, %v3084
    %v3107 = vmax.f32 %v3083, %v3085
    %v3108 = vmax.f32 %v3086, %v3088
    %v3109 = vmax.f32 %v3087, %v3089
    %v3110 = vmax.f32 %v3090, %v3092
    %v3111 = vmax.f32 %v3091, %v3093
    %v3112 = vmax.f32 %v3094, %v3096
    %v3113 = vmax.f32 %v3095, %v3097
    %v3114 = vmax.f32 %v3098, %v3100
    %v3115 = vmax.f32 %v3099, %v3101
    %3116 = vmatprep.subr.bf16.mxu0 %v1716
    %3117 = vmatpush1.bf16.msra.mxu0 %v1715
    %3118 = vmatprep.subr.bf16.mxu0 %v1720
    %3119 = vmatpush1.bf16.msra.mxu0 %v1719
    %3120 = vmatprep.subr.bf16.mxu0 %v1724
    %3121 = vmatpush1.bf16.msra.mxu0 %v1723
    %3122 = vmatprep.subr.bf16.mxu0 %v1728
    %3123 = vmatpush1.bf16.msra.mxu0 %v1727
    %3124 = vmatprep.subr.bf16.mxu0 %v1732
    %3125 = vmatpush1.bf16.msra.mxu0 %v1731
    %3126 = vmatprep.subr.bf16.mxu0 %v1736
    %3127 = vmatpush1.bf16.msra.mxu0 %v1735
    %3128 = vmatprep.subr.bf16.mxu0 %v1740
    %3129 = vmatpush1.bf16.msra.mxu0 %v1739
    %3130 = vmatprep.subr.bf16.mxu0 %v1744
    %3131 = vmatpush1.bf16.msra.mxu0 %v1743
    %3132 = vmatprep.subr.bf16.mxu0 %v1748
    %3133 = vmatpush1.bf16.msra.mxu0 %v1747
    %3134 = vmatprep.subr.bf16.mxu0 %v1752
    %3135 = vmatpush1.bf16.msra.mxu0 %v1751
    %3136 = vmatprep.subr.bf16.mxu0 %v1756
    %3137 = vmatpush1.bf16.msra.mxu0 %v1755
    %3138 = vmatprep.subr.bf16.mxu0 %v1760
    %3139 = vmatpush1.bf16.msra.mxu0 %v1759
    %3140 = vmatprep.subr.bf16.mxu0 %v1764
    %3141 = vmatpush1.bf16.msra.mxu0 %v1763
    %3142 = vmatprep.subr.bf16.mxu0 %v1768
    %3143 = vmatpush1.bf16.msra.mxu0 %v1767
    %3144 = vmatprep.subr.bf16.mxu0 %v1772
    %3145 = vmatpush1.bf16.msra.mxu0 %v1771
    %3146 = vmatprep.subr.bf16.mxu0 %v1776
    %3147 = vmatpush1.bf16.msra.mxu0 %v1775
    %3148 = vmatprep.mubr.bf16.mxu0 %v2462
    %3149 = vmatmul.mubr.bf16.gmra.mrb[0].mxu0 %v2461
    %v3150 = vpop.f32.mrb[0].mxu0
    %v3151 = vadd.f32 0.0, %v3150
    %v3152 = vpop.f32.mrb[0].mxu0
    %v3153 = vadd.f32 0.0, %v3152
    %v3154 = vpop.f32.mrb[0].mxu0
    %v3155 = vadd.f32 0.0, %v3154
    %v3156 = vpop.f32.mrb[0].mxu0
    %v3157 = vadd.f32 0.0, %v3156
    %3158 = vmatprep.mubr.bf16.mxu0 %v2464
    %3159 = vmatmul.mubr.bf16.gmra.mrb[0].mxu0 %v2463
    %v3160 = vpop.f32.mrb[0].mxu0
    %v3161 = vadd.f32 0.0, %v3160
    %v3162 = vpop.f32.mrb[0].mxu0
    %v3163 = vadd.f32 0.0, %v3162
    %v3164 = vpop.f32.mrb[0].mxu0
    %v3165 = vadd.f32 0.0, %v3164
    %v3166 = vpop.f32.mrb[0].mxu0
    %v3167 = vadd.f32 0.0, %v3166
    %3168 = vmatprep.mubr.bf16.mxu0 %v2466
    %3169 = vmatmul.mubr.bf16.gmra.mrb[0].mxu0 %v2465
    %v3170 = vpop.f32.mrb[0].mxu0
    %v3171 = vadd.f32 0.0, %v3170
    %v3172 = vpop.f32.mrb[0].mxu0
    %v3173 = vadd.f32 0.0, %v3172
    %v3174 = vpop.f32.mrb[0].mxu0
    %v3175 = vadd.f32 0.0, %v3174
    %v3176 = vpop.f32.mrb[0].mxu0
    %v3177 = vadd.f32 0.0, %v3176
    %3178 = vmatprep.mubr.bf16.mxu0 %v2468
    %3179 = vmatmul.mubr.bf16.gmra.mrb[0].mxu0 %v2467
    %v3180 = vpop.f32.mrb[0].mxu0
    %v3181 = vadd.f32 0.0, %v3180
    %v3182 = vpop.f32.mrb[0].mxu0
    %v3183 = vadd.f32 0.0, %v3182
    %v3184 = vpop.f32.mrb[0].mxu0
    %v3185 = vpop.f32.mrb[0].mxu0
    %3186 = vdwg.mxu0
    %3187 = vmatprep.subr.bf16.mxu0 %v1718
    %3188 = vmatpush1.bf16.msra.mxu0 %v1717
    %3189 = vmatprep.subr.bf16.mxu0 %v1722
    %3190 = vmatpush1.bf16.msra.mxu0 %v1721
    %3191 = vmatprep.subr.bf16.mxu0 %v1726
    %3192 = vmatpush1.bf16.msra.mxu0 %v1725
    %3193 = vmatprep.subr.bf16.mxu0 %v1730
    %3194 = vmatpush1.bf16.msra.mxu0 %v1729
    %3195 = vmatprep.subr.bf16.mxu0 %v1734
    %3196 = vmatpush1.bf16.msra.mxu0 %v1733
    %3197 = vmatprep.subr.bf16.mxu0 %v1738
    %3198 = vmatpush1.bf16.msra.mxu0 %v1737
    %3199 = vmatprep.subr.bf16.mxu0 %v1742
    %3200 = vmatpush1.bf16.msra.mxu0 %v1741
    %3201 = vmatprep.subr.bf16.mxu0 %v1746
    %3202 = vmatpush1.bf16.msra.mxu0 %v1745
    %3203 = vmatprep.subr.bf16.mxu0 %v1750
    %3204 = vmatpush1.bf16.msra.mxu0 %v1749
    %3205 = vmatprep.subr.bf16.mxu0 %v1754
    %3206 = vmatpush1.bf16.msra.mxu0 %v1753
    %3207 = vmatprep.subr.bf16.mxu0 %v1758
    %3208 = vmatpush1.bf16.msra.mxu0 %v1757
    %3209 = vmatprep.subr.bf16.mxu0 %v1762
    %3210 = vmatpush1.bf16.msra.mxu0 %v1761
    %3211 = vmatprep.subr.bf16.mxu0 %v1766
    %3212 = vmatpush1.bf16.msra.mxu0 %v1765
    %3213 = vmatprep.subr.bf16.mxu0 %v1770
    %3214 = vmatpush1.bf16.msra.mxu0 %v1769
    %3215 = vmatprep.subr.bf16.mxu0 %v1774
    %3216 = vmatpush1.bf16.msra.mxu0 %v1773
    %3217 = vmatprep.subr.bf16.mxu0 %v1778
    %3218 = vmatpush1.bf16.msra.mxu0 %v1777
    %3219 = vmatprep.mubr.bf16.mxu0 %v2462
    %3220 = vmatmul.mubr.bf16.gmra.mrb[0].mxu0 %v2461
    %v3221 = vpop.f32.mrb[0].mxu0
    %v3222 = vadd.f32 0.0, %v3221
    %v3223 = vpop.f32.mrb[0].mxu0
    %v3224 = vadd.f32 0.0, %v3223
    %v3225 = vpop.f32.mrb[0].mxu0
    %v3226 = vadd.f32 0.0, %v3225
    %v3227 = vpop.f32.mrb[0].mxu0
    %v3228 = vadd.f32 0.0, %v3227
    %3229 = vmatprep.mubr.bf16.mxu0 %v2464
    %3230 = vmatmul.mubr.bf16.gmra.mrb[0].mxu0 %v2463
    %v3231 = vpop.f32.mrb[0].mxu0
    %v3232 = vadd.f32 0.0, %v3231
    %v3233 = vpop.f32.mrb[0].mxu0
    %v3234 = vadd.f32 0.0, %v3233
    %v3235 = vpop.f32.mrb[0].mxu0
    %v3236 = vadd.f32 0.0, %v3235
    %v3237 = vpop.f32.mrb[0].mxu0
    %v3238 = vadd.f32 0.0, %v3237
    %3239 = vmatprep.mubr.bf16.mxu0 %v2466
    %3240 = vmatmul.mubr.bf16.gmra.mrb[0].mxu0 %v2465
    %v3241 = vpop.f32.mrb[0].mxu0
    %v3242 = vadd.f32 0.0, %v3241
    %v3243 = vpop.f32.mrb[0].mxu0
    %v3244 = vadd.f32 0.0, %v3243
    %v3245 = vpop.f32.mrb[0].mxu0
    %v3246 = vadd.f32 0.0, %v3245
    %v3247 = vpop.f32.mrb[0].mxu0
    %v3248 = vadd.f32 0.0, %v3247
    %3249 = vmatprep.mubr.bf16.mxu0 %v2468
    %3250 = vmatmul.mubr.bf16.gmra.mrb[0].mxu0 %v2467
    %v3251 = vpop.f32.mrb[0].mxu0
    %v3252 = vadd.f32 0.0, %v3251
    %v3253 = vpop.f32.mrb[0].mxu0
    %v3254 = vadd.f32 0.0, %v3253
    %v3255 = vpop.f32.mrb[0].mxu0
    %v3256 = vpop.f32.mrb[0].mxu0
    %3257 = vdwg.mxu0
    %3258 = vmatprep.subr.bf16.mxu0 %v2178
    %3259 = vmatpush1.bf16.msra.mxu0 %v2177
    %3260 = vmatprep.subr.bf16.mxu0 %v2182
    %3261 = vmatpush1.bf16.msra.mxu0 %v2181
    %3262 = vmatprep.subr.bf16.mxu0 %v2186
    %3263 = vmatpush1.bf16.msra.mxu0 %v2185
    %3264 = vmatprep.subr.bf16.mxu0 %v2190
    %3265 = vmatpush1.bf16.msra.mxu0 %v2189
    %3266 = vmatprep.subr.bf16.mxu0 %v2194
    %3267 = vmatpush1.bf16.msra.mxu0 %v2193
    %3268 = vmatprep.subr.bf16.mxu0 %v2198
    %3269 = vmatpush1.bf16.msra.mxu0 %v2197
    %3270 = vmatprep.subr.bf16.mxu0 %v2202
    %3271 = vmatpush1.bf16.msra.mxu0 %v2201
    %3272 = vmatprep.subr.bf16.mxu0 %v2206
    %3273 = vmatpush1.bf16.msra.mxu0 %v2205
    %3274 = vmatprep.subr.bf16.mxu0 %v2210
    %3275 = vmatpush1.bf16.msra.mxu0 %v2209
    %3276 = vmatprep.subr.bf16.mxu0 %v2214
    %3277 = vmatpush1.bf16.msra.mxu0 %v2213
    %3278 = vmatprep.subr.bf16.mxu0 %v2218
    %3279 = vmatpush1.bf16.msra.mxu0 %v2217
    %3280 = vmatprep.subr.bf16.mxu0 %v2222
    %3281 = vmatpush1.bf16.msra.mxu0 %v2221
    %3282 = vmatprep.subr.bf16.mxu0 %v2226
    %3283 = vmatpush1.bf16.msra.mxu0 %v2225
    %3284 = vmatprep.subr.bf16.mxu0 %v2230
    %3285 = vmatpush1.bf16.msra.mxu0 %v2229
    %3286 = vmatprep.subr.bf16.mxu0 %v2234
    %3287 = vmatpush1.bf16.msra.mxu0 %v2233
    %3288 = vmatprep.subr.bf16.mxu0 %v2238
    %3289 = vmatpush1.bf16.msra.mxu0 %v2237
    %3290 = vmatprep.mubr.bf16.mxu0 %v1451
    %3291 = vmatmul.mubr.bf16.gmra.mrb[0].mxu0 %v1450
    %v3292 = vpop.f32.mrb[0].mxu0
    %v3293 = vadd.f32 %v3151, %v3292
    %v3294 = vpop.f32.mrb[0].mxu0
    %v3295 = vadd.f32 %v3153, %v3294
    %v3296 = vpop.f32.mrb[0].mxu0
    %v3297 = vadd.f32 %v3155, %v3296
    %v3298 = vpop.f32.mrb[0].mxu0
    %v3299 = vadd.f32 %v3157, %v3298
    %3300 = vmatprep.mubr.bf16.mxu0 %v1453
    %3301 = vmatmul.mubr.bf16.gmra.mrb[0].mxu0 %v1452
    %v3302 = vpop.f32.mrb[0].mxu0
    %v3303 = vadd.f32 %v3161, %v3302
    %v3304 = vpop.f32.mrb[0].mxu0
    %v3305 = vadd.f32 %v3163, %v3304
    %v3306 = vpop.f32.mrb[0].mxu0
    %v3307 = vadd.f32 %v3165, %v3306
    %v3308 = vpop.f32.mrb[0].mxu0
    %v3309 = vadd.f32 %v3167, %v3308
    %3310 = vmatprep.mubr.bf16.mxu0 %v1455
    %3311 = vmatmul.mubr.bf16.gmra.mrb[0].mxu0 %v1454
    %v3312 = vpop.f32.mrb[0].mxu0
    %v3313 = vadd.f32 %v3171, %v3312
    %v3314 = vpop.f32.mrb[0].mxu0
    %v3315 = vadd.f32 %v3173, %v3314
    %v3316 = vpop.f32.mrb[0].mxu0
    %v3317 = vadd.f32 %v3175, %v3316
    %v3318 = vpop.f32.mrb[0].mxu0
    %v3319 = vadd.f32 %v3177, %v3318
    %3320 = vmatprep.mubr.bf16.mxu0 %v1457
    %3321 = vmatmul.mubr.bf16.gmra.mrb[0].mxu0 %v1456
    %v3322 = vpop.f32.mrb[0].mxu0
    %v3323 = vadd.f32 %v3181, %v3322
    %v3324 = vpop.f32.mrb[0].mxu0
    %v3325 = vadd.f32 %v3183, %v3324
    %v3326 = vpop.f32.mrb[0].mxu0
    %v3327 = vpop.f32.mrb[0].mxu0
    %3328 = vdwg.mxu0
    %3329 = vmatprep.subr.bf16.mxu0 %v2180
    %3330 = vmatpush1.bf16.msra.mxu0 %v2179
    %3331 = vmatprep.subr.bf16.mxu0 %v2184
    %3332 = vmatpush1.bf16.msra.mxu0 %v2183
    %3333 = vmatprep.subr.bf16.mxu0 %v2188
    %3334 = vmatpush1.bf16.msra.mxu0 %v2187
    %3335 = vmatprep.subr.bf16.mxu0 %v2192
    %3336 = vmatpush1.bf16.msra.mxu0 %v2191
    %3337 = vmatprep.subr.bf16.mxu0 %v2196
    %3338 = vmatpush1.bf16.msra.mxu0 %v2195
    %3339 = vmatprep.subr.bf16.mxu0 %v2200
    %3340 = vmatpush1.bf16.msra.mxu0 %v2199
    %3341 = vmatprep.subr.bf16.mxu0 %v2204
    %3342 = vmatpush1.bf16.msra.mxu0 %v2203
    %3343 = vmatprep.subr.bf16.mxu0 %v2208
    %3344 = vmatpush1.bf16.msra.mxu0 %v2207
    %3345 = vmatprep.subr.bf16.mxu0 %v2212
    %3346 = vmatpush1.bf16.msra.mxu0 %v2211
    %3347 = vmatprep.subr.bf16.mxu0 %v2216
    %3348 = vmatpush1.bf16.msra.mxu0 %v2215
    %3349 = vmatprep.subr.bf16.mxu0 %v2220
    %3350 = vmatpush1.bf16.msra.mxu0 %v2219
    %3351 = vmatprep.subr.bf16.mxu0 %v2224
    %3352 = vmatpush1.bf16.msra.mxu0 %v2223
    %3353 = vmatprep.subr.bf16.mxu0 %v2228
    %3354 = vmatpush1.bf16.msra.mxu0 %v2227
    %3355 = vmatprep.subr.bf16.mxu0 %v2232
    %3356 = vmatpush1.bf16.msra.mxu0 %v2231
    %3357 = vmatprep.subr.bf16.mxu0 %v2236
    %3358 = vmatpush1.bf16.msra.mxu0 %v2235
    %3359 = vmatprep.subr.bf16.mxu0 %v2240
    %3360 = vmatpush1.bf16.msra.mxu0 %v2239
    %3361 = vmatprep.mubr.bf16.mxu0 %v1451
    %3362 = vmatmul.mubr.bf16.gmra.mrb[0].mxu0 %v1450
    %v3363 = vpop.f32.mrb[0].mxu0
    %v3364 = vadd.f32 %v3222, %v3363
    %v3365 = vpop.f32.mrb[0].mxu0
    %v3366 = vadd.f32 %v3224, %v3365
    %v3367 = vpop.f32.mrb[0].mxu0
    %v3368 = vadd.f32 %v3226, %v3367
    %v3369 = vpop.f32.mrb[0].mxu0
    %v3370 = vadd.f32 %v3228, %v3369
    %3371 = vmatprep.mubr.bf16.mxu0 %v1453
    %3372 = vmatmul.mubr.bf16.gmra.mrb[0].mxu0 %v1452
    %v3373 = vpop.f32.mrb[0].mxu0
    %v3374 = vadd.f32 %v3232, %v3373
    %v3375 = vpop.f32.mrb[0].mxu0
    %v3376 = vadd.f32 %v3234, %v3375
    %v3377 = vpop.f32.mrb[0].mxu0
    %v3378 = vadd.f32 %v3236, %v3377
    %v3379 = vpop.f32.mrb[0].mxu0
    %v3380 = vadd.f32 %v3238, %v3379
    %3381 = vmatprep.mubr.bf16.mxu0 %v1455
    %3382 = vmatmul.mubr.bf16.gmra.mrb[0].mxu0 %v1454
    %v3383 = vpop.f32.mrb[0].mxu0
    %v3384 = vadd.f32 %v3242, %v3383
    %v3385 = vpop.f32.mrb[0].mxu0
    %v3386 = vadd.f32 %v3244, %v3385
    %v3387 = vpop.f32.mrb[0].mxu0
    %v3388 = vadd.f32 %v3246, %v3387
    %v3389 = vpop.f32.mrb[0].mxu0
    %v3390 = vadd.f32 %v3248, %v3389
    %3391 = vmatprep.mubr.bf16.mxu0 %v1457
    %3392 = vmatmul.mubr.bf16.gmra.mrb[0].mxu0 %v1456
    %v3393 = vpop.f32.mrb[0].mxu0
    %v3394 = vadd.f32 %v3252, %v3393
    %v3395 = vpop.f32.mrb[0].mxu0
    %v3396 = vadd.f32 %v3254, %v3395
    %v3397 = vpop.f32.mrb[0].mxu0
    %v3398 = vpop.f32.mrb[0].mxu0
    %3399 = vdwg.mxu0
    %v3400 = vld [vmem:[#allocation2 + $0x20] sm:$0xff]
    %v3401 = vld [vmem:[#allocation2 + $0x28] sm:$0xff]
    %v3402 = vld [vmem:[#allocation2 + $0x30] sm:$0xff]
    %v3403 = vld [vmem:[#allocation2 + $0x38] sm:$0xff]
    %v3404 = vld [vmem:[#allocation2 + $0x40] sm:$0xff]
    %v3405 = vld [vmem:[#allocation2 + $0x48] sm:$0xff]
    %v3406 = vld [vmem:[#allocation2 + $0x50] sm:$0xff]
    %v3407 = vld [vmem:[#allocation2 + $0x58] sm:$0xff]
    %v3408 = vld [vmem:[#allocation2 + $0x60] sm:$0xff]
    %v3409 = vld [vmem:[#allocation2 + $0x68] sm:$0xff]
    %v3410 = vld [vmem:[#allocation2 + $0x70] sm:$0xff]
    %v3411 = vld [vmem:[#allocation2 + $0x78] sm:$0xff]
    %v3412 = vld [vmem:[#allocation2 + $0x80] sm:$0xff]
    %v3413 = vld [vmem:[#allocation2 + $0x88] sm:$0xff]
    %v3414 = vpack.c.bf16 %v3402, %v3400
    %v3415 = vpack.c.bf16 %v3403, %v3401
    %v3416 = vpack.c.bf16 %v3406, %v3404
    %v3417 = vpack.c.bf16 %v3407, %v3405
    %v3418 = vpack.c.bf16 %v3410, %v3408
    %v3419 = vpack.c.bf16 %v3411, %v3409
    %v3420 = vpack.c.bf16 %v3412, %v3412
    %v3421 = vpack.c.bf16 %v3413, %v3413
    %3422 = vmatprep.subr.bf16.mxu0 %v2727
    %3423 = vmatpush1.bf16.msra.mxu0 %v2726
    %3424 = vmatprep.subr.bf16.mxu0 %v2731
    %3425 = vmatpush1.bf16.msra.mxu0 %v2730
    %3426 = vmatprep.subr.bf16.mxu0 %v2735
    %3427 = vmatpush1.bf16.msra.mxu0 %v2734
    %3428 = vmatprep.subr.bf16.mxu0 %v2739
    %3429 = vmatpush1.bf16.msra.mxu0 %v2738
    %3430 = vmatprep.subr.bf16.mxu0 %v2743
    %3431 = vmatpush1.bf16.msra.mxu0 %v2742
    %3432 = vmatprep.subr.bf16.mxu0 %v2747
    %3433 = vmatpush1.bf16.msra.mxu0 %v2746
    %3434 = vmatprep.subr.bf16.mxu0 %v2751
    %3435 = vmatpush1.bf16.msra.mxu0 %v2750
    %3436 = vmatprep.subr.bf16.mxu0 %v2755
    %3437 = vmatpush1.bf16.msra.mxu0 %v2754
    %3438 = vmatprep.subr.bf16.mxu0 %v2759
    %3439 = vmatpush1.bf16.msra.mxu0 %v2758
    %3440 = vmatprep.subr.bf16.mxu0 %v2763
    %3441 = vmatpush1.bf16.msra.mxu0 %v2762
    %3442 = vmatprep.subr.bf16.mxu0 %v2767
    %3443 = vmatpush1.bf16.msra.mxu0 %v2766
    %3444 = vmatprep.subr.bf16.mxu0 %v2771
    %3445 = vmatpush1.bf16.msra.mxu0 %v2770
    %3446 = vmatprep.subr.bf16.mxu0 %v2775
    %3447 = vmatpush1.bf16.msra.mxu0 %v2774
    %3448 = vmatprep.subr.bf16.mxu0 %v2779
    %3449 = vmatpush1.bf16.msra.mxu0 %v2778
    %3450 = vmatprep.subr.bf16.mxu0 %v2783
    %3451 = vmatpush1.bf16.msra.mxu0 %v2782
    %3452 = vmatprep.subr.bf16.mxu0 %v2787
    %3453 = vmatpush1.bf16.msra.mxu0 %v2786
    %3454 = vmatprep.mubr.bf16.mxu0 %v3415
    %3455 = vmatmul.mubr.bf16.gmra.mrb[0].mxu0 %v3414
    %v3456 = vpop.f32.mrb[0].mxu0
    %v3457 = vadd.f32 0.0, %v3456
    %v3458 = vpop.f32.mrb[0].mxu0
    %v3459 = vadd.f32 0.0, %v3458
    %v3460 = vpop.f32.mrb[0].mxu0
    %v3461 = vadd.f32 0.0, %v3460
    %v3462 = vpop.f32.mrb[0].mxu0
    %v3463 = vadd.f32 0.0, %v3462
    %3464 = vmatprep.mubr.bf16.mxu0 %v3417
    %3465 = vmatmul.mubr.bf16.gmra.mrb[0].mxu0 %v3416
    %v3466 = vpop.f32.mrb[0].mxu0
    %v3467 = vadd.f32 0.0, %v3466
    %v3468 = vpop.f32.mrb[0].mxu0
    %v3469 = vadd.f32 0.0, %v3468
    %v3470 = vpop.f32.mrb[0].mxu0
    %v3471 = vadd.f32 0.0, %v3470
    %v3472 = vpop.f32.mrb[0].mxu0
    %v3473 = vadd.f32 0.0, %v3472
    %3474 = vmatprep.mubr.bf16.mxu0 %v3419
    %3475 = vmatmul.mubr.bf16.gmra.mrb[0].mxu0 %v3418
    %v3476 = vpop.f32.mrb[0].mxu0
    %v3477 = vadd.f32 0.0, %v3476
    %v3478 = vpop.f32.mrb[0].mxu0
    %v3479 = vadd.f32 0.0, %v3478
    %v3480 = vpop.f32.mrb[0].mxu0
    %v3481 = vadd.f32 0.0, %v3480
    %v3482 = vpop.f32.mrb[0].mxu0
    %v3483 = vadd.f32 0.0, %v3482
    %3484 = vmatprep.mubr.bf16.mxu0 %v3421
    %3485 = vmatmul.mubr.bf16.gmra.mrb[0].mxu0 %v3420
    %v3486 = vpop.f32.mrb[0].mxu0
    %v3487 = vadd.f32 0.0, %v3486
    %v3488 = vpop.f32.mrb[0].mxu0
    %v3489 = vadd.f32 0.0, %v3488
    %v3490 = vpop.f32.mrb[0].mxu0
    %v3491 = vpop.f32.mrb[0].mxu0
    %3492 = vdwg.mxu0
    %3493 = vmatprep.subr.bf16.mxu0 %v2729
    %3494 = vmatpush1.bf16.msra.mxu0 %v2728
    %3495 = vmatprep.subr.bf16.mxu0 %v2733
    %3496 = vmatpush1.bf16.msra.mxu0 %v2732
    %3497 = vmatprep.subr.bf16.mxu0 %v2737
    %3498 = vmatpush1.bf16.msra.mxu0 %v2736
    %3499 = vmatprep.subr.bf16.mxu0 %v2741
    %3500 = vmatpush1.bf16.msra.mxu0 %v2740
    %3501 = vmatprep.subr.bf16.mxu0 %v2745
    %3502 = vmatpush1.bf16.msra.mxu0 %v2744
    %3503 = vmatprep.subr.bf16.mxu0 %v2749
    %3504 = vmatpush1.bf16.msra.mxu0 %v2748
    %3505 = vmatprep.subr.bf16.mxu0 %v2753
    %3506 = vmatpush1.bf16.msra.mxu0 %v2752
    %3507 = vmatprep.subr.bf16.mxu0 %v2757
    %3508 = vmatpush1.bf16.msra.mxu0 %v2756
    %3509 = vmatprep.subr.bf16.mxu0 %v2761
    %3510 = vmatpush1.bf16.msra.mxu0 %v2760
    %3511 = vmatprep.subr.bf16.mxu0 %v2765
    %3512 = vmatpush1.bf16.msra.mxu0 %v2764
    %3513 = vmatprep.subr.bf16.mxu0 %v2769
    %3514 = vmatpush1.bf16.msra.mxu0 %v2768
    %3515 = vmatprep.subr.bf16.mxu0 %v2773
    %3516 = vmatpush1.bf16.msra.mxu0 %v2772
    %3517 = vmatprep.subr.bf16.mxu0 %v2777
    %3518 = vmatpush1.bf16.msra.mxu0 %v2776
    %3519 = vmatprep.subr.bf16.mxu0 %v2781
    %3520 = vmatpush1.bf16.msra.mxu0 %v2780
    %3521 = vmatprep.subr.bf16.mxu0 %v2785
    %3522 = vmatpush1.bf16.msra.mxu0 %v2784
    %3523 = vmatprep.subr.bf16.mxu0 %v2789
    %3524 = vmatpush1.bf16.msra.mxu0 %v2788
    %3525 = vmatprep.mubr.bf16.mxu0 %v3415
    %3526 = vmatmul.mubr.bf16.gmra.mrb[0].mxu0 %v3414
    %v3527 = vpop.f32.mrb[0].mxu0
    %v3528 = vadd.f32 0.0, %v3527
    %v3529 = vpop.f32.mrb[0].mxu0
    %v3530 = vadd.f32 0.0, %v3529
    %v3531 = vpop.f32.mrb[0].mxu0
    %v3532 = vadd.f32 0.0, %v3531
    %v3533 = vpop.f32.mrb[0].mxu0
    %v3534 = vadd.f32 0.0, %v3533
    %3535 = vmatprep.mubr.bf16.mxu0 %v3417
    %3536 = vmatmul.mubr.bf16.gmra.mrb[0].mxu0 %v3416
    %v3537 = vpop.f32.mrb[0].mxu0
    %v3538 = vadd.f32 0.0, %v3537
    %v3539 = vpop.f32.mrb[0].mxu0
    %v3540 = vadd.f32 0.0, %v3539
    %v3541 = vpop.f32.mrb[0].mxu0
    %v3542 = vadd.f32 0.0, %v3541
    %v3543 = vpop.f32.mrb[0].mxu0
    %v3544 = vadd.f32 0.0, %v3543
    %3545 = vmatprep.mubr.bf16.mxu0 %v3419
    %3546 = vmatmul.mubr.bf16.gmra.mrb[0].mxu0 %v3418
    %v3547 = vpop.f32.mrb[0].mxu0
    %v3548 = vadd.f32 0.0, %v3547
    %v3549 = vpop.f32.mrb[0].mxu0
    %v3550 = vadd.f32 0.0, %v3549
    %v3551 = vpop.f32.mrb[0].mxu0
    %v3552 = vadd.f32 0.0, %v3551
    %v3553 = vpop.f32.mrb[0].mxu0
    %v3554 = vadd.f32 0.0, %v3553
    %3555 = vmatprep.mubr.bf16.mxu0 %v3421
    %3556 = vmatmul.mubr.bf16.gmra.mrb[0].mxu0 %v3420
    %v3557 = vpop.f32.mrb[0].mxu0
    %v3558 = vadd.f32 0.0, %v3557
    %v3559 = vpop.f32.mrb[0].mxu0
    %v3560 = vadd.f32 0.0, %v3559
    %v3561 = vpop.f32.mrb[0].mxu0
    %v3562 = vpop.f32.mrb[0].mxu0
    %3563 = vdwg.mxu0
    %v3564 = vadd.f32 %v3293, %v3457
    %v3565 = vadd.f32 %v3295, %v3459
    %v3566 = vadd.f32 %v3364, %v3528
    %v3567 = vadd.f32 %v3366, %v3530
    %v3568 = vadd.f32 %v3297, %v3461
    %v3569 = vadd.f32 %v3299, %v3463
    %v3570 = vadd.f32 %v3368, %v3532
    %v3571 = vadd.f32 %v3370, %v3534
    %v3572 = vadd.f32 %v3303, %v3467
    %v3573 = vadd.f32 %v3305, %v3469
    %v3574 = vadd.f32 %v3374, %v3538
    %v3575 = vadd.f32 %v3376, %v3540
    %v3576 = vadd.f32 %v3307, %v3471
    %v3577 = vadd.f32 %v3309, %v3473
    %v3578 = vadd.f32 %v3378, %v3542
    %v3579 = vadd.f32 %v3380, %v3544
    %v3580 = vadd.f32 %v3313, %v3477
    %v3581 = vadd.f32 %v3315, %v3479
    %v3582 = vadd.f32 %v3384, %v3548
    %v3583 = vadd.f32 %v3386, %v3550
    %v3584 = vadd.f32 %v3317, %v3481
    %v3585 = vadd.f32 %v3319, %v3483
    %v3586 = vadd.f32 %v3388, %v3552
    %v3587 = vadd.f32 %v3390, %v3554
    %v3588 = vadd.f32 %v3323, %v3487
    %v3589 = vadd.f32 %v3325, %v3489
    %v3590 = vadd.f32 %v3394, %v3558
    %v3591 = vadd.f32 %v3396, %v3560
    %v3592 = vadd.f32 %v3564, %v3029
    %v3593 = vadd.f32 %v3565, %v3033
    %v3594 = vadd.f32 %v3566, %v3037
    %v3595 = vadd.f32 %v3567, %v3041
    %v3596 = vadd.f32 %v3568, %v3029
    %v3597 = vadd.f32 %v3569, %v3033
    %v3598 = vadd.f32 %v3570, %v3037
    %v3599 = vadd.f32 %v3571, %v3041
    %v3600 = vadd.f32 %v3572, %v3029
    %v3601 = vadd.f32 %v3573, %v3033
    %v3602 = vadd.f32 %v3574, %v3037
    %v3603 = vadd.f32 %v3575, %v3041
    %v3604 = vadd.f32 %v3576, %v3029
    %v3605 = vadd.f32 %v3577, %v3033
    %v3606 = vadd.f32 %v3578, %v3037
    %v3607 = vadd.f32 %v3579, %v3041
    %v3608 = vadd.f32 %v3580, %v3029
    %v3609 = vadd.f32 %v3581, %v3033
    %v3610 = vadd.f32 %v3582, %v3037
    %v3611 = vadd.f32 %v3583, %v3041
    %v3612 = vadd.f32 %v3584, %v3029
    %v3613 = vadd.f32 %v3585, %v3033
    %v3614 = vadd.f32 %v3586, %v3037
    %v3615 = vadd.f32 %v3587, %v3041
    %v3616 = vadd.f32 %v3588, %v3029
    %v3617 = vadd.f32 %v3589, %v3033
    %v3618 = vadd.f32 %v3590, %v3037
    %v3619 = vadd.f32 %v3591, %v3041
    %v3620 = vmax.f32 %v3592, 0.0
    %v3621 = vmax.f32 %v3593, 0.0
    %v3622 = vmax.f32 %v3594, 0.0
    %v3623 = vmax.f32 %v3595, 0.0
    %v3624 = vmax.f32 %v3596, 0.0
    %v3625 = vmax.f32 %v3597, 0.0
    %v3626 = vmax.f32 %v3598, 0.0
    %v3627 = vmax.f32 %v3599, 0.0
    %v3628 = vmax.f32 %v3600, 0.0
    %v3629 = vmax.f32 %v3601, 0.0
    %v3630 = vmax.f32 %v3602, 0.0
    %v3631 = vmax.f32 %v3603, 0.0
    %v3632 = vmax.f32 %v3604, 0.0
    %v3633 = vmax.f32 %v3605, 0.0
    %v3634 = vmax.f32 %v3606, 0.0
    %v3635 = vmax.f32 %v3607, 0.0
    %v3636 = vmax.f32 %v3608, 0.0
    %v3637 = vmax.f32 %v3609, 0.0
    %v3638 = vmax.f32 %v3610, 0.0
    %v3639 = vmax.f32 %v3611, 0.0
    %v3640 = vmax.f32 %v3612, 0.0
    %v3641 = vmax.f32 %v3613, 0.0
    %v3642 = vmax.f32 %v3614, 0.0
    %v3643 = vmax.f32 %v3615, 0.0
    %v3644 = vmax.f32 %v3616, 0.0
    %v3645 = vmax.f32 %v3617, 0.0
    %v3646 = vmax.f32 %v3618, 0.0
    %v3647 = vmax.f32 %v3619, 0.0
    %v3648 = vmax.f32 %v3620, %v3622
    %v3649 = vmax.f32 %v3621, %v3623
    %v3650 = vmax.f32 %v3624, %v3626
    %v3651 = vmax.f32 %v3625, %v3627
    %v3652 = vmax.f32 %v3628, %v3630
    %v3653 = vmax.f32 %v3629, %v3631
    %v3654 = vmax.f32 %v3632, %v3634
    %v3655 = vmax.f32 %v3633, %v3635
    %v3656 = vmax.f32 %v3636, %v3638
    %v3657 = vmax.f32 %v3637, %v3639
    %v3658 = vmax.f32 %v3640, %v3642
    %v3659 = vmax.f32 %v3641, %v3643
    %v3660 = vmax.f32 %v3644, %v3646
    %v3661 = vmax.f32 %v3645, %v3647
    %v3662 = vmax.f32 %v3102, %v3648
    %v3663 = vmax.f32 %v3103, %v3649
    %v3664 = vmax.f32 %v3104, %v3650
    %v3665 = vmax.f32 %v3105, %v3651
    %v3666 = vmax.f32 %v3106, %v3652
    %v3667 = vmax.f32 %v3107, %v3653
    %v3668 = vmax.f32 %v3108, %v3654
    %v3669 = vmax.f32 %v3109, %v3655
    %v3670 = vmax.f32 %v3110, %v3656
    %v3671 = vmax.f32 %v3111, %v3657
    %v3672 = vmax.f32 %v3112, %v3658
    %v3673 = vmax.f32 %v3113, %v3659
    %v3674 = vmax.f32 %v3114, %v3660
    %v3675 = vmax.f32 %v3115, %v3661
    %v3676 = vpack.c.bf16 %v3662, %v3662
    %v3677 = vpack.c.bf16 %v3663, %v3663
    %v3678 = vld [vmem:[#allocation5] sm:$0xf]
    %v3679 = vld [vmem:[#allocation5 + $0x4] sm:$0xf]
    %v3680 = vld [vmem:[#allocation5 + $0x8] sm:$0xf]
    %v3681 = vld [vmem:[#allocation5 + $0xc] sm:$0xf]
    %v3682 = vld [vmem:[#allocation5 + $0x10] sm:$0xf]
    %v3683 = vld [vmem:[#allocation5 + $0x14] sm:$0xf]
    %v3684 = vld [vmem:[#allocation5 + $0x18] sm:$0xf]
    %v3685 = vld [vmem:[#allocation5 + $0x1c] sm:$0xf]
    %v3686 = vld [vmem:[#allocation5 + $0x20] sm:$0xf]
    %v3687 = vld [vmem:[#allocation5 + $0x24] sm:$0xf]
    %v3688 = vld [vmem:[#allocation5 + $0x28] sm:$0xf]
    %v3689 = vld [vmem:[#allocation5 + $0x2c] sm:$0xf]
    %v3690 = vld [vmem:[#allocation5 + $0x30] sm:$0xf]
    %v3691 = vld [vmem:[#allocation5 + $0x34] sm:$0xf]
    %v3692 = vld [vmem:[#allocation5 + $0x38] sm:$0xf]
    %v3693 = vld [vmem:[#allocation5 + $0x3c] sm:$0xf]
    %v3694 = vld [vmem:[#allocation5 + $0x40] sm:$0xf]
    %v3695 = vld [vmem:[#allocation5 + $0x44] sm:$0xf]
    %v3696 = vld [vmem:[#allocation5 + $0x48] sm:$0xf]
    %v3697 = vld [vmem:[#allocation5 + $0x4c] sm:$0xf]
    %v3698 = vld [vmem:[#allocation5 + $0x50] sm:$0xf]
    %v3699 = vld [vmem:[#allocation5 + $0x54] sm:$0xf]
    %v3700 = vld [vmem:[#allocation5 + $0x58] sm:$0xf]
    %v3701 = vld [vmem:[#allocation5 + $0x5c] sm:$0xf]
    %v3702 = vld [vmem:[#allocation5 + $0x60] sm:$0xf]
    %v3703 = vld [vmem:[#allocation5 + $0x64] sm:$0xf]
    %v3704 = vld [vmem:[#allocation5 + $0x68] sm:$0xf]
    %v3705 = vld [vmem:[#allocation5 + $0x6c] sm:$0xf]
    %v3706 = vld [vmem:[#allocation5 + $0x70] sm:$0xf]
    %v3707 = vld [vmem:[#allocation5 + $0x74] sm:$0xf]
    %v3708 = vld [vmem:[#allocation5 + $0x78] sm:$0xf]
    %v3709 = vld [vmem:[#allocation5 + $0x7c] sm:$0xf]
    %v3710 = vpack.c.bf16 %v3664, %v3664
    %v3711 = vpack.c.bf16 %v3665, %v3665
    %s3712 = scalar_lea.vmem [#allocation5], 128
    %v3713 = vld [vmem:[%s3712] sm:$0xf]
    %v3714 = vld [vmem:[%s3712 + $0x4] sm:$0xf]
    %v3715 = vld [vmem:[%s3712 + $0x8] sm:$0xf]
    %v3716 = vld [vmem:[%s3712 + $0xc] sm:$0xf]
    %v3717 = vld [vmem:[%s3712 + $0x10] sm:$0xf]
    %v3718 = vld [vmem:[%s3712 + $0x14] sm:$0xf]
    %v3719 = vld [vmem:[%s3712 + $0x18] sm:$0xf]
    %v3720 = vld [vmem:[%s3712 + $0x1c] sm:$0xf]
    %v3721 = vld [vmem:[%s3712 + $0x20] sm:$0xf]
    %v3722 = vld [vmem:[%s3712 + $0x24] sm:$0xf]
    %v3723 = vld [vmem:[%s3712 + $0x28] sm:$0xf]
    %v3724 = vld [vmem:[%s3712 + $0x2c] sm:$0xf]
    %v3725 = vld [vmem:[%s3712 + $0x30] sm:$0xf]
    %v3726 = vld [vmem:[%s3712 + $0x34] sm:$0xf]
    %v3727 = vld [vmem:[%s3712 + $0x38] sm:$0xf]
    %v3728 = vld [vmem:[%s3712 + $0x3c] sm:$0xf]
    %v3729 = vld [vmem:[%s3712 + $0x40] sm:$0xf]
    %v3730 = vld [vmem:[%s3712 + $0x44] sm:$0xf]
    %v3731 = vld [vmem:[%s3712 + $0x48] sm:$0xf]
    %v3732 = vld [vmem:[%s3712 + $0x4c] sm:$0xf]
    %v3733 = vld [vmem:[%s3712 + $0x50] sm:$0xf]
    %v3734 = vld [vmem:[%s3712 + $0x54] sm:$0xf]
    %v3735 = vld [vmem:[%s3712 + $0x58] sm:$0xf]
    %v3736 = vld [vmem:[%s3712 + $0x5c] sm:$0xf]
    %v3737 = vld [vmem:[%s3712 + $0x60] sm:$0xf]
    %v3738 = vld [vmem:[%s3712 + $0x64] sm:$0xf]
    %v3739 = vld [vmem:[%s3712 + $0x68] sm:$0xf]
    %v3740 = vld [vmem:[%s3712 + $0x6c] sm:$0xf]
    %v3741 = vld [vmem:[%s3712 + $0x70] sm:$0xf]
    %v3742 = vld [vmem:[%s3712 + $0x74] sm:$0xf]
    %v3743 = vld [vmem:[%s3712 + $0x78] sm:$0xf]
    %v3744 = vld [vmem:[%s3712 + $0x7c] sm:$0xf]
    %v3777 = vunpack.c.l.b16 %v3713
    %v3778 = vunpack.c.l.b16 %v3714
    %v3779 = vunpack.c.l.b16 %v3715
    %v3780 = vunpack.c.l.b16 %v3716
    %v3781 = vunpack.c.l.b16 %v3717
    %v3782 = vunpack.c.l.b16 %v3718
    %v3783 = vunpack.c.l.b16 %v3719
    %v3784 = vunpack.c.l.b16 %v3720
    %v3785 = vunpack.c.l.b16 %v3721
    %v3786 = vunpack.c.l.b16 %v3722
    %v3787 = vunpack.c.l.b16 %v3723
    %v3788 = vunpack.c.l.b16 %v3724
    %v3789 = vunpack.c.l.b16 %v3725
    %v3790 = vunpack.c.l.b16 %v3726
    %v3791 = vunpack.c.l.b16 %v3727
    %v3792 = vunpack.c.l.b16 %v3728
    %v3793 = vunpack.c.l.b16 %v3729
    %v3794 = vunpack.c.l.b16 %v3730
    %v3795 = vunpack.c.l.b16 %v3731
    %v3796 = vunpack.c.l.b16 %v3732
    %v3797 = vunpack.c.l.b16 %v3733
    %v3798 = vunpack.c.l.b16 %v3734
    %v3799 = vunpack.c.l.b16 %v3735
    %v3800 = vunpack.c.l.b16 %v3736
    %v3801 = vunpack.c.l.b16 %v3737
    %v3802 = vunpack.c.l.b16 %v3738
    %v3803 = vunpack.c.l.b16 %v3739
    %v3804 = vunpack.c.l.b16 %v3740
    %v3805 = vunpack.c.l.b16 %v3741
    %v3806 = vunpack.c.l.b16 %v3742
    %v3807 = vunpack.c.l.b16 %v3743
    %v3808 = vunpack.c.l.b16 %v3744
    %v3809 = vpack.c.b16 %v3778, %v3777
    %v3810 = vpack.c.b16 %v3780, %v3779
    %v3811 = vpack.c.b16 %v3782, %v3781
    %v3812 = vpack.c.b16 %v3784, %v3783
    %v3813 = vpack.c.b16 %v3786, %v3785
    %v3814 = vpack.c.b16 %v3788, %v3787
    %v3815 = vpack.c.b16 %v3790, %v3789
    %v3816 = vpack.c.b16 %v3792, %v3791
    %v3817 = vpack.c.b16 %v3794, %v3793
    %v3818 = vpack.c.b16 %v3796, %v3795
    %v3819 = vpack.c.b16 %v3798, %v3797
    %v3820 = vpack.c.b16 %v3800, %v3799
    %v3821 = vpack.c.b16 %v3802, %v3801
    %v3822 = vpack.c.b16 %v3804, %v3803
    %v3823 = vpack.c.b16 %v3806, %v3805
    %v3824 = vpack.c.b16 %v3808, %v3807
    %3841 = vmatprep.subr.bf16.mxu0 0
    %3842 = vmatpush1.bf16.msra.mxu0 %v3809
    %3843 = vmatprep.subr.bf16.mxu0 0
    %3844 = vmatpush1.bf16.msra.mxu0 %v3810
    %3845 = vmatprep.subr.bf16.mxu0 0
    %3846 = vmatpush1.bf16.msra.mxu0 %v3811
    %3847 = vmatprep.subr.bf16.mxu0 0
    %3848 = vmatpush1.bf16.msra.mxu0 %v3812
    %3849 = vmatprep.subr.bf16.mxu0 0
    %3850 = vmatpush1.bf16.msra.mxu0 %v3813
    %3851 = vmatprep.subr.bf16.mxu0 0
    %3852 = vmatpush1.bf16.msra.mxu0 %v3814
    %3853 = vmatprep.subr.bf16.mxu0 0
    %3854 = vmatpush1.bf16.msra.mxu0 %v3815
    %3855 = vmatprep.subr.bf16.mxu0 0
    %3856 = vmatpush1.bf16.msra.mxu0 %v3816
    %3857 = vmatprep.subr.bf16.mxu0 0
    %3858 = vmatpush1.bf16.msra.mxu0 %v3817
    %3859 = vmatprep.subr.bf16.mxu0 0
    %3860 = vmatpush1.bf16.msra.mxu0 %v3818
    %3861 = vmatprep.subr.bf16.mxu0 0
    %3862 = vmatpush1.bf16.msra.mxu0 %v3819
    %3863 = vmatprep.subr.bf16.mxu0 0
    %3864 = vmatpush1.bf16.msra.mxu0 %v3820
    %3865 = vmatprep.subr.bf16.mxu0 0
    %3866 = vmatpush1.bf16.msra.mxu0 %v3821
    %3867 = vmatprep.subr.bf16.mxu0 0
    %3868 = vmatpush1.bf16.msra.mxu0 %v3822
    %3869 = vmatprep.subr.bf16.mxu0 0
    %3870 = vmatpush1.bf16.msra.mxu0 %v3823
    %3871 = vmatprep.subr.bf16.mxu0 0
    %3872 = vmatpush1.bf16.msra.mxu0 %v3824
    %3873 = vmatprep.mubr.bf16.mxu0 %v3711
    %3874 = vmatmul.mubr.bf16.gmra.mrb[0].mxu0 %v3710
    %v3875 = vpop.f32.mrb[0].mxu0
    %v3876 = vadd.f32 0.0, %v3875
    %v3877 = vpop.f32.mrb[0].mxu0
    %v3878 = vpop.f32.mrb[0].mxu0
    %v3879 = vpop.f32.mrb[0].mxu0
    %3880 = vdwg.mxu0
    %v3913 = vunpack.c.l.b16 %v3678
    %v3914 = vunpack.c.l.b16 %v3679
    %v3915 = vunpack.c.l.b16 %v3680
    %v3916 = vunpack.c.l.b16 %v3681
    %v3917 = vunpack.c.l.b16 %v3682
    %v3918 = vunpack.c.l.b16 %v3683
    %v3919 = vunpack.c.l.b16 %v3684
    %v3920 = vunpack.c.l.b16 %v3685
    %v3921 = vunpack.c.l.b16 %v3686
    %v3922 = vunpack.c.l.b16 %v3687
    %v3923 = vunpack.c.l.b16 %v3688
    %v3924 = vunpack.c.l.b16 %v3689
    %v3925 = vunpack.c.l.b16 %v3690
    %v3926 = vunpack.c.l.b16 %v3691
    %v3927 = vunpack.c.l.b16 %v3692
    %v3928 = vunpack.c.l.b16 %v3693
    %v3929 = vunpack.c.l.b16 %v3694
    %v3930 = vunpack.c.l.b16 %v3695
    %v3931 = vunpack.c.l.b16 %v3696
    %v3932 = vunpack.c.l.b16 %v3697
    %v3933 = vunpack.c.l.b16 %v3698
    %v3934 = vunpack.c.l.b16 %v3699
    %v3935 = vunpack.c.l.b16 %v3700
    %v3936 = vunpack.c.l.b16 %v3701
    %v3937 = vunpack.c.l.b16 %v3702
    %v3938 = vunpack.c.l.b16 %v3703
    %v3939 = vunpack.c.l.b16 %v3704
    %v3940 = vunpack.c.l.b16 %v3705
    %v3941 = vunpack.c.l.b16 %v3706
    %v3942 = vunpack.c.l.b16 %v3707
    %v3943 = vunpack.c.l.b16 %v3708
    %v3944 = vunpack.c.l.b16 %v3709
    %v3945 = vpack.c.b16 %v3914, %v3913
    %v3946 = vpack.c.b16 %v3916, %v3915
    %v3947 = vpack.c.b16 %v3918, %v3917
    %v3948 = vpack.c.b16 %v3920, %v3919
    %v3949 = vpack.c.b16 %v3922, %v3921
    %v3950 = vpack.c.b16 %v3924, %v3923
    %v3951 = vpack.c.b16 %v3926, %v3925
    %v3952 = vpack.c.b16 %v3928, %v3927
    %v3953 = vpack.c.b16 %v3930, %v3929
    %v3954 = vpack.c.b16 %v3932, %v3931
    %v3955 = vpack.c.b16 %v3934, %v3933
    %v3956 = vpack.c.b16 %v3936, %v3935
    %v3957 = vpack.c.b16 %v3938, %v3937
    %v3958 = vpack.c.b16 %v3940, %v3939
    %v3959 = vpack.c.b16 %v3942, %v3941
    %v3960 = vpack.c.b16 %v3944, %v3943
    %3977 = vmatprep.subr.bf16.mxu0 0
    %3978 = vmatpush1.bf16.msra.mxu0 %v3945
    %3979 = vmatprep.subr.bf16.mxu0 0
    %3980 = vmatpush1.bf16.msra.mxu0 %v3946
    %3981 = vmatprep.subr.bf16.mxu0 0
    %3982 = vmatpush1.bf16.msra.mxu0 %v3947
    %3983 = vmatprep.subr.bf16.mxu0 0
    %3984 = vmatpush1.bf16.msra.mxu0 %v3948
    %3985 = vmatprep.subr.bf16.mxu0 0
    %3986 = vmatpush1.bf16.msra.mxu0 %v3949
    %3987 = vmatprep.subr.bf16.mxu0 0
    %3988 = vmatpush1.bf16.msra.mxu0 %v3950
    %3989 = vmatprep.subr.bf16.mxu0 0
    %3990 = vmatpush1.bf16.msra.mxu0 %v3951
    %3991 = vmatprep.subr.bf16.mxu0 0
    %3992 = vmatpush1.bf16.msra.mxu0 %v3952
    %3993 = vmatprep.subr.bf16.mxu0 0
    %3994 = vmatpush1.bf16.msra.mxu0 %v3953
    %3995 = vmatprep.subr.bf16.mxu0 0
    %3996 = vmatpush1.bf16.msra.mxu0 %v3954
    %3997 = vmatprep.subr.bf16.mxu0 0
    %3998 = vmatpush1.bf16.msra.mxu0 %v3955
    %3999 = vmatprep.subr.bf16.mxu0 0
    %4000 = vmatpush1.bf16.msra.mxu0 %v3956
    %4001 = vmatprep.subr.bf16.mxu0 0
    %4002 = vmatpush1.bf16.msra.mxu0 %v3957
    %4003 = vmatprep.subr.bf16.mxu0 0
    %4004 = vmatpush1.bf16.msra.mxu0 %v3958
    %4005 = vmatprep.subr.bf16.mxu0 0
    %4006 = vmatpush1.bf16.msra.mxu0 %v3959
    %4007 = vmatprep.subr.bf16.mxu0 0
    %4008 = vmatpush1.bf16.msra.mxu0 %v3960
    %4009 = vmatprep.mubr.bf16.mxu0 %v3677
    %4010 = vmatmul.mubr.bf16.gmra.mrb[0].mxu0 %v3676
    %v4011 = vpop.f32.mrb[0].mxu0
    %v4012 = vadd.f32 %v3876, %v4011
    %v4013 = vpop.f32.mrb[0].mxu0
    %v4014 = vpop.f32.mrb[0].mxu0
    %v4015 = vpop.f32.mrb[0].mxu0
    %4016 = vdwg.mxu0
    %v4017 = vpack.c.bf16 %v3666, %v3666
    %v4018 = vpack.c.bf16 %v3667, %v3667
    %s4019 = scalar_lea.vmem [#allocation5], 256
    %v4020 = vld [vmem:[%s4019] sm:$0xf]
    %v4021 = vld [vmem:[%s4019 + $0x4] sm:$0xf]
    %v4022 = vld [vmem:[%s4019 + $0x8] sm:$0xf]
    %v4023 = vld [vmem:[%s4019 + $0xc] sm:$0xf]
    %v4024 = vld [vmem:[%s4019 + $0x10] sm:$0xf]
    %v4025 = vld [vmem:[%s4019 + $0x14] sm:$0xf]
    %v4026 = vld [vmem:[%s4019 + $0x18] sm:$0xf]
    %v4027 = vld [vmem:[%s4019 + $0x1c] sm:$0xf]
    %v4028 = vld [vmem:[%s4019 + $0x20] sm:$0xf]
    %v4029 = vld [vmem:[%s4019 + $0x24] sm:$0xf]
    %v4030 = vld [vmem:[%s4019 + $0x28] sm:$0xf]
    %v4031 = vld [vmem:[%s4019 + $0x2c] sm:$0xf]
    %v4032 = vld [vmem:[%s4019 + $0x30] sm:$0xf]
    %v4033 = vld [vmem:[%s4019 + $0x34] sm:$0xf]
    %v4034 = vld [vmem:[%s4019 + $0x38] sm:$0xf]
    %v4035 = vld [vmem:[%s4019 + $0x3c] sm:$0xf]
    %v4036 = vld [vmem:[%s4019 + $0x40] sm:$0xf]
    %v4037 = vld [vmem:[%s4019 + $0x44] sm:$0xf]
    %v4038 = vld [vmem:[%s4019 + $0x48] sm:$0xf]
    %v4039 = vld [vmem:[%s4019 + $0x4c] sm:$0xf]
    %v4040 = vld [vmem:[%s4019 + $0x50] sm:$0xf]
    %v4041 = vld [vmem:[%s4019 + $0x54] sm:$0xf]
    %v4042 = vld [vmem:[%s4019 + $0x58] sm:$0xf]
    %v4043 = vld [vmem:[%s4019 + $0x5c] sm:$0xf]
    %v4044 = vld [vmem:[%s4019 + $0x60] sm:$0xf]
    %v4045 = vld [vmem:[%s4019 + $0x64] sm:$0xf]
    %v4046 = vld [vmem:[%s4019 + $0x68] sm:$0xf]
    %v4047 = vld [vmem:[%s4019 + $0x6c] sm:$0xf]
    %v4048 = vld [vmem:[%s4019 + $0x70] sm:$0xf]
    %v4049 = vld [vmem:[%s4019 + $0x74] sm:$0xf]
    %v4050 = vld [vmem:[%s4019 + $0x78] sm:$0xf]
    %v4051 = vld [vmem:[%s4019 + $0x7c] sm:$0xf]
    %v4084 = vunpack.c.l.b16 %v4020
    %v4085 = vunpack.c.l.b16 %v4021
    %v4086 = vunpack.c.l.b16 %v4022
    %v4087 = vunpack.c.l.b16 %v4023
    %v4088 = vunpack.c.l.b16 %v4024
    %v4089 = vunpack.c.l.b16 %v4025
    %v4090 = vunpack.c.l.b16 %v4026
    %v4091 = vunpack.c.l.b16 %v4027
    %v4092 = vunpack.c.l.b16 %v4028
    %v4093 = vunpack.c.l.b16 %v4029
    %v4094 = vunpack.c.l.b16 %v4030
    %v4095 = vunpack.c.l.b16 %v4031
    %v4096 = vunpack.c.l.b16 %v4032
    %v4097 = vunpack.c.l.b16 %v4033
    %v4098 = vunpack.c.l.b16 %v4034
    %v4099 = vunpack.c.l.b16 %v4035
    %v4100 = vunpack.c.l.b16 %v4036
    %v4101 = vunpack.c.l.b16 %v4037
    %v4102 = vunpack.c.l.b16 %v4038
    %v4103 = vunpack.c.l.b16 %v4039
    %v4104 = vunpack.c.l.b16 %v4040
    %v4105 = vunpack.c.l.b16 %v4041
    %v4106 = vunpack.c.l.b16 %v4042
    %v4107 = vunpack.c.l.b16 %v4043
    %v4108 = vunpack.c.l.b16 %v4044
    %v4109 = vunpack.c.l.b16 %v4045
    %v4110 = vunpack.c.l.b16 %v4046
    %v4111 = vunpack.c.l.b16 %v4047
    %v4112 = vunpack.c.l.b16 %v4048
    %v4113 = vunpack.c.l.b16 %v4049
    %v4114 = vunpack.c.l.b16 %v4050
    %v4115 = vunpack.c.l.b16 %v4051
    %v4116 = vpack.c.b16 %v4085, %v4084
    %v4117 = vpack.c.b16 %v4087, %v4086
    %v4118 = vpack.c.b16 %v4089, %v4088
    %v4119 = vpack.c.b16 %v4091, %v4090
    %v4120 = vpack.c.b16 %v4093, %v4092
    %v4121 = vpack.c.b16 %v4095, %v4094
    %v4122 = vpack.c.b16 %v4097, %v4096
    %v4123 = vpack.c.b16 %v4099, %v4098
    %v4124 = vpack.c.b16 %v4101, %v4100
    %v4125 = vpack.c.b16 %v4103, %v4102
    %v4126 = vpack.c.b16 %v4105, %v4104
    %v4127 = vpack.c.b16 %v4107, %v4106
    %v4128 = vpack.c.b16 %v4109, %v4108
    %v4129 = vpack.c.b16 %v4111, %v4110
    %v4130 = vpack.c.b16 %v4113, %v4112
    %v4131 = vpack.c.b16 %v4115, %v4114
    %4148 = vmatprep.subr.bf16.mxu0 0
    %4149 = vmatpush1.bf16.msra.mxu0 %v4116
    %4150 = vmatprep.subr.bf16.mxu0 0
    %4151 = vmatpush1.bf16.msra.mxu0 %v4117
    %4152 = vmatprep.subr.bf16.mxu0 0
    %4153 = vmatpush1.bf16.msra.mxu0 %v4118
    %4154 = vmatprep.subr.bf16.mxu0 0
    %4155 = vmatpush1.bf16.msra.mxu0 %v4119
    %4156 = vmatprep.subr.bf16.mxu0 0
    %4157 = vmatpush1.bf16.msra.mxu0 %v4120
    %4158 = vmatprep.subr.bf16.mxu0 0
    %4159 = vmatpush1.bf16.msra.mxu0 %v4121
    %4160 = vmatprep.subr.bf16.mxu0 0
    %4161 = vmatpush1.bf16.msra.mxu0 %v4122
    %4162 = vmatprep.subr.bf16.mxu0 0
    %4163 = vmatpush1.bf16.msra.mxu0 %v4123
    %4164 = vmatprep.subr.bf16.mxu0 0
    %4165 = vmatpush1.bf16.msra.mxu0 %v4124
    %4166 = vmatprep.subr.bf16.mxu0 0
    %4167 = vmatpush1.bf16.msra.mxu0 %v4125
    %4168 = vmatprep.subr.bf16.mxu0 0
    %4169 = vmatpush1.bf16.msra.mxu0 %v4126
    %4170 = vmatprep.subr.bf16.mxu0 0
    %4171 = vmatpush1.bf16.msra.mxu0 %v4127
    %4172 = vmatprep.subr.bf16.mxu0 0
    %4173 = vmatpush1.bf16.msra.mxu0 %v4128
    %4174 = vmatprep.subr.bf16.mxu0 0
    %4175 = vmatpush1.bf16.msra.mxu0 %v4129
    %4176 = vmatprep.subr.bf16.mxu0 0
    %4177 = vmatpush1.bf16.msra.mxu0 %v4130
    %4178 = vmatprep.subr.bf16.mxu0 0
    %4179 = vmatpush1.bf16.msra.mxu0 %v4131
    %4180 = vmatprep.mubr.bf16.mxu0 %v4018
    %4181 = vmatmul.mubr.bf16.gmra.mrb[0].mxu0 %v4017
    %v4182 = vpop.f32.mrb[0].mxu0
    %v4183 = vadd.f32 0.0, %v4182
    %v4184 = vpop.f32.mrb[0].mxu0
    %v4185 = vpop.f32.mrb[0].mxu0
    %v4186 = vpop.f32.mrb[0].mxu0
    %4187 = vdwg.mxu0
    %v4188 = vadd.f32 %v4012, %v4183
    %v4189 = vpack.c.bf16 %v3668, %v3668
    %v4190 = vpack.c.bf16 %v3669, %v3669
    %s4191 = scalar_lea.vmem [#allocation5], 384
    %v4192 = vld [vmem:[%s4191] sm:$0xf]
    %v4193 = vld [vmem:[%s4191 + $0x4] sm:$0xf]
    %v4194 = vld [vmem:[%s4191 + $0x8] sm:$0xf]
    %v4195 = vld [vmem:[%s4191 + $0xc] sm:$0xf]
    %v4196 = vld [vmem:[%s4191 + $0x10] sm:$0xf]
    %v4197 = vld [vmem:[%s4191 + $0x14] sm:$0xf]
    %v4198 = vld [vmem:[%s4191 + $0x18] sm:$0xf]
    %v4199 = vld [vmem:[%s4191 + $0x1c] sm:$0xf]
    %v4200 = vld [vmem:[%s4191 + $0x20] sm:$0xf]
    %v4201 = vld [vmem:[%s4191 + $0x24] sm:$0xf]
    %v4202 = vld [vmem:[%s4191 + $0x28] sm:$0xf]
    %v4203 = vld [vmem:[%s4191 + $0x2c] sm:$0xf]
    %v4204 = vld [vmem:[%s4191 + $0x30] sm:$0xf]
    %v4205 = vld [vmem:[%s4191 + $0x34] sm:$0xf]
    %v4206 = vld [vmem:[%s4191 + $0x38] sm:$0xf]
    %v4207 = vld [vmem:[%s4191 + $0x3c] sm:$0xf]
    %v4208 = vld [vmem:[%s4191 + $0x40] sm:$0xf]
    %v4209 = vld [vmem:[%s4191 + $0x44] sm:$0xf]
    %v4210 = vld [vmem:[%s4191 + $0x48] sm:$0xf]
    %v4211 = vld [vmem:[%s4191 + $0x4c] sm:$0xf]
    %v4212 = vld [vmem:[%s4191 + $0x50] sm:$0xf]
    %v4213 = vld [vmem:[%s4191 + $0x54] sm:$0xf]
    %v4214 = vld [vmem:[%s4191 + $0x58] sm:$0xf]
    %v4215 = vld [vmem:[%s4191 + $0x5c] sm:$0xf]
    %v4216 = vld [vmem:[%s4191 + $0x60] sm:$0xf]
    %v4217 = vld [vmem:[%s4191 + $0x64] sm:$0xf]
    %v4218 = vld [vmem:[%s4191 + $0x68] sm:$0xf]
    %v4219 = vld [vmem:[%s4191 + $0x6c] sm:$0xf]
    %v4220 = vld [vmem:[%s4191 + $0x70] sm:$0xf]
    %v4221 = vld [vmem:[%s4191 + $0x74] sm:$0xf]
    %v4222 = vld [vmem:[%s4191 + $0x78] sm:$0xf]
    %v4223 = vld [vmem:[%s4191 + $0x7c] sm:$0xf]
    %v4256 = vunpack.c.l.b16 %v4192
    %v4257 = vunpack.c.l.b16 %v4193
    %v4258 = vunpack.c.l.b16 %v4194
    %v4259 = vunpack.c.l.b16 %v4195
    %v4260 = vunpack.c.l.b16 %v4196
    %v4261 = vunpack.c.l.b16 %v4197
    %v4262 = vunpack.c.l.b16 %v4198
    %v4263 = vunpack.c.l.b16 %v4199
    %v4264 = vunpack.c.l.b16 %v4200
    %v4265 = vunpack.c.l.b16 %v4201
    %v4266 = vunpack.c.l.b16 %v4202
    %v4267 = vunpack.c.l.b16 %v4203
    %v4268 = vunpack.c.l.b16 %v4204
    %v4269 = vunpack.c.l.b16 %v4205
    %v4270 = vunpack.c.l.b16 %v4206
    %v4271 = vunpack.c.l.b16 %v4207
    %v4272 = vunpack.c.l.b16 %v4208
    %v4273 = vunpack.c.l.b16 %v4209
    %v4274 = vunpack.c.l.b16 %v4210
    %v4275 = vunpack.c.l.b16 %v4211
    %v4276 = vunpack.c.l.b16 %v4212
    %v4277 = vunpack.c.l.b16 %v4213
    %v4278 = vunpack.c.l.b16 %v4214
    %v4279 = vunpack.c.l.b16 %v4215
    %v4280 = vunpack.c.l.b16 %v4216
    %v4281 = vunpack.c.l.b16 %v4217
    %v4282 = vunpack.c.l.b16 %v4218
    %v4283 = vunpack.c.l.b16 %v4219
    %v4284 = vunpack.c.l.b16 %v4220
    %v4285 = vunpack.c.l.b16 %v4221
    %v4286 = vunpack.c.l.b16 %v4222
    %v4287 = vunpack.c.l.b16 %v4223
    %v4288 = vpack.c.b16 %v4257, %v4256
    %v4289 = vpack.c.b16 %v4259, %v4258
    %v4290 = vpack.c.b16 %v4261, %v4260
    %v4291 = vpack.c.b16 %v4263, %v4262
    %v4292 = vpack.c.b16 %v4265, %v4264
    %v4293 = vpack.c.b16 %v4267, %v4266
    %v4294 = vpack.c.b16 %v4269, %v4268
    %v4295 = vpack.c.b16 %v4271, %v4270
    %v4296 = vpack.c.b16 %v4273, %v4272
    %v4297 = vpack.c.b16 %v4275, %v4274
    %v4298 = vpack.c.b16 %v4277, %v4276
    %v4299 = vpack.c.b16 %v4279, %v4278
    %v4300 = vpack.c.b16 %v4281, %v4280
    %v4301 = vpack.c.b16 %v4283, %v4282
    %v4302 = vpack.c.b16 %v4285, %v4284
    %v4303 = vpack.c.b16 %v4287, %v4286
    %4320 = vmatprep.subr.bf16.mxu0 0
    %4321 = vmatpush1.bf16.msra.mxu0 %v4288
    %4322 = vmatprep.subr.bf16.mxu0 0
    %4323 = vmatpush1.bf16.msra.mxu0 %v4289
    %4324 = vmatprep.subr.bf16.mxu0 0
    %4325 = vmatpush1.bf16.msra.mxu0 %v4290
    %4326 = vmatprep.subr.bf16.mxu0 0
    %4327 = vmatpush1.bf16.msra.mxu0 %v4291
    %4328 = vmatprep.subr.bf16.mxu0 0
    %4329 = vmatpush1.bf16.msra.mxu0 %v4292
    %4330 = vmatprep.subr.bf16.mxu0 0
    %4331 = vmatpush1.bf16.msra.mxu0 %v4293
    %4332 = vmatprep.subr.bf16.mxu0 0
    %4333 = vmatpush1.bf16.msra.mxu0 %v4294
    %4334 = vmatprep.subr.bf16.mxu0 0
    %4335 = vmatpush1.bf16.msra.mxu0 %v4295
    %4336 = vmatprep.subr.bf16.mxu0 0
    %4337 = vmatpush1.bf16.msra.mxu0 %v4296
    %4338 = vmatprep.subr.bf16.mxu0 0
    %4339 = vmatpush1.bf16.msra.mxu0 %v4297
    %4340 = vmatprep.subr.bf16.mxu0 0
    %4341 = vmatpush1.bf16.msra.mxu0 %v4298
    %4342 = vmatprep.subr.bf16.mxu0 0
    %4343 = vmatpush1.bf16.msra.mxu0 %v4299
    %4344 = vmatprep.subr.bf16.mxu0 0
    %4345 = vmatpush1.bf16.msra.mxu0 %v4300
    %4346 = vmatprep.subr.bf16.mxu0 0
    %4347 = vmatpush1.bf16.msra.mxu0 %v4301
    %4348 = vmatprep.subr.bf16.mxu0 0
    %4349 = vmatpush1.bf16.msra.mxu0 %v4302
    %4350 = vmatprep.subr.bf16.mxu0 0
    %4351 = vmatpush1.bf16.msra.mxu0 %v4303
    %4352 = vmatprep.mubr.bf16.mxu0 %v4190
    %4353 = vmatmul.mubr.bf16.gmra.mrb[0].mxu0 %v4189
    %v4354 = vpop.f32.mrb[0].mxu0
    %v4355 = vadd.f32 0.0, %v4354
    %v4356 = vpop.f32.mrb[0].mxu0
    %v4357 = vpop.f32.mrb[0].mxu0
    %v4358 = vpop.f32.mrb[0].mxu0
    %4359 = vdwg.mxu0
    %v4360 = vadd.f32 %v4188, %v4355
    %v4361 = vpack.c.bf16 %v3670, %v3670
    %v4362 = vpack.c.bf16 %v3671, %v3671
    %s4363 = scalar_lea.vmem [#allocation5], 512
    %v4364 = vld [vmem:[%s4363] sm:$0xf]
    %v4365 = vld [vmem:[%s4363 + $0x4] sm:$0xf]
    %v4366 = vld [vmem:[%s4363 + $0x8] sm:$0xf]
    %v4367 = vld [vmem:[%s4363 + $0xc] sm:$0xf]
    %v4368 = vld [vmem:[%s4363 + $0x10] sm:$0xf]
    %v4369 = vld [vmem:[%s4363 + $0x14] sm:$0xf]
    %v4370 = vld [vmem:[%s4363 + $0x18] sm:$0xf]
    %v4371 = vld [vmem:[%s4363 + $0x1c] sm:$0xf]
    %v4372 = vld [vmem:[%s4363 + $0x20] sm:$0xf]
    %v4373 = vld [vmem:[%s4363 + $0x24] sm:$0xf]
    %v4374 = vld [vmem:[%s4363 + $0x28] sm:$0xf]
    %v4375 = vld [vmem:[%s4363 + $0x2c] sm:$0xf]
    %v4376 = vld [vmem:[%s4363 + $0x30] sm:$0xf]
    %v4377 = vld [vmem:[%s4363 + $0x34] sm:$0xf]
    %v4378 = vld [vmem:[%s4363 + $0x38] sm:$0xf]
    %v4379 = vld [vmem:[%s4363 + $0x3c] sm:$0xf]
    %v4380 = vld [vmem:[%s4363 + $0x40] sm:$0xf]
    %v4381 = vld [vmem:[%s4363 + $0x44] sm:$0xf]
    %v4382 = vld [vmem:[%s4363 + $0x48] sm:$0xf]
    %v4383 = vld [vmem:[%s4363 + $0x4c] sm:$0xf]
    %v4384 = vld [vmem:[%s4363 + $0x50] sm:$0xf]
    %v4385 = vld [vmem:[%s4363 + $0x54] sm:$0xf]
    %v4386 = vld [vmem:[%s4363 + $0x58] sm:$0xf]
    %v4387 = vld [vmem:[%s4363 + $0x5c] sm:$0xf]
    %v4388 = vld [vmem:[%s4363 + $0x60] sm:$0xf]
    %v4389 = vld [vmem:[%s4363 + $0x64] sm:$0xf]
    %v4390 = vld [vmem:[%s4363 + $0x68] sm:$0xf]
    %v4391 = vld [vmem:[%s4363 + $0x6c] sm:$0xf]
    %v4392 = vld [vmem:[%s4363 + $0x70] sm:$0xf]
    %v4393 = vld [vmem:[%s4363 + $0x74] sm:$0xf]
    %v4394 = vld [vmem:[%s4363 + $0x78] sm:$0xf]
    %v4395 = vld [vmem:[%s4363 + $0x7c] sm:$0xf]
    %v4428 = vunpack.c.l.b16 %v4364
    %v4429 = vunpack.c.l.b16 %v4365
    %v4430 = vunpack.c.l.b16 %v4366
    %v4431 = vunpack.c.l.b16 %v4367
    %v4432 = vunpack.c.l.b16 %v4368
    %v4433 = vunpack.c.l.b16 %v4369
    %v4434 = vunpack.c.l.b16 %v4370
    %v4435 = vunpack.c.l.b16 %v4371
    %v4436 = vunpack.c.l.b16 %v4372
    %v4437 = vunpack.c.l.b16 %v4373
    %v4438 = vunpack.c.l.b16 %v4374
    %v4439 = vunpack.c.l.b16 %v4375
    %v4440 = vunpack.c.l.b16 %v4376
    %v4441 = vunpack.c.l.b16 %v4377
    %v4442 = vunpack.c.l.b16 %v4378
    %v4443 = vunpack.c.l.b16 %v4379
    %v4444 = vunpack.c.l.b16 %v4380
    %v4445 = vunpack.c.l.b16 %v4381
    %v4446 = vunpack.c.l.b16 %v4382
    %v4447 = vunpack.c.l.b16 %v4383
    %v4448 = vunpack.c.l.b16 %v4384
    %v4449 = vunpack.c.l.b16 %v4385
    %v4450 = vunpack.c.l.b16 %v4386
    %v4451 = vunpack.c.l.b16 %v4387
    %v4452 = vunpack.c.l.b16 %v4388
    %v4453 = vunpack.c.l.b16 %v4389
    %v4454 = vunpack.c.l.b16 %v4390
    %v4455 = vunpack.c.l.b16 %v4391
    %v4456 = vunpack.c.l.b16 %v4392
    %v4457 = vunpack.c.l.b16 %v4393
    %v4458 = vunpack.c.l.b16 %v4394
    %v4459 = vunpack.c.l.b16 %v4395
    %v4460 = vpack.c.b16 %v4429, %v4428
    %v4461 = vpack.c.b16 %v4431, %v4430
    %v4462 = vpack.c.b16 %v4433, %v4432
    %v4463 = vpack.c.b16 %v4435, %v4434
    %v4464 = vpack.c.b16 %v4437, %v4436
    %v4465 = vpack.c.b16 %v4439, %v4438
    %v4466 = vpack.c.b16 %v4441, %v4440
    %v4467 = vpack.c.b16 %v4443, %v4442
    %v4468 = vpack.c.b16 %v4445, %v4444
    %v4469 = vpack.c.b16 %v4447, %v4446
    %v4470 = vpack.c.b16 %v4449, %v4448
    %v4471 = vpack.c.b16 %v4451, %v4450
    %v4472 = vpack.c.b16 %v4453, %v4452
    %v4473 = vpack.c.b16 %v4455, %v4454
    %v4474 = vpack.c.b16 %v4457, %v4456
    %v4475 = vpack.c.b16 %v4459, %v4458
    %4492 = vmatprep.subr.bf16.mxu0 0
    %4493 = vmatpush1.bf16.msra.mxu0 %v4460
    %4494 = vmatprep.subr.bf16.mxu0 0
    %4495 = vmatpush1.bf16.msra.mxu0 %v4461
    %4496 = vmatprep.subr.bf16.mxu0 0
    %4497 = vmatpush1.bf16.msra.mxu0 %v4462
    %4498 = vmatprep.subr.bf16.mxu0 0
    %4499 = vmatpush1.bf16.msra.mxu0 %v4463
    %4500 = vmatprep.subr.bf16.mxu0 0
    %4501 = vmatpush1.bf16.msra.mxu0 %v4464
    %4502 = vmatprep.subr.bf16.mxu0 0
    %4503 = vmatpush1.bf16.msra.mxu0 %v4465
    %4504 = vmatprep.subr.bf16.mxu0 0
    %4505 = vmatpush1.bf16.msra.mxu0 %v4466
    %4506 = vmatprep.subr.bf16.mxu0 0
    %4507 = vmatpush1.bf16.msra.mxu0 %v4467
    %4508 = vmatprep.subr.bf16.mxu0 0
    %4509 = vmatpush1.bf16.msra.mxu0 %v4468
    %4510 = vmatprep.subr.bf16.mxu0 0
    %4511 = vmatpush1.bf16.msra.mxu0 %v4469
    %4512 = vmatprep.subr.bf16.mxu0 0
    %4513 = vmatpush1.bf16.msra.mxu0 %v4470
    %4514 = vmatprep.subr.bf16.mxu0 0
    %4515 = vmatpush1.bf16.msra.mxu0 %v4471
    %4516 = vmatprep.subr.bf16.mxu0 0
    %4517 = vmatpush1.bf16.msra.mxu0 %v4472
    %4518 = vmatprep.subr.bf16.mxu0 0
    %4519 = vmatpush1.bf16.msra.mxu0 %v4473
    %4520 = vmatprep.subr.bf16.mxu0 0
    %4521 = vmatpush1.bf16.msra.mxu0 %v4474
    %4522 = vmatprep.subr.bf16.mxu0 0
    %4523 = vmatpush1.bf16.msra.mxu0 %v4475
    %4524 = vmatprep.mubr.bf16.mxu0 %v4362
    %4525 = vmatmul.mubr.bf16.gmra.mrb[0].mxu0 %v4361
    %v4526 = vpop.f32.mrb[0].mxu0
    %v4527 = vadd.f32 0.0, %v4526
    %v4528 = vpop.f32.mrb[0].mxu0
    %v4529 = vpop.f32.mrb[0].mxu0
    %v4530 = vpop.f32.mrb[0].mxu0
    %4531 = vdwg.mxu0
    %v4532 = vadd.f32 %v4360, %v4527
    %v4533 = vpack.c.bf16 %v3672, %v3672
    %v4534 = vpack.c.bf16 %v3673, %v3673
    %s4535 = scalar_lea.vmem [#allocation5], 640
    %v4536 = vld [vmem:[%s4535] sm:$0xf]
    %v4537 = vld [vmem:[%s4535 + $0x4] sm:$0xf]
    %v4538 = vld [vmem:[%s4535 + $0x8] sm:$0xf]
    %v4539 = vld [vmem:[%s4535 + $0xc] sm:$0xf]
    %v4540 = vld [vmem:[%s4535 + $0x10] sm:$0xf]
    %v4541 = vld [vmem:[%s4535 + $0x14] sm:$0xf]
    %v4542 = vld [vmem:[%s4535 + $0x18] sm:$0xf]
    %v4543 = vld [vmem:[%s4535 + $0x1c] sm:$0xf]
    %v4544 = vld [vmem:[%s4535 + $0x20] sm:$0xf]
    %v4545 = vld [vmem:[%s4535 + $0x24] sm:$0xf]
    %v4546 = vld [vmem:[%s4535 + $0x28] sm:$0xf]
    %v4547 = vld [vmem:[%s4535 + $0x2c] sm:$0xf]
    %v4548 = vld [vmem:[%s4535 + $0x30] sm:$0xf]
    %v4549 = vld [vmem:[%s4535 + $0x34] sm:$0xf]
    %v4550 = vld [vmem:[%s4535 + $0x38] sm:$0xf]
    %v4551 = vld [vmem:[%s4535 + $0x3c] sm:$0xf]
    %v4552 = vld [vmem:[%s4535 + $0x40] sm:$0xf]
    %v4553 = vld [vmem:[%s4535 + $0x44] sm:$0xf]
    %v4554 = vld [vmem:[%s4535 + $0x48] sm:$0xf]
    %v4555 = vld [vmem:[%s4535 + $0x4c] sm:$0xf]
    %v4556 = vld [vmem:[%s4535 + $0x50] sm:$0xf]
    %v4557 = vld [vmem:[%s4535 + $0x54] sm:$0xf]
    %v4558 = vld [vmem:[%s4535 + $0x58] sm:$0xf]
    %v4559 = vld [vmem:[%s4535 + $0x5c] sm:$0xf]
    %v4560 = vld [vmem:[%s4535 + $0x60] sm:$0xf]
    %v4561 = vld [vmem:[%s4535 + $0x64] sm:$0xf]
    %v4562 = vld [vmem:[%s4535 + $0x68] sm:$0xf]
    %v4563 = vld [vmem:[%s4535 + $0x6c] sm:$0xf]
    %v4564 = vld [vmem:[%s4535 + $0x70] sm:$0xf]
    %v4565 = vld [vmem:[%s4535 + $0x74] sm:$0xf]
    %v4566 = vld [vmem:[%s4535 + $0x78] sm:$0xf]
    %v4567 = vld [vmem:[%s4535 + $0x7c] sm:$0xf]
    %v4600 = vunpack.c.l.b16 %v4536
    %v4601 = vunpack.c.l.b16 %v4537
    %v4602 = vunpack.c.l.b16 %v4538
    %v4603 = vunpack.c.l.b16 %v4539
    %v4604 = vunpack.c.l.b16 %v4540
    %v4605 = vunpack.c.l.b16 %v4541
    %v4606 = vunpack.c.l.b16 %v4542
    %v4607 = vunpack.c.l.b16 %v4543
    %v4608 = vunpack.c.l.b16 %v4544
    %v4609 = vunpack.c.l.b16 %v4545
    %v4610 = vunpack.c.l.b16 %v4546
    %v4611 = vunpack.c.l.b16 %v4547
    %v4612 = vunpack.c.l.b16 %v4548
    %v4613 = vunpack.c.l.b16 %v4549
    %v4614 = vunpack.c.l.b16 %v4550
    %v4615 = vunpack.c.l.b16 %v4551
    %v4616 = vunpack.c.l.b16 %v4552
    %v4617 = vunpack.c.l.b16 %v4553
    %v4618 = vunpack.c.l.b16 %v4554
    %v4619 = vunpack.c.l.b16 %v4555
    %v4620 = vunpack.c.l.b16 %v4556
    %v4621 = vunpack.c.l.b16 %v4557
    %v4622 = vunpack.c.l.b16 %v4558
    %v4623 = vunpack.c.l.b16 %v4559
    %v4624 = vunpack.c.l.b16 %v4560
    %v4625 = vunpack.c.l.b16 %v4561
    %v4626 = vunpack.c.l.b16 %v4562
    %v4627 = vunpack.c.l.b16 %v4563
    %v4628 = vunpack.c.l.b16 %v4564
    %v4629 = vunpack.c.l.b16 %v4565
    %v4630 = vunpack.c.l.b16 %v4566
    %v4631 = vunpack.c.l.b16 %v4567
    %v4632 = vpack.c.b16 %v4601, %v4600
    %v4633 = vpack.c.b16 %v4603, %v4602
    %v4634 = vpack.c.b16 %v4605, %v4604
    %v4635 = vpack.c.b16 %v4607, %v4606
    %v4636 = vpack.c.b16 %v4609, %v4608
    %v4637 = vpack.c.b16 %v4611, %v4610
    %v4638 = vpack.c.b16 %v4613, %v4612
    %v4639 = vpack.c.b16 %v4615, %v4614
    %v4640 = vpack.c.b16 %v4617, %v4616
    %v4641 = vpack.c.b16 %v4619, %v4618
    %v4642 = vpack.c.b16 %v4621, %v4620
    %v4643 = vpack.c.b16 %v4623, %v4622
    %v4644 = vpack.c.b16 %v4625, %v4624
    %v4645 = vpack.c.b16 %v4627, %v4626
    %v4646 = vpack.c.b16 %v4629, %v4628
    %v4647 = vpack.c.b16 %v4631, %v4630
    %4664 = vmatprep.subr.bf16.mxu0 0
    %4665 = vmatpush1.bf16.msra.mxu0 %v4632
    %4666 = vmatprep.subr.bf16.mxu0 0
    %4667 = vmatpush1.bf16.msra.mxu0 %v4633
    %4668 = vmatprep.subr.bf16.mxu0 0
    %4669 = vmatpush1.bf16.msra.mxu0 %v4634
    %4670 = vmatprep.subr.bf16.mxu0 0
    %4671 = vmatpush1.bf16.msra.mxu0 %v4635
    %4672 = vmatprep.subr.bf16.mxu0 0
    %4673 = vmatpush1.bf16.msra.mxu0 %v4636
    %4674 = vmatprep.subr.bf16.mxu0 0
    %4675 = vmatpush1.bf16.msra.mxu0 %v4637
    %4676 = vmatprep.subr.bf16.mxu0 0
    %4677 = vmatpush1.bf16.msra.mxu0 %v4638
    %4678 = vmatprep.subr.bf16.mxu0 0
    %4679 = vmatpush1.bf16.msra.mxu0 %v4639
    %4680 = vmatprep.subr.bf16.mxu0 0
    %4681 = vmatpush1.bf16.msra.mxu0 %v4640
    %4682 = vmatprep.subr.bf16.mxu0 0
    %4683 = vmatpush1.bf16.msra.mxu0 %v4641
    %4684 = vmatprep.subr.bf16.mxu0 0
    %4685 = vmatpush1.bf16.msra.mxu0 %v4642
    %4686 = vmatprep.subr.bf16.mxu0 0
    %4687 = vmatpush1.bf16.msra.mxu0 %v4643
    %4688 = vmatprep.subr.bf16.mxu0 0
    %4689 = vmatpush1.bf16.msra.mxu0 %v4644
    %4690 = vmatprep.subr.bf16.mxu0 0
    %4691 = vmatpush1.bf16.msra.mxu0 %v4645
    %4692 = vmatprep.subr.bf16.mxu0 0
    %4693 = vmatpush1.bf16.msra.mxu0 %v4646
    %4694 = vmatprep.subr.bf16.mxu0 0
    %4695 = vmatpush1.bf16.msra.mxu0 %v4647
    %4696 = vmatprep.mubr.bf16.mxu0 %v4534
    %4697 = vmatmul.mubr.bf16.gmra.mrb[0].mxu0 %v4533
    %v4698 = vpop.f32.mrb[0].mxu0
    %v4699 = vadd.f32 0.0, %v4698
    %v4700 = vpop.f32.mrb[0].mxu0
    %v4701 = vpop.f32.mrb[0].mxu0
    %v4702 = vpop.f32.mrb[0].mxu0
    %4703 = vdwg.mxu0
    %v4704 = vadd.f32 %v4532, %v4699
    %v4705 = vpack.c.bf16 %v3674, %v3674
    %v4706 = vpack.c.bf16 %v3675, %v3675
    %s4707 = scalar_lea.vmem [#allocation5], 768
    %v4708 = vld [vmem:[%s4707] sm:$0xf]
    %v4709 = vld [vmem:[%s4707 + $0x4] sm:$0xf]
    %v4710 = vld [vmem:[%s4707 + $0x8] sm:$0xf]
    %v4711 = vld [vmem:[%s4707 + $0xc] sm:$0xf]
    %v4712 = vld [vmem:[%s4707 + $0x10] sm:$0xf]
    %v4713 = vld [vmem:[%s4707 + $0x14] sm:$0xf]
    %v4714 = vld [vmem:[%s4707 + $0x18] sm:$0xf]
    %v4715 = vld [vmem:[%s4707 + $0x1c] sm:$0xf]
    %v4716 = vld [vmem:[%s4707 + $0x20] sm:$0xf]
    %v4717 = vld [vmem:[%s4707 + $0x24] sm:$0xf]
    %v4718 = vld [vmem:[%s4707 + $0x28] sm:$0xf]
    %v4719 = vld [vmem:[%s4707 + $0x2c] sm:$0xf]
    %v4720 = vld [vmem:[%s4707 + $0x30] sm:$0xf]
    %v4721 = vld [vmem:[%s4707 + $0x34] sm:$0xf]
    %v4722 = vld [vmem:[%s4707 + $0x38] sm:$0xf]
    %v4723 = vld [vmem:[%s4707 + $0x3c] sm:$0xf]
    %v4724 = vld [vmem:[%s4707 + $0x40] sm:$0xf]
    %v4725 = vld [vmem:[%s4707 + $0x44] sm:$0xf]
    %v4726 = vld [vmem:[%s4707 + $0x48] sm:$0xf]
    %v4727 = vld [vmem:[%s4707 + $0x4c] sm:$0xf]
    %v4728 = vld [vmem:[%s4707 + $0x50] sm:$0xf]
    %v4729 = vld [vmem:[%s4707 + $0x54] sm:$0xf]
    %v4730 = vld [vmem:[%s4707 + $0x58] sm:$0xf]
    %v4731 = vld [vmem:[%s4707 + $0x5c] sm:$0xf]
    %v4732 = vld [vmem:[%s4707 + $0x60] sm:$0xf]
    %v4733 = vld [vmem:[%s4707 + $0x64] sm:$0xf]
    %v4734 = vld [vmem:[%s4707 + $0x68] sm:$0xf]
    %v4735 = vld [vmem:[%s4707 + $0x6c] sm:$0xf]
    %v4736 = vld [vmem:[%s4707 + $0x70] sm:$0xf]
    %v4737 = vld [vmem:[%s4707 + $0x74] sm:$0xf]
    %v4738 = vld [vmem:[%s4707 + $0x78] sm:$0xf]
    %v4739 = vld [vmem:[%s4707 + $0x7c] sm:$0xf]
    %v4772 = vunpack.c.l.b16 %v4708
    %v4773 = vunpack.c.l.b16 %v4709
    %v4774 = vunpack.c.l.b16 %v4710
    %v4775 = vunpack.c.l.b16 %v4711
    %v4776 = vunpack.c.l.b16 %v4712
    %v4777 = vunpack.c.l.b16 %v4713
    %v4778 = vunpack.c.l.b16 %v4714
    %v4779 = vunpack.c.l.b16 %v4715
    %v4780 = vunpack.c.l.b16 %v4716
    %v4781 = vunpack.c.l.b16 %v4717
    %v4782 = vunpack.c.l.b16 %v4718
    %v4783 = vunpack.c.l.b16 %v4719
    %v4784 = vunpack.c.l.b16 %v4720
    %v4785 = vunpack.c.l.b16 %v4721
    %v4786 = vunpack.c.l.b16 %v4722
    %v4787 = vunpack.c.l.b16 %v4723
    %v4788 = vunpack.c.l.b16 %v4724
    %v4789 = vunpack.c.l.b16 %v4725
    %v4790 = vunpack.c.l.b16 %v4726
    %v4791 = vunpack.c.l.b16 %v4727
    %v4792 = vunpack.c.l.b16 %v4728
    %v4793 = vunpack.c.l.b16 %v4729
    %v4794 = vunpack.c.l.b16 %v4730
    %v4795 = vunpack.c.l.b16 %v4731
    %v4796 = vunpack.c.l.b16 %v4732
    %v4797 = vunpack.c.l.b16 %v4733
    %v4798 = vunpack.c.l.b16 %v4734
    %v4799 = vunpack.c.l.b16 %v4735
    %v4800 = vunpack.c.l.b16 %v4736
    %v4801 = vunpack.c.l.b16 %v4737
    %v4802 = vunpack.c.l.b16 %v4738
    %v4803 = vunpack.c.l.b16 %v4739
    %v4804 = vpack.c.b16 %v4773, %v4772
    %v4805 = vpack.c.b16 %v4775, %v4774
    %v4806 = vpack.c.b16 %v4777, %v4776
    %v4807 = vpack.c.b16 %v4779, %v4778
    %v4808 = vpack.c.b16 %v4781, %v4780
    %v4809 = vpack.c.b16 %v4783, %v4782
    %v4810 = vpack.c.b16 %v4785, %v4784
    %v4811 = vpack.c.b16 %v4787, %v4786
    %v4812 = vpack.c.b16 %v4789, %v4788
    %v4813 = vpack.c.b16 %v4791, %v4790
    %v4814 = vpack.c.b16 %v4793, %v4792
    %v4815 = vpack.c.b16 %v4795, %v4794
    %v4816 = vpack.c.b16 %v4797, %v4796
    %v4817 = vpack.c.b16 %v4799, %v4798
    %v4818 = vpack.c.b16 %v4801, %v4800
    %v4819 = vpack.c.b16 %v4803, %v4802
    %4836 = vmatprep.subr.bf16.mxu0 0
    %4837 = vmatpush1.bf16.msra.mxu0 %v4804
    %4838 = vmatprep.subr.bf16.mxu0 0
    %4839 = vmatpush1.bf16.msra.mxu0 %v4805
    %4840 = vmatprep.subr.bf16.mxu0 0
    %4841 = vmatpush1.bf16.msra.mxu0 %v4806
    %4842 = vmatprep.subr.bf16.mxu0 0
    %4843 = vmatpush1.bf16.msra.mxu0 %v4807
    %4844 = vmatprep.subr.bf16.mxu0 0
    %4845 = vmatpush1.bf16.msra.mxu0 %v4808
    %4846 = vmatprep.subr.bf16.mxu0 0
    %4847 = vmatpush1.bf16.msra.mxu0 %v4809
    %4848 = vmatprep.subr.bf16.mxu0 0
    %4849 = vmatpush1.bf16.msra.mxu0 %v4810
    %4850 = vmatprep.subr.bf16.mxu0 0
    %4851 = vmatpush1.bf16.msra.mxu0 %v4811
    %4852 = vmatprep.subr.bf16.mxu0 0
    %4853 = vmatpush1.bf16.msra.mxu0 %v4812
    %4854 = vmatprep.subr.bf16.mxu0 0
    %4855 = vmatpush1.bf16.msra.mxu0 %v4813
    %4856 = vmatprep.subr.bf16.mxu0 0
    %4857 = vmatpush1.bf16.msra.mxu0 %v4814
    %4858 = vmatprep.subr.bf16.mxu0 0
    %4859 = vmatpush1.bf16.msra.mxu0 %v4815
    %4860 = vmatprep.subr.bf16.mxu0 0
    %4861 = vmatpush1.bf16.msra.mxu0 %v4816
    %4862 = vmatprep.subr.bf16.mxu0 0
    %4863 = vmatpush1.bf16.msra.mxu0 %v4817
    %4864 = vmatprep.subr.bf16.mxu0 0
    %4865 = vmatpush1.bf16.msra.mxu0 %v4818
    %4866 = vmatprep.subr.bf16.mxu0 0
    %4867 = vmatpush1.bf16.msra.mxu0 %v4819
    %4868 = vmatprep.mubr.bf16.mxu0 %v4706
    %4869 = vmatmul.mubr.bf16.gmra.mrb[0].mxu0 %v4705
    %v4870 = vpop.f32.mrb[0].mxu0
    %v4871 = vadd.f32 0.0, %v4870
    %v4872 = vpop.f32.mrb[0].mxu0
    %v4873 = vpop.f32.mrb[0].mxu0
    %v4874 = vpop.f32.mrb[0].mxu0
    %4875 = vdwg.mxu0
    %v4876 = vadd.f32 %v4704, %v4871
    %v4877 = vld [vmem:[%s6] sm:$0x1]
    %v4879 = vlaneseq
    %v4880 = vshrl.u32 %v4879, 7
    %v4881 = vsub.s32 0, %v4880
    %v4882 = vrot.slane %v4877, %v4881
    %v4884 = vadd.f32 %v4876, %v4882
    %v4885 = vmax.f32 %v4884, 0.0
    %v4886 = vpack.c.bf16 %v4885, %v4885
    %v4887 = vld [vmem:[#allocation7] sm:$0xf]
    %v4888 = vld [vmem:[#allocation7 + $0x4] sm:$0xf]
    %v4889 = vld [vmem:[#allocation7 + $0x8] sm:$0xf]
    %v4890 = vld [vmem:[#allocation7 + $0xc] sm:$0xf]
    %v4891 = vld [vmem:[#allocation7 + $0x10] sm:$0xf]
    %v4892 = vld [vmem:[#allocation7 + $0x14] sm:$0xf]
    %v4893 = vld [vmem:[#allocation7 + $0x18] sm:$0xf]
    %v4894 = vld [vmem:[#allocation7 + $0x1c] sm:$0xf]
    %v4895 = vld [vmem:[#allocation7 + $0x20] sm:$0xf]
    %v4896 = vld [vmem:[#allocation7 + $0x24] sm:$0xf]
    %v4897 = vld [vmem:[#allocation7 + $0x28] sm:$0xf]
    %v4898 = vld [vmem:[#allocation7 + $0x2c] sm:$0xf]
    %v4899 = vld [vmem:[#allocation7 + $0x30] sm:$0xf]
    %v4900 = vld [vmem:[#allocation7 + $0x34] sm:$0xf]
    %v4901 = vld [vmem:[#allocation7 + $0x38] sm:$0xf]
    %v4902 = vld [vmem:[#allocation7 + $0x3c] sm:$0xf]
    %v4903 = vld [vmem:[%s8] sm:$0x1]
    %v4905 = vlaneseq
    %v4906 = vshrl.u32 %v4905, 7
    %v4907 = vsub.s32 0, %v4906
    %v4908 = vrot.slane %v4903, %v4907
    %v4926 = vunpack.c.l.b16 %v4887
    %v4927 = vunpack.c.l.b16 %v4888
    %v4928 = vunpack.c.l.b16 %v4889
    %v4929 = vunpack.c.l.b16 %v4890
    %v4930 = vunpack.c.l.b16 %v4891
    %v4931 = vunpack.c.l.b16 %v4892
    %v4932 = vunpack.c.l.b16 %v4893
    %v4933 = vunpack.c.l.b16 %v4894
    %v4934 = vunpack.c.l.b16 %v4895
    %v4935 = vunpack.c.l.b16 %v4896
    %v4936 = vunpack.c.l.b16 %v4897
    %v4937 = vunpack.c.l.b16 %v4898
    %v4938 = vunpack.c.l.b16 %v4899
    %v4939 = vunpack.c.l.b16 %v4900
    %v4940 = vunpack.c.l.b16 %v4901
    %v4941 = vunpack.c.l.b16 %v4902
    %v4942 = vpack.c.b16 %v4927, %v4926
    %v4943 = vpack.c.b16 %v4929, %v4928
    %v4944 = vpack.c.b16 %v4931, %v4930
    %v4945 = vpack.c.b16 %v4933, %v4932
    %v4946 = vpack.c.b16 %v4935, %v4934
    %v4947 = vpack.c.b16 %v4937, %v4936
    %v4948 = vpack.c.b16 %v4939, %v4938
    %v4949 = vpack.c.b16 %v4941, %v4940
    %4958 = vmatprep.subr.bf16.mxu0 0
    %4959 = vmatpush1.bf16.msra.mxu0 %v4942
    %4960 = vmatprep.subr.bf16.mxu0 0
    %4961 = vmatpush1.bf16.msra.mxu0 %v4943
    %4962 = vmatprep.subr.bf16.mxu0 0
    %4963 = vmatpush1.bf16.msra.mxu0 %v4944
    %4964 = vmatprep.subr.bf16.mxu0 0
    %4965 = vmatpush1.bf16.msra.mxu0 %v4945
    %4966 = vmatprep.subr.bf16.mxu0 0
    %4967 = vmatpush1.bf16.msra.mxu0 %v4946
    %4968 = vmatprep.subr.bf16.mxu0 0
    %4969 = vmatpush1.bf16.msra.mxu0 %v4947
    %4970 = vmatprep.subr.bf16.mxu0 0
    %4971 = vmatpush1.bf16.msra.mxu0 %v4948
    %4972 = vmatprep.subr.bf16.mxu0 0
    %4973 = vmatpush1.bf16.msra.mxu0 %v4949
    %4974 = vmatprep.subr.bf16.mxu0 0
    %4975 = vmatpush1.bf16.msra.mxu0 0
    %4976 = vmatprep.subr.bf16.mxu0 0
    %4977 = vmatpush1.bf16.msra.mxu0 0
    %4978 = vmatprep.subr.bf16.mxu0 0
    %4979 = vmatpush1.bf16.msra.mxu0 0
    %4980 = vmatprep.subr.bf16.mxu0 0
    %4981 = vmatpush1.bf16.msra.mxu0 0
    %4982 = vmatprep.subr.bf16.mxu0 0
    %4983 = vmatpush1.bf16.msra.mxu0 0
    %4984 = vmatprep.subr.bf16.mxu0 0
    %4985 = vmatpush1.bf16.msra.mxu0 0
    %4986 = vmatprep.subr.bf16.mxu0 0
    %4987 = vmatpush1.bf16.msra.mxu0 0
    %4988 = vmatprep.subr.bf16.mxu0 0
    %4989 = vmatpush1.bf16.msra.mxu0 0
    %4990 = vmatprep.mubr.bf16.mxu0 0
    %4991 = vmatmul.mubr.bf16.gmra.mrb[0].mxu0 %v4886
    %v4992 = vpop.f32.mrb[0].mxu0
    %v4993 = vadd.f32 %v4908, %v4992
    %v4994 = vpop.f32.mrb[0].mxu0
    %v4995 = vpop.f32.mrb[0].mxu0
    %v4996 = vpop.f32.mrb[0].mxu0
    %4997 = vdwg.mxu0
    %4998 = vst [vmem:[%s9] sm:$0xff] %v4993
    // Predicated region
    $region50: #{simple_cnn_forward.1} parent=1 // pred_check
      _
    $region51: #{simple_cnn_forward.1} parent=1 // pred_check_branch
      %5000 = sbr.rel (0) target = $region53
    $region52: #{simple_cnn_forward.1} parent=1 // pred_region
      _
    $region53: #{simple_cnn_forward.1} parent=1 // pred_fallthru
      _
    // Predicated region
    $region54: #{simple_cnn_forward.1} parent=1 // pred_check
      _
    $region55: #{simple_cnn_forward.1} parent=1 // pred_check_branch
      %5002 = sbr.rel (0) target = $region57
    $region56: #{simple_cnn_forward.1} parent=1 // pred_region
      _
    $region57: #{simple_cnn_forward.1} parent=1 // pred_fallthru
      _
    %5003 = vsyncpa [#allocation4], 1
    %5004 = vsyncpa [#allocation6], 1

</llo_original>
